<compile_context>
chip_gen: v7x
topology: tpu7x:2x2x1
jax: 0.10.0
libtpu: 0.0.40
codegen_flags: <defaults>
</compile_context>

<pallas_src>
import jax
import jax.numpy as jnp
from jax.experimental import pallas as pl
from jax.experimental.pallas import tpu as pltpu

INPUT_SIZE = 9724
K = 64
N_CLASS = 9724


def _round_up(x, m):
    return (x + m - 1) // m * m


# ---------------------------------------------------------------------------
# Kernel A: encoder  h = sigmoid(x @ W1 + b1)   (single grid step, everything
# resident in VMEM; W1 is read from HBM as bf16 and upcast in-register).
# ---------------------------------------------------------------------------
def encode_kernel(x_ref, w1_ref, b1_ref, h_ref):
    acc = jnp.dot(
        x_ref[...],
        w1_ref[...].astype(jnp.float32),
        preferred_element_type=jnp.float32,
    )
    h_ref[...] = jax.nn.sigmoid(acc + b1_ref[...])


# ---------------------------------------------------------------------------
# Kernel B: decoder  out_tile = h @ W2_tile + b2_tile
# h is tiny (bp x 64, constant index_map -> fetched once); W2/b2/out stream
# per tile.  No cross-step carry -> the grid axis is truly parallel.
# ---------------------------------------------------------------------------
def decode_kernel(h_ref, w2_ref, b2_ref, out_ref):
    acc = jnp.dot(
        h_ref[...],
        w2_ref[...].astype(jnp.float32),
        preferred_element_type=jnp.float32,
    )
    out_ref[...] = (acc + b2_ref[...]).astype(out_ref.dtype)


# ---------------------------------------------------------------------------
# One-time parameter preparation (pad to TPU-friendly sizes, cast to bf16).
# Do this at model init, NOT per forward call.
# ---------------------------------------------------------------------------
def prepare_params(w1, b1, w2, b2, *, tn=2432):
    """w1: (D_in, K); b1: (K,); w2: (K, D_out); b2: (D_out,)."""
    d_in, k = w1.shape
    d_out = w2.shape[1]
    d_in_p = _round_up(d_in, 128)
    d_out_p = _round_up(_round_up(d_out, 128), tn)

    w1_p = jnp.zeros((d_in_p, k), jnp.bfloat16).at[:d_in, :].set(
        w1.astype(jnp.bfloat16))
    b1_p = b1.astype(jnp.float32).reshape(1, k)
    w2_p = jnp.zeros((k, d_out_p), jnp.bfloat16).at[:, :d_out].set(
        w2.astype(jnp.bfloat16))
    b2_p = jnp.zeros((1, d_out_p), jnp.float32).at[0, :d_out].set(
        b2.astype(jnp.float32))

    return {
        "w1": w1_p, "b1": b1_p, "w2": w2_p, "b2": b2_p,
        "d_in": d_in, "d_out": d_out, "tn": tn,
    }


def autorec_forward(x, params):
    w1_p, b1_p = params["w1"], params["b1"]
    w2_p, b2_p = params["w2"], params["b2"]
    d_in, d_out, tn = params["d_in"], params["d_out"], params["tn"]
    d_in_p, k = w1_p.shape
    d_out_p = w2_p.shape[1]

    b = x.shape[0]
    bp = _round_up(b, 8)

    # Only x is padded per call (tiny).
    x_p = jnp.zeros((bp, d_in_p), jnp.float32).at[:b, :d_in].set(
        x.astype(jnp.float32))

    # ---- encoder -----------------------------------------------------------
    enc_cost = pl.CostEstimate(
        flops=2 * bp * d_in_p * k,
        transcendentals=bp * k,
        bytes_accessed=(bp * d_in_p * 4 + d_in_p * k * 2 + k * 4 + bp * k * 4),
    )
    h = pl.pallas_call(
        encode_kernel,
        out_shape=jax.ShapeDtypeStruct((bp, k), jnp.float32),
        grid=(1,),
        in_specs=[
            pl.BlockSpec((bp, d_in_p), lambda i: (0, 0)),
            pl.BlockSpec((d_in_p, k), lambda i: (0, 0)),
            pl.BlockSpec((1, k), lambda i: (0, 0)),
        ],
        out_specs=pl.BlockSpec((bp, k), lambda i: (0, 0)),
        cost_estimate=enc_cost,
    )(x_p, w1_p, b1_p)

    # ---- decoder -----------------------------------------------------------
    grid = (d_out_p // tn,)  # 9728 / 2432 = 4 steps
    dec_cost = pl.CostEstimate(
        flops=2 * bp * k * d_out_p,
        transcendentals=0,
        bytes_accessed=(bp * k * 4 + k * d_out_p * 2 + d_out_p * 4
                        + bp * d_out_p * 4),
    )
    out = pl.pallas_call(
        decode_kernel,
        out_shape=jax.ShapeDtypeStruct((bp, d_out_p), jnp.float32),
        grid_spec=pltpu.PrefetchScalarGridSpec(
            num_scalar_prefetch=0,
            grid=grid,
            in_specs=[
                pl.BlockSpec((bp, k), lambda j: (0, 0)),    # h (resident)
                pl.BlockSpec((k, tn), lambda j: (0, j)),    # W2 tile (streamed)
                pl.BlockSpec((1, tn), lambda j: (0, j)),    # b2 tile
            ],
            out_specs=pl.BlockSpec((bp, tn), lambda j: (0, j)),
        ),
        compiler_params=pltpu.CompilerParams(
            dimension_semantics=("parallel",),  # no carry -> shardable on v7x
        ),
        cost_estimate=dec_cost,
    )(h, w2_p, b2_p)

    return out[:b, :d_out]


if __name__ == "__main__":
    key = jax.random.PRNGKey(0)
    k_x, k_w1, k_b1, k_w2, k_b2 = jax.random.split(key, 5)

    batch = 2
    # Deterministic PyTorch-style Linear init: U(-1/sqrt(fan_in), 1/sqrt(fan_in)).
    bound1 = 1.0 / (INPUT_SIZE ** 0.5)
    bound2 = 1.0 / (K ** 0.5)
    w1 = jax.random.uniform(k_w1, (INPUT_SIZE, K), jnp.float32, -bound1, bound1)
    b1 = jax.random.uniform(k_b1, (K,), jnp.float32, -bound1, bound1)
    w2 = jax.random.uniform(k_w2, (K, N_CLASS), jnp.float32, -bound2, bound2)
    b2 = jax.random.uniform(k_b2, (N_CLASS,), jnp.float32, -bound2, bound2)
    x = jax.random.uniform(k_x, (batch, INPUT_SIZE), jnp.float32, 0.0, 5.0)

    params = prepare_params(w1, b1, w2, b2)     # one-time pad + bf16 cast
    out = autorec_forward(x, params)
    out = jax.block_until_ready(out)
    assert out.shape == (batch, N_CLASS), out.shape

    # Reference 1: same bf16-quantized weights (kernel's own numerics).
    w1_q = params["w1"][:INPUT_SIZE, :].astype(jnp.float32)
    w2_q = params["w2"][:, :N_CLASS].astype(jnp.float32)
    ref_q = jax.nn.sigmoid(x @ w1_q + b1) @ w2_q + b2
    assert jnp.allclose(out, ref_q, atol=1e-2, rtol=1e-2), float(
        jnp.max(jnp.abs(out - ref_q)))

    # Reference 2: full-f32 weights (looser tol, covers bf16 weight quantization).
    ref_f32 = jax.nn.sigmoid(x @ w1 + b1) @ w2 + b2
    assert jnp.allclose(out, ref_f32, atol=5e-2, rtol=5e-2), float(
        jnp.max(jnp.abs(out - ref_f32)))

    print("KERNEL_OK")
</pallas_src>

<mosaic_0001>
module attributes {stable_mosaic.version = 11 : i64} {
  func.func @encode_kernel(%arg0: i32, %arg1: memref<8x9728xf32, #tpu.memory_space<vmem>>, %arg2: memref<9728x64xbf16, #tpu.memory_space<vmem>>, %arg3: memref<1x64xf32, #tpu.memory_space<vmem>>, %arg4: memref<8x64xf32, #tpu.memory_space<vmem>>) attributes {dimension_semantics = [#tpu.dimension_semantics<arbitrary>], iteration_bounds = array<i64: 1>, scalar_prefetch = 0 : i64, scratch_operands = 0 : i64, tpu.core_type = #tpu.core_type<tc>, window_params = [{pipeline_mode = #tpu.pipeline_mode<synchronous>, transform_indices = @transform_0, window_bounds = array<i64: 8, 9728>}, {pipeline_mode = #tpu.pipeline_mode<synchronous>, transform_indices = @transform_1, window_bounds = array<i64: 9728, 64>}, {pipeline_mode = #tpu.pipeline_mode<synchronous>, transform_indices = @transform_2, window_bounds = array<i64: 1, 64>}, {pipeline_mode = #tpu.pipeline_mode<synchronous>, transform_indices = @transform_3, window_bounds = array<i64: 8, 64>}]} {
    %c0 = arith.constant 0 : index
    %c0_0 = arith.constant 0 : index
    %0 = vector.load %arg1[%c0, %c0_0] : memref<8x9728xf32, #tpu.memory_space<vmem>>, vector<8x9728xf32>
    %c0_1 = arith.constant 0 : index
    %c0_2 = arith.constant 0 : index
    %1 = vector.load %arg2[%c0_1, %c0_2] : memref<9728x64xbf16, #tpu.memory_space<vmem>>, vector<9728x64xbf16>
    %2 = arith.extf %1 : vector<9728x64xbf16> to vector<9728x64xf32>
    %cst = arith.constant dense<0.000000e+00> : vector<8x64xf32>
    %3 = tpu.matmul %0, %2, %cst {dimension_numbers = #tpu.dot_dimension_numbers<[1], [0], [0], [1], [0, 0, 1, 1], [], []>} : vector<8x9728xf32>, vector<9728x64xf32>, vector<8x64xf32> -> vector<8x64xf32>
    %c0_3 = arith.constant 0 : index
    %c0_4 = arith.constant 0 : index
    %4 = vector.load %arg3[%c0_3, %c0_4] : memref<1x64xf32, #tpu.memory_space<vmem>>, vector<1x64xf32>
    %5 = vector.broadcast %4 : vector<1x64xf32> to vector<8x64xf32>
    %6 = arith.addf %3, %5 : vector<8x64xf32>
    %7 = arith.negf %6 : vector<8x64xf32>
    %8 = math.exp %7 : vector<8x64xf32>
    %cst_5 = arith.constant 1.000000e+00 : f32
    %9 = vector.broadcast %cst_5 : f32 to vector<8x64xf32>
    %10 = arith.addf %9, %8 : vector<8x64xf32>
    %11 = arith.divf %9, %10 : vector<8x64xf32>
    %c0_6 = arith.constant 0 : index
    %c0_7 = arith.constant 0 : index
    %12 = vector.load %arg4[%c0_6, %c0_7] : memref<8x64xf32, #tpu.memory_space<vmem>>, vector<8x64xf32>
    tpu.vector_store %arg4[%c0_6, %c0_7], %11 {strides = array<i32>} : memref<8x64xf32, #tpu.memory_space<vmem>>, vector<8x64xf32>,
    return
  }
  func.func @transform_0(%arg0: i32) -> (i32, i32) {
    %c0_i32 = arith.constant 0 : i32
    %c0_i32_0 = arith.constant 0 : i32
    %c0_i32_1 = arith.constant 0 : i32
    return %c0_i32, %c0_i32_0 : i32, i32
  }
  func.func @transform_1(%arg0: i32) -> (i32, i32) {
    %c0_i32 = arith.constant 0 : i32
    %c0_i32_0 = arith.constant 0 : i32
    %c0_i32_1 = arith.constant 0 : i32
    return %c0_i32, %c0_i32_0 : i32, i32
  }
  func.func @transform_2(%arg0: i32) -> (i32, i32) {
    %c0_i32 = arith.constant 0 : i32
    %c0_i32_0 = arith.constant 0 : i32
    %c0_i32_1 = arith.constant 0 : i32
    return %c0_i32, %c0_i32_0 : i32, i32
  }
  func.func @transform_3(%arg0: i32) -> (i32, i32) {
    %c0_i32 = arith.constant 0 : i32
    %c0_i32_0 = arith.constant 0 : i32
    %c0_i32_1 = arith.constant 0 : i32
    return %c0_i32, %c0_i32_0 : i32, i32
  }
}

</mosaic_0001>

<llo_original>
// kernel: tpu_custom_call.1
$region0: #{tpu_custom_call.1}
  #allocation0 [shape = 'u32[]', space=smem, size = 0x4, offset = 0x4, fixed_abs, tag = 'smem constant byte address 0x4 - core index']
  #allocation1 [shape = 'u32[144,128]{1,0:T(1,128)}', space=vmem, size = 0x12000, scoped, tag = 'internal scratch']
  %s0 = inlined_call_operand.vmem [shape: f32[8,9728], index: 0, kind: input, shape index: {}]
  %s1 = inlined_call_operand.vmem [shape: bf16[9728,64], index: 1, kind: input, shape index: {}]
  %s2 = inlined_call_operand.vmem [shape: f32[1,64], index: 2, kind: input, shape index: {}]
  %s3 = inlined_call_operand.hbm [shape: f32[8,64], index: 3, kind: output, shape index: {}]
  %s4 = sld [smem:[#allocation0]]
  $region22: #{tpu_custom_call.1} parent=0
    _
  %s6 = ssub.s32 1, %s4
  %s7 = scalar_select 0, %s6, %s4
  $region1: #{tpu_custom_call.1} parent=0
    #allocation2 [shape = 'u8[4096]{0}', space=vmem, size = 0x1000, scoped, tag = 'output window, operand 0, single buffered']
    #allocation3 [shape = 's32[1]{0}', space=sflag, size = 0x4, scoped, tag = 'scoped memory for tpu_custom_call.1']
    %8 = vsyncpa [#allocation3], 0
    // Predicated region
    $region2: #{tpu_custom_call.1} parent=1 // pred_check
      _
    $region3: #{tpu_custom_call.1} parent=1 // pred_check_branch
      %10 = sbr.rel (0) target = $region5
    $region4: #{tpu_custom_call.1} parent=1 // pred_region
      _
    $region5: #{tpu_custom_call.1} parent=1 // pred_fallthru
      _
    // Predicated region
    $region6: #{tpu_custom_call.1} parent=1 // pred_check
      _
    $region7: #{tpu_custom_call.1} parent=1 // pred_check_branch
      %12 = sbr.rel (0) target = $region9
    $region8: #{tpu_custom_call.1} parent=1 // pred_region
      _
    $region9: #{tpu_custom_call.1} parent=1 // pred_fallthru
      _
    // Predicated region
    $region10: #{tpu_custom_call.1} parent=1 // pred_check
      _
    $region11: #{tpu_custom_call.1} parent=1 // pred_check_branch
      %14 = sbr.rel (0) target = $region13
    $region12: #{tpu_custom_call.1} parent=1 // pred_region
      _
    $region13: #{tpu_custom_call.1} parent=1 // pred_fallthru
      _
    %v15 = vld [vmem:[%s0] sm:$0xff]
    %v16 = vld [vmem:[%s0 + $0x8] sm:$0xff]
    %v17 = vld [vmem:[%s0 + $0x10] sm:$0xff]
    %v18 = vld [vmem:[%s0 + $0x18] sm:$0xff]
    %v19 = vld [vmem:[%s0 + $0x20] sm:$0xff]
    %v20 = vld [vmem:[%s0 + $0x28] sm:$0xff]
    %v21 = vld [vmem:[%s0 + $0x30] sm:$0xff]
    %v22 = vld [vmem:[%s0 + $0x38] sm:$0xff]
    %v23 = vld [vmem:[%s0 + $0x40] sm:$0xff]
    %v24 = vld [vmem:[%s0 + $0x48] sm:$0xff]
    %v25 = vld [vmem:[%s0 + $0x50] sm:$0xff]
    %v26 = vld [vmem:[%s0 + $0x58] sm:$0xff]
    %v27 = vld [vmem:[%s0 + $0x60] sm:$0xff]
    %v28 = vld [vmem:[%s0 + $0x68] sm:$0xff]
    %v29 = vld [vmem:[%s0 + $0x70] sm:$0xff]
    %v30 = vld [vmem:[%s0 + $0x78] sm:$0xff]
    %v31 = vld [vmem:[%s0 + $0x80] sm:$0xff]
    %v32 = vld [vmem:[%s0 + $0x88] sm:$0xff]
    %v33 = vld [vmem:[%s0 + $0x90] sm:$0xff]
    %v34 = vld [vmem:[%s0 + $0x98] sm:$0xff]
    %v35 = vld [vmem:[%s0 + $0xa0] sm:$0xff]
    %v36 = vld [vmem:[%s0 + $0xa8] sm:$0xff]
    %v37 = vld [vmem:[%s0 + $0xb0] sm:$0xff]
    %v38 = vld [vmem:[%s0 + $0xb8] sm:$0xff]
    %v39 = vld [vmem:[%s0 + $0xc0] sm:$0xff]
    %v40 = vld [vmem:[%s0 + $0xc8] sm:$0xff]
    %v41 = vld [vmem:[%s0 + $0xd0] sm:$0xff]
    %v42 = vld [vmem:[%s0 + $0xd8] sm:$0xff]
    %v43 = vld [vmem:[%s0 + $0xe0] sm:$0xff]
    %v44 = vld [vmem:[%s0 + $0xe8] sm:$0xff]
    %v45 = vld [vmem:[%s0 + $0xf0] sm:$0xff]
    %v46 = vld [vmem:[%s0 + $0xf8] sm:$0xff]
    %v47 = vld [vmem:[%s0 + $0x100] sm:$0xff]
    %v48 = vld [vmem:[%s0 + $0x108] sm:$0xff]
    %v49 = vld [vmem:[%s0 + $0x110] sm:$0xff]
    %v50 = vld [vmem:[%s0 + $0x118] sm:$0xff]
    %v51 = vld [vmem:[%s0 + $0x120] sm:$0xff]
    %v52 = vld [vmem:[%s0 + $0x128] sm:$0xff]
    %v53 = vld [vmem:[%s0 + $0x130] sm:$0xff]
    %v54 = vld [vmem:[%s0 + $0x138] sm:$0xff]
    %v55 = vld [vmem:[%s0 + $0x140] sm:$0xff]
    %v56 = vld [vmem:[%s0 + $0x148] sm:$0xff]
    %v57 = vld [vmem:[%s0 + $0x150] sm:$0xff]
    %v58 = vld [vmem:[%s0 + $0x158] sm:$0xff]
    %v59 = vld [vmem:[%s0 + $0x160] sm:$0xff]
    %v60 = vld [vmem:[%s0 + $0x168] sm:$0xff]
    %v61 = vld [vmem:[%s0 + $0x170] sm:$0xff]
    %v62 = vld [vmem:[%s0 + $0x178] sm:$0xff]
    %v63 = vld [vmem:[%s0 + $0x180] sm:$0xff]
    %v64 = vld [vmem:[%s0 + $0x188] sm:$0xff]
    %v65 = vld [vmem:[%s0 + $0x190] sm:$0xff]
    %v66 = vld [vmem:[%s0 + $0x198] sm:$0xff]
    %v67 = vld [vmem:[%s0 + $0x1a0] sm:$0xff]
    %v68 = vld [vmem:[%s0 + $0x1a8] sm:$0xff]
    %v69 = vld [vmem:[%s0 + $0x1b0] sm:$0xff]
    %v70 = vld [vmem:[%s0 + $0x1b8] sm:$0xff]
    %v71 = vld [vmem:[%s0 + $0x1c0] sm:$0xff]
    %v72 = vld [vmem:[%s0 + $0x1c8] sm:$0xff]
    %v73 = vld [vmem:[%s0 + $0x1d0] sm:$0xff]
    %v74 = vld [vmem:[%s0 + $0x1d8] sm:$0xff]
    %v75 = vld [vmem:[%s0 + $0x1e0] sm:$0xff]
    %v76 = vld [vmem:[%s0 + $0x1e8] sm:$0xff]
    %v77 = vld [vmem:[%s0 + $0x1f0] sm:$0xff]
    %v78 = vld [vmem:[%s0 + $0x1f8] sm:$0xff]
    %v79 = vld [vmem:[%s0 + $0x200] sm:$0xff]
    %v80 = vld [vmem:[%s0 + $0x208] sm:$0xff]
    %v81 = vld [vmem:[%s0 + $0x210] sm:$0xff]
    %v82 = vld [vmem:[%s0 + $0x218] sm:$0xff]
    %v83 = vld [vmem:[%s0 + $0x220] sm:$0xff]
    %v84 = vld [vmem:[%s0 + $0x228] sm:$0xff]
    %v85 = vld [vmem:[%s0 + $0x230] sm:$0xff]
    %v86 = vld [vmem:[%s0 + $0x238] sm:$0xff]
    %v87 = vld [vmem:[%s0 + $0x240] sm:$0xff]
    %v88 = vld [vmem:[%s0 + $0x248] sm:$0xff]
    %v89 = vld [vmem:[%s0 + $0x250] sm:$0xff]
    %v90 = vld [vmem:[%s0 + $0x258] sm:$0xff]
    %v91 = vld [vmem:[%s1] sm:$0xf]
    %v92 = vld [vmem:[%s1 + $0x4] sm:$0xf]
    %v93 = vld [vmem:[%s1 + $0x8] sm:$0xf]
    %v94 = vld [vmem:[%s1 + $0xc] sm:$0xf]
    %v95 = vld [vmem:[%s1 + $0x10] sm:$0xf]
    %v96 = vld [vmem:[%s1 + $0x14] sm:$0xf]
    %v97 = vld [vmem:[%s1 + $0x18] sm:$0xf]
    %v98 = vld [vmem:[%s1 + $0x1c] sm:$0xf]
    %v99 = vld [vmem:[%s1 + $0x20] sm:$0xf]
    %v100 = vld [vmem:[%s1 + $0x24] sm:$0xf]
    %v101 = vld [vmem:[%s1 + $0x28] sm:$0xf]
    %v102 = vld [vmem:[%s1 + $0x2c] sm:$0xf]
    %v103 = vld [vmem:[%s1 + $0x30] sm:$0xf]
    %v104 = vld [vmem:[%s1 + $0x34] sm:$0xf]
    %v105 = vld [vmem:[%s1 + $0x38] sm:$0xf]
    %v106 = vld [vmem:[%s1 + $0x3c] sm:$0xf]
    %v107 = vld [vmem:[%s1 + $0x40] sm:$0xf]
    %v108 = vld [vmem:[%s1 + $0x44] sm:$0xf]
    %v109 = vld [vmem:[%s1 + $0x48] sm:$0xf]
    %v110 = vld [vmem:[%s1 + $0x4c] sm:$0xf]
    %v111 = vld [vmem:[%s1 + $0x50] sm:$0xf]
    %v112 = vld [vmem:[%s1 + $0x54] sm:$0xf]
    %v113 = vld [vmem:[%s1 + $0x58] sm:$0xf]
    %v114 = vld [vmem:[%s1 + $0x5c] sm:$0xf]
    %v115 = vld [vmem:[%s1 + $0x60] sm:$0xf]
    %v116 = vld [vmem:[%s1 + $0x64] sm:$0xf]
    %v117 = vld [vmem:[%s1 + $0x68] sm:$0xf]
    %v118 = vld [vmem:[%s1 + $0x6c] sm:$0xf]
    %v119 = vld [vmem:[%s1 + $0x70] sm:$0xf]
    %v120 = vld [vmem:[%s1 + $0x74] sm:$0xf]
    %v121 = vld [vmem:[%s1 + $0x78] sm:$0xf]
    %v122 = vld [vmem:[%s1 + $0x7c] sm:$0xf]
    %v123 = vld [vmem:[%s1 + $0x80] sm:$0xf]
    %v124 = vld [vmem:[%s1 + $0x84] sm:$0xf]
    %v125 = vld [vmem:[%s1 + $0x88] sm:$0xf]
    %v126 = vld [vmem:[%s1 + $0x8c] sm:$0xf]
    %v127 = vld [vmem:[%s1 + $0x90] sm:$0xf]
    %v128 = vld [vmem:[%s1 + $0x94] sm:$0xf]
    %v129 = vld [vmem:[%s1 + $0x98] sm:$0xf]
    %v130 = vld [vmem:[%s1 + $0x9c] sm:$0xf]
    %v131 = vld [vmem:[%s1 + $0xa0] sm:$0xf]
    %v132 = vld [vmem:[%s1 + $0xa4] sm:$0xf]
    %v133 = vld [vmem:[%s1 + $0xa8] sm:$0xf]
    %v134 = vld [vmem:[%s1 + $0xac] sm:$0xf]
    %v135 = vld [vmem:[%s1 + $0xb0] sm:$0xf]
    %v136 = vld [vmem:[%s1 + $0xb4] sm:$0xf]
    %v137 = vld [vmem:[%s1 + $0xb8] sm:$0xf]
    %v138 = vld [vmem:[%s1 + $0xbc] sm:$0xf]
    %v139 = vld [vmem:[%s1 + $0xc0] sm:$0xf]
    %v140 = vld [vmem:[%s1 + $0xc4] sm:$0xf]
    %v141 = vld [vmem:[%s1 + $0xc8] sm:$0xf]
    %v142 = vld [vmem:[%s1 + $0xcc] sm:$0xf]
    %v143 = vld [vmem:[%s1 + $0xd0] sm:$0xf]
    %v144 = vld [vmem:[%s1 + $0xd4] sm:$0xf]
    %v145 = vld [vmem:[%s1 + $0xd8] sm:$0xf]
    %v146 = vld [vmem:[%s1 + $0xdc] sm:$0xf]
    %v147 = vld [vmem:[%s1 + $0xe0] sm:$0xf]
    %v148 = vld [vmem:[%s1 + $0xe4] sm:$0xf]
    %v149 = vld [vmem:[%s1 + $0xe8] sm:$0xf]
    %v150 = vld [vmem:[%s1 + $0xec] sm:$0xf]
    %v151 = vld [vmem:[%s1 + $0xf0] sm:$0xf]
    %v152 = vld [vmem:[%s1 + $0xf4] sm:$0xf]
    %v153 = vld [vmem:[%s1 + $0xf8] sm:$0xf]
    %v154 = vld [vmem:[%s1 + $0xfc] sm:$0xf]
    %v155 = vld [vmem:[%s1 + $0x100] sm:$0xf]
    %v156 = vld [vmem:[%s1 + $0x104] sm:$0xf]
    %v157 = vld [vmem:[%s1 + $0x108] sm:$0xf]
    %v158 = vld [vmem:[%s1 + $0x10c] sm:$0xf]
    %v159 = vld [vmem:[%s1 + $0x110] sm:$0xf]
    %v160 = vld [vmem:[%s1 + $0x114] sm:$0xf]
    %v161 = vld [vmem:[%s1 + $0x118] sm:$0xf]
    %v162 = vld [vmem:[%s1 + $0x11c] sm:$0xf]
    %v163 = vld [vmem:[%s1 + $0x120] sm:$0xf]
    %v164 = vld [vmem:[%s1 + $0x124] sm:$0xf]
    %v165 = vld [vmem:[%s1 + $0x128] sm:$0xf]
    %v166 = vld [vmem:[%s1 + $0x12c] sm:$0xf]
    %v167 = vld [vmem:[%s1 + $0x130] sm:$0xf]
    %v168 = vld [vmem:[%s1 + $0x134] sm:$0xf]
    %v169 = vld [vmem:[%s1 + $0x138] sm:$0xf]
    %v170 = vld [vmem:[%s1 + $0x13c] sm:$0xf]
    %v171 = vld [vmem:[%s1 + $0x140] sm:$0xf]
    %v172 = vld [vmem:[%s1 + $0x144] sm:$0xf]
    %v173 = vld [vmem:[%s1 + $0x148] sm:$0xf]
    %v174 = vld [vmem:[%s1 + $0x14c] sm:$0xf]
    %v175 = vld [vmem:[%s1 + $0x150] sm:$0xf]
    %v176 = vld [vmem:[%s1 + $0x154] sm:$0xf]
    %v177 = vld [vmem:[%s1 + $0x158] sm:$0xf]
    %v178 = vld [vmem:[%s1 + $0x15c] sm:$0xf]
    %v179 = vld [vmem:[%s1 + $0x160] sm:$0xf]
    %v180 = vld [vmem:[%s1 + $0x164] sm:$0xf]
    %v181 = vld [vmem:[%s1 + $0x168] sm:$0xf]
    %v182 = vld [vmem:[%s1 + $0x16c] sm:$0xf]
    %v183 = vld [vmem:[%s1 + $0x170] sm:$0xf]
    %v184 = vld [vmem:[%s1 + $0x174] sm:$0xf]
    %v185 = vld [vmem:[%s1 + $0x178] sm:$0xf]
    %v186 = vld [vmem:[%s1 + $0x17c] sm:$0xf]
    %v187 = vld [vmem:[%s1 + $0x180] sm:$0xf]
    %v188 = vld [vmem:[%s1 + $0x184] sm:$0xf]
    %v189 = vld [vmem:[%s1 + $0x188] sm:$0xf]
    %v190 = vld [vmem:[%s1 + $0x18c] sm:$0xf]
    %v191 = vld [vmem:[%s1 + $0x190] sm:$0xf]
    %v192 = vld [vmem:[%s1 + $0x194] sm:$0xf]
    %v193 = vld [vmem:[%s1 + $0x198] sm:$0xf]
    %v194 = vld [vmem:[%s1 + $0x19c] sm:$0xf]
    %v195 = vld [vmem:[%s1 + $0x1a0] sm:$0xf]
    %v196 = vld [vmem:[%s1 + $0x1a4] sm:$0xf]
    %v197 = vld [vmem:[%s1 + $0x1a8] sm:$0xf]
    %v198 = vld [vmem:[%s1 + $0x1ac] sm:$0xf]
    %v199 = vld [vmem:[%s1 + $0x1b0] sm:$0xf]
    %v200 = vld [vmem:[%s1 + $0x1b4] sm:$0xf]
    %v201 = vld [vmem:[%s1 + $0x1b8] sm:$0xf]
    %v202 = vld [vmem:[%s1 + $0x1bc] sm:$0xf]
    %v203 = vld [vmem:[%s1 + $0x1c0] sm:$0xf]
    %v204 = vld [vmem:[%s1 + $0x1c4] sm:$0xf]
    %v205 = vld [vmem:[%s1 + $0x1c8] sm:$0xf]
    %v206 = vld [vmem:[%s1 + $0x1cc] sm:$0xf]
    %v207 = vld [vmem:[%s1 + $0x1d0] sm:$0xf]
    %v208 = vld [vmem:[%s1 + $0x1d4] sm:$0xf]
    %v209 = vld [vmem:[%s1 + $0x1d8] sm:$0xf]
    %v210 = vld [vmem:[%s1 + $0x1dc] sm:$0xf]
    %v211 = vld [vmem:[%s1 + $0x1e0] sm:$0xf]
    %v212 = vld [vmem:[%s1 + $0x1e4] sm:$0xf]
    %v213 = vld [vmem:[%s1 + $0x1e8] sm:$0xf]
    %v214 = vld [vmem:[%s1 + $0x1ec] sm:$0xf]
    %v215 = vld [vmem:[%s1 + $0x1f0] sm:$0xf]
    %v216 = vld [vmem:[%s1 + $0x1f4] sm:$0xf]
    %v217 = vld [vmem:[%s1 + $0x1f8] sm:$0xf]
    %v218 = vld [vmem:[%s1 + $0x1fc] sm:$0xf]
    %v219 = vld [vmem:[%s1 + $0x200] sm:$0xf]
    %v220 = vld [vmem:[%s1 + $0x204] sm:$0xf]
    %v221 = vld [vmem:[%s1 + $0x208] sm:$0xf]
    %v222 = vld [vmem:[%s1 + $0x20c] sm:$0xf]
    %v223 = vld [vmem:[%s1 + $0x210] sm:$0xf]
    %v224 = vld [vmem:[%s1 + $0x214] sm:$0xf]
    %v225 = vld [vmem:[%s1 + $0x218] sm:$0xf]
    %v226 = vld [vmem:[%s1 + $0x21c] sm:$0xf]
    %v227 = vld [vmem:[%s1 + $0x220] sm:$0xf]
    %v228 = vld [vmem:[%s1 + $0x224] sm:$0xf]
    %v229 = vld [vmem:[%s1 + $0x228] sm:$0xf]
    %v230 = vld [vmem:[%s1 + $0x22c] sm:$0xf]
    %v231 = vld [vmem:[%s1 + $0x230] sm:$0xf]
    %v232 = vld [vmem:[%s1 + $0x234] sm:$0xf]
    %v233 = vld [vmem:[%s1 + $0x238] sm:$0xf]
    %v234 = vld [vmem:[%s1 + $0x23c] sm:$0xf]
    %v235 = vld [vmem:[%s1 + $0x240] sm:$0xf]
    %v236 = vld [vmem:[%s1 + $0x244] sm:$0xf]
    %v237 = vld [vmem:[%s1 + $0x248] sm:$0xf]
    %v238 = vld [vmem:[%s1 + $0x24c] sm:$0xf]
    %v239 = vld [vmem:[%s1 + $0x250] sm:$0xf]
    %v240 = vld [vmem:[%s1 + $0x254] sm:$0xf]
    %v241 = vld [vmem:[%s1 + $0x258] sm:$0xf]
    %v242 = vld [vmem:[%s1 + $0x25c] sm:$0xf]
    %v243 = vld [vmem:[%s1 + $0x260] sm:$0xf]
    %v244 = vld [vmem:[%s1 + $0x264] sm:$0xf]
    %v245 = vld [vmem:[%s1 + $0x268] sm:$0xf]
    %v246 = vld [vmem:[%s1 + $0x26c] sm:$0xf]
    %v247 = vld [vmem:[%s1 + $0x270] sm:$0xf]
    %v248 = vld [vmem:[%s1 + $0x274] sm:$0xf]
    %v249 = vld [vmem:[%s1 + $0x278] sm:$0xf]
    %v250 = vld [vmem:[%s1 + $0x27c] sm:$0xf]
    %v251 = vld [vmem:[%s1 + $0x280] sm:$0xf]
    %v252 = vld [vmem:[%s1 + $0x284] sm:$0xf]
    %v253 = vld [vmem:[%s1 + $0x288] sm:$0xf]
    %v254 = vld [vmem:[%s1 + $0x28c] sm:$0xf]
    %v255 = vld [vmem:[%s1 + $0x290] sm:$0xf]
    %v256 = vld [vmem:[%s1 + $0x294] sm:$0xf]
    %v257 = vld [vmem:[%s1 + $0x298] sm:$0xf]
    %v258 = vld [vmem:[%s1 + $0x29c] sm:$0xf]
    %v259 = vld [vmem:[%s1 + $0x2a0] sm:$0xf]
    %v260 = vld [vmem:[%s1 + $0x2a4] sm:$0xf]
    %v261 = vld [vmem:[%s1 + $0x2a8] sm:$0xf]
    %v262 = vld [vmem:[%s1 + $0x2ac] sm:$0xf]
    %v263 = vld [vmem:[%s1 + $0x2b0] sm:$0xf]
    %v264 = vld [vmem:[%s1 + $0x2b4] sm:$0xf]
    %v265 = vld [vmem:[%s1 + $0x2b8] sm:$0xf]
    %v266 = vld [vmem:[%s1 + $0x2bc] sm:$0xf]
    %v267 = vld [vmem:[%s1 + $0x2c0] sm:$0xf]
    %v268 = vld [vmem:[%s1 + $0x2c4] sm:$0xf]
    %v269 = vld [vmem:[%s1 + $0x2c8] sm:$0xf]
    %v270 = vld [vmem:[%s1 + $0x2cc] sm:$0xf]
    %v271 = vld [vmem:[%s1 + $0x2d0] sm:$0xf]
    %v272 = vld [vmem:[%s1 + $0x2d4] sm:$0xf]
    %v273 = vld [vmem:[%s1 + $0x2d8] sm:$0xf]
    %v274 = vld [vmem:[%s1 + $0x2dc] sm:$0xf]
    %v275 = vld [vmem:[%s1 + $0x2e0] sm:$0xf]
    %v276 = vld [vmem:[%s1 + $0x2e4] sm:$0xf]
    %v277 = vld [vmem:[%s1 + $0x2e8] sm:$0xf]
    %v278 = vld [vmem:[%s1 + $0x2ec] sm:$0xf]
    %v279 = vld [vmem:[%s1 + $0x2f0] sm:$0xf]
    %v280 = vld [vmem:[%s1 + $0x2f4] sm:$0xf]
    %v281 = vld [vmem:[%s1 + $0x2f8] sm:$0xf]
    %v282 = vld [vmem:[%s1 + $0x2fc] sm:$0xf]
    %v283 = vld [vmem:[%s1 + $0x300] sm:$0xf]
    %v284 = vld [vmem:[%s1 + $0x304] sm:$0xf]
    %v285 = vld [vmem:[%s1 + $0x308] sm:$0xf]
    %v286 = vld [vmem:[%s1 + $0x30c] sm:$0xf]
    %v287 = vld [vmem:[%s1 + $0x310] sm:$0xf]
    %v288 = vld [vmem:[%s1 + $0x314] sm:$0xf]
    %v289 = vld [vmem:[%s1 + $0x318] sm:$0xf]
    %v290 = vld [vmem:[%s1 + $0x31c] sm:$0xf]
    %v291 = vld [vmem:[%s1 + $0x320] sm:$0xf]
    %v292 = vld [vmem:[%s1 + $0x324] sm:$0xf]
    %v293 = vld [vmem:[%s1 + $0x328] sm:$0xf]
    %v294 = vld [vmem:[%s1 + $0x32c] sm:$0xf]
    %v295 = vld [vmem:[%s1 + $0x330] sm:$0xf]
    %v296 = vld [vmem:[%s1 + $0x334] sm:$0xf]
    %v297 = vld [vmem:[%s1 + $0x338] sm:$0xf]
    %v298 = vld [vmem:[%s1 + $0x33c] sm:$0xf]
    %v299 = vld [vmem:[%s1 + $0x340] sm:$0xf]
    %v300 = vld [vmem:[%s1 + $0x344] sm:$0xf]
    %v301 = vld [vmem:[%s1 + $0x348] sm:$0xf]
    %v302 = vld [vmem:[%s1 + $0x34c] sm:$0xf]
    %v303 = vld [vmem:[%s1 + $0x350] sm:$0xf]
    %v304 = vld [vmem:[%s1 + $0x354] sm:$0xf]
    %v305 = vld [vmem:[%s1 + $0x358] sm:$0xf]
    %v306 = vld [vmem:[%s1 + $0x35c] sm:$0xf]
    %v307 = vld [vmem:[%s1 + $0x360] sm:$0xf]
    %v308 = vld [vmem:[%s1 + $0x364] sm:$0xf]
    %v309 = vld [vmem:[%s1 + $0x368] sm:$0xf]
    %v310 = vld [vmem:[%s1 + $0x36c] sm:$0xf]
    %v311 = vld [vmem:[%s1 + $0x370] sm:$0xf]
    %v312 = vld [vmem:[%s1 + $0x374] sm:$0xf]
    %v313 = vld [vmem:[%s1 + $0x378] sm:$0xf]
    %v314 = vld [vmem:[%s1 + $0x37c] sm:$0xf]
    %v315 = vld [vmem:[%s1 + $0x380] sm:$0xf]
    %v316 = vld [vmem:[%s1 + $0x384] sm:$0xf]
    %v317 = vld [vmem:[%s1 + $0x388] sm:$0xf]
    %v318 = vld [vmem:[%s1 + $0x38c] sm:$0xf]
    %v319 = vld [vmem:[%s1 + $0x390] sm:$0xf]
    %v320 = vld [vmem:[%s1 + $0x394] sm:$0xf]
    %v321 = vld [vmem:[%s1 + $0x398] sm:$0xf]
    %v322 = vld [vmem:[%s1 + $0x39c] sm:$0xf]
    %v323 = vld [vmem:[%s1 + $0x3a0] sm:$0xf]
    %v324 = vld [vmem:[%s1 + $0x3a4] sm:$0xf]
    %v325 = vld [vmem:[%s1 + $0x3a8] sm:$0xf]
    %v326 = vld [vmem:[%s1 + $0x3ac] sm:$0xf]
    %v327 = vld [vmem:[%s1 + $0x3b0] sm:$0xf]
    %v328 = vld [vmem:[%s1 + $0x3b4] sm:$0xf]
    %v329 = vld [vmem:[%s1 + $0x3b8] sm:$0xf]
    %v330 = vld [vmem:[%s1 + $0x3bc] sm:$0xf]
    %v331 = vld [vmem:[%s1 + $0x3c0] sm:$0xf]
    %v332 = vld [vmem:[%s1 + $0x3c4] sm:$0xf]
    %v333 = vld [vmem:[%s1 + $0x3c8] sm:$0xf]
    %v334 = vld [vmem:[%s1 + $0x3cc] sm:$0xf]
    %v335 = vld [vmem:[%s1 + $0x3d0] sm:$0xf]
    %v336 = vld [vmem:[%s1 + $0x3d4] sm:$0xf]
    %v337 = vld [vmem:[%s1 + $0x3d8] sm:$0xf]
    %v338 = vld [vmem:[%s1 + $0x3dc] sm:$0xf]
    %v339 = vld [vmem:[%s1 + $0x3e0] sm:$0xf]
    %v340 = vld [vmem:[%s1 + $0x3e4] sm:$0xf]
    %v341 = vld [vmem:[%s1 + $0x3e8] sm:$0xf]
    %v342 = vld [vmem:[%s1 + $0x3ec] sm:$0xf]
    %v343 = vld [vmem:[%s1 + $0x3f0] sm:$0xf]
    %v344 = vld [vmem:[%s1 + $0x3f4] sm:$0xf]
    %v345 = vld [vmem:[%s1 + $0x3f8] sm:$0xf]
    %v346 = vld [vmem:[%s1 + $0x3fc] sm:$0xf]
    %v347 = vld [vmem:[%s1 + $0x400] sm:$0xf]
    %v348 = vld [vmem:[%s1 + $0x404] sm:$0xf]
    %v349 = vld [vmem:[%s1 + $0x408] sm:$0xf]
    %v350 = vld [vmem:[%s1 + $0x40c] sm:$0xf]
    %v351 = vld [vmem:[%s1 + $0x410] sm:$0xf]
    %v352 = vld [vmem:[%s1 + $0x414] sm:$0xf]
    %v353 = vld [vmem:[%s1 + $0x418] sm:$0xf]
    %v354 = vld [vmem:[%s1 + $0x41c] sm:$0xf]
    %v355 = vld [vmem:[%s1 + $0x420] sm:$0xf]
    %v356 = vld [vmem:[%s1 + $0x424] sm:$0xf]
    %v357 = vld [vmem:[%s1 + $0x428] sm:$0xf]
    %v358 = vld [vmem:[%s1 + $0x42c] sm:$0xf]
    %v359 = vld [vmem:[%s1 + $0x430] sm:$0xf]
    %v360 = vld [vmem:[%s1 + $0x434] sm:$0xf]
    %v361 = vld [vmem:[%s1 + $0x438] sm:$0xf]
    %v362 = vld [vmem:[%s1 + $0x43c] sm:$0xf]
    %v363 = vld [vmem:[%s1 + $0x440] sm:$0xf]
    %v364 = vld [vmem:[%s1 + $0x444] sm:$0xf]
    %v365 = vld [vmem:[%s1 + $0x448] sm:$0xf]
    %v366 = vld [vmem:[%s1 + $0x44c] sm:$0xf]
    %v367 = vld [vmem:[%s1 + $0x450] sm:$0xf]
    %v368 = vld [vmem:[%s1 + $0x454] sm:$0xf]
    %v369 = vld [vmem:[%s1 + $0x458] sm:$0xf]
    %v370 = vld [vmem:[%s1 + $0x45c] sm:$0xf]
    %v371 = vld [vmem:[%s1 + $0x460] sm:$0xf]
    %v372 = vld [vmem:[%s1 + $0x464] sm:$0xf]
    %v373 = vld [vmem:[%s1 + $0x468] sm:$0xf]
    %v374 = vld [vmem:[%s1 + $0x46c] sm:$0xf]
    %v375 = vld [vmem:[%s1 + $0x470] sm:$0xf]
    %v376 = vld [vmem:[%s1 + $0x474] sm:$0xf]
    %v377 = vld [vmem:[%s1 + $0x478] sm:$0xf]
    %v378 = vld [vmem:[%s1 + $0x47c] sm:$0xf]
    %v379 = vld [vmem:[%s1 + $0x480] sm:$0xf]
    %v380 = vld [vmem:[%s1 + $0x484] sm:$0xf]
    %v381 = vld [vmem:[%s1 + $0x488] sm:$0xf]
    %v382 = vld [vmem:[%s1 + $0x48c] sm:$0xf]
    %v383 = vld [vmem:[%s1 + $0x490] sm:$0xf]
    %v384 = vld [vmem:[%s1 + $0x494] sm:$0xf]
    %v385 = vld [vmem:[%s1 + $0x498] sm:$0xf]
    %v386 = vld [vmem:[%s1 + $0x49c] sm:$0xf]
    %v387 = vld [vmem:[%s1 + $0x4a0] sm:$0xf]
    %v388 = vld [vmem:[%s1 + $0x4a4] sm:$0xf]
    %v389 = vld [vmem:[%s1 + $0x4a8] sm:$0xf]
    %v390 = vld [vmem:[%s1 + $0x4ac] sm:$0xf]
    %v391 = vld [vmem:[%s1 + $0x4b0] sm:$0xf]
    %v392 = vld [vmem:[%s1 + $0x4b4] sm:$0xf]
    %v393 = vld [vmem:[%s1 + $0x4b8] sm:$0xf]
    %v394 = vld [vmem:[%s1 + $0x4bc] sm:$0xf]
    %v395 = vld [vmem:[%s1 + $0x4c0] sm:$0xf]
    %v396 = vld [vmem:[%s1 + $0x4c4] sm:$0xf]
    %v397 = vld [vmem:[%s1 + $0x4c8] sm:$0xf]
    %v398 = vld [vmem:[%s1 + $0x4cc] sm:$0xf]
    %v399 = vld [vmem:[%s1 + $0x4d0] sm:$0xf]
    %v400 = vld [vmem:[%s1 + $0x4d4] sm:$0xf]
    %v401 = vld [vmem:[%s1 + $0x4d8] sm:$0xf]
    %v402 = vld [vmem:[%s1 + $0x4dc] sm:$0xf]
    %v403 = vld [vmem:[%s1 + $0x4e0] sm:$0xf]
    %v404 = vld [vmem:[%s1 + $0x4e4] sm:$0xf]
    %v405 = vld [vmem:[%s1 + $0x4e8] sm:$0xf]
    %v406 = vld [vmem:[%s1 + $0x4ec] sm:$0xf]
    %v407 = vld [vmem:[%s1 + $0x4f0] sm:$0xf]
    %v408 = vld [vmem:[%s1 + $0x4f4] sm:$0xf]
    %v409 = vld [vmem:[%s1 + $0x4f8] sm:$0xf]
    %v410 = vld [vmem:[%s1 + $0x4fc] sm:$0xf]
    %v411 = vld [vmem:[%s1 + $0x500] sm:$0xf]
    %v412 = vld [vmem:[%s1 + $0x504] sm:$0xf]
    %v413 = vld [vmem:[%s1 + $0x508] sm:$0xf]
    %v414 = vld [vmem:[%s1 + $0x50c] sm:$0xf]
    %v415 = vld [vmem:[%s1 + $0x510] sm:$0xf]
    %v416 = vld [vmem:[%s1 + $0x514] sm:$0xf]
    %v417 = vld [vmem:[%s1 + $0x518] sm:$0xf]
    %v418 = vld [vmem:[%s1 + $0x51c] sm:$0xf]
    %v419 = vld [vmem:[%s1 + $0x520] sm:$0xf]
    %v420 = vld [vmem:[%s1 + $0x524] sm:$0xf]
    %v421 = vld [vmem:[%s1 + $0x528] sm:$0xf]
    %v422 = vld [vmem:[%s1 + $0x52c] sm:$0xf]
    %v423 = vld [vmem:[%s1 + $0x530] sm:$0xf]
    %v424 = vld [vmem:[%s1 + $0x534] sm:$0xf]
    %v425 = vld [vmem:[%s1 + $0x538] sm:$0xf]
    %v426 = vld [vmem:[%s1 + $0x53c] sm:$0xf]
    %v427 = vld [vmem:[%s1 + $0x540] sm:$0xf]
    %v428 = vld [vmem:[%s1 + $0x544] sm:$0xf]
    %v429 = vld [vmem:[%s1 + $0x548] sm:$0xf]
    %v430 = vld [vmem:[%s1 + $0x54c] sm:$0xf]
    %v431 = vld [vmem:[%s1 + $0x550] sm:$0xf]
    %v432 = vld [vmem:[%s1 + $0x554] sm:$0xf]
    %v433 = vld [vmem:[%s1 + $0x558] sm:$0xf]
    %v434 = vld [vmem:[%s1 + $0x55c] sm:$0xf]
    %v435 = vld [vmem:[%s1 + $0x560] sm:$0xf]
    %v436 = vld [vmem:[%s1 + $0x564] sm:$0xf]
    %v437 = vld [vmem:[%s1 + $0x568] sm:$0xf]
    %v438 = vld [vmem:[%s1 + $0x56c] sm:$0xf]
    %v439 = vld [vmem:[%s1 + $0x570] sm:$0xf]
    %v440 = vld [vmem:[%s1 + $0x574] sm:$0xf]
    %v441 = vld [vmem:[%s1 + $0x578] sm:$0xf]
    %v442 = vld [vmem:[%s1 + $0x57c] sm:$0xf]
    %v443 = vld [vmem:[%s1 + $0x580] sm:$0xf]
    %v444 = vld [vmem:[%s1 + $0x584] sm:$0xf]
    %v445 = vld [vmem:[%s1 + $0x588] sm:$0xf]
    %v446 = vld [vmem:[%s1 + $0x58c] sm:$0xf]
    %v447 = vld [vmem:[%s1 + $0x590] sm:$0xf]
    %v448 = vld [vmem:[%s1 + $0x594] sm:$0xf]
    %v449 = vld [vmem:[%s1 + $0x598] sm:$0xf]
    %v450 = vld [vmem:[%s1 + $0x59c] sm:$0xf]
    %v451 = vld [vmem:[%s1 + $0x5a0] sm:$0xf]
    %v452 = vld [vmem:[%s1 + $0x5a4] sm:$0xf]
    %v453 = vld [vmem:[%s1 + $0x5a8] sm:$0xf]
    %v454 = vld [vmem:[%s1 + $0x5ac] sm:$0xf]
    %v455 = vld [vmem:[%s1 + $0x5b0] sm:$0xf]
    %v456 = vld [vmem:[%s1 + $0x5b4] sm:$0xf]
    %v457 = vld [vmem:[%s1 + $0x5b8] sm:$0xf]
    %v458 = vld [vmem:[%s1 + $0x5bc] sm:$0xf]
    %v459 = vld [vmem:[%s1 + $0x5c0] sm:$0xf]
    %v460 = vld [vmem:[%s1 + $0x5c4] sm:$0xf]
    %v461 = vld [vmem:[%s1 + $0x5c8] sm:$0xf]
    %v462 = vld [vmem:[%s1 + $0x5cc] sm:$0xf]
    %v463 = vld [vmem:[%s1 + $0x5d0] sm:$0xf]
    %v464 = vld [vmem:[%s1 + $0x5d4] sm:$0xf]
    %v465 = vld [vmem:[%s1 + $0x5d8] sm:$0xf]
    %v466 = vld [vmem:[%s1 + $0x5dc] sm:$0xf]
    %v467 = vld [vmem:[%s1 + $0x5e0] sm:$0xf]
    %v468 = vld [vmem:[%s1 + $0x5e4] sm:$0xf]
    %v469 = vld [vmem:[%s1 + $0x5e8] sm:$0xf]
    %v470 = vld [vmem:[%s1 + $0x5ec] sm:$0xf]
    %v471 = vld [vmem:[%s1 + $0x5f0] sm:$0xf]
    %v472 = vld [vmem:[%s1 + $0x5f4] sm:$0xf]
    %v473 = vld [vmem:[%s1 + $0x5f8] sm:$0xf]
    %v474 = vld [vmem:[%s1 + $0x5fc] sm:$0xf]
    %v475 = vld [vmem:[%s1 + $0x600] sm:$0xf]
    %v476 = vld [vmem:[%s1 + $0x604] sm:$0xf]
    %v477 = vld [vmem:[%s1 + $0x608] sm:$0xf]
    %v478 = vld [vmem:[%s1 + $0x60c] sm:$0xf]
    %v479 = vld [vmem:[%s1 + $0x610] sm:$0xf]
    %v480 = vld [vmem:[%s1 + $0x614] sm:$0xf]
    %v481 = vld [vmem:[%s1 + $0x618] sm:$0xf]
    %v482 = vld [vmem:[%s1 + $0x61c] sm:$0xf]
    %v483 = vld [vmem:[%s1 + $0x620] sm:$0xf]
    %v484 = vld [vmem:[%s1 + $0x624] sm:$0xf]
    %v485 = vld [vmem:[%s1 + $0x628] sm:$0xf]
    %v486 = vld [vmem:[%s1 + $0x62c] sm:$0xf]
    %v487 = vld [vmem:[%s1 + $0x630] sm:$0xf]
    %v488 = vld [vmem:[%s1 + $0x634] sm:$0xf]
    %v489 = vld [vmem:[%s1 + $0x638] sm:$0xf]
    %v490 = vld [vmem:[%s1 + $0x63c] sm:$0xf]
    %v491 = vld [vmem:[%s1 + $0x640] sm:$0xf]
    %v492 = vld [vmem:[%s1 + $0x644] sm:$0xf]
    %v493 = vld [vmem:[%s1 + $0x648] sm:$0xf]
    %v494 = vld [vmem:[%s1 + $0x64c] sm:$0xf]
    %v495 = vld [vmem:[%s1 + $0x650] sm:$0xf]
    %v496 = vld [vmem:[%s1 + $0x654] sm:$0xf]
    %v497 = vld [vmem:[%s1 + $0x658] sm:$0xf]
    %v498 = vld [vmem:[%s1 + $0x65c] sm:$0xf]
    %v499 = vld [vmem:[%s1 + $0x660] sm:$0xf]
    %v500 = vld [vmem:[%s1 + $0x664] sm:$0xf]
    %v501 = vld [vmem:[%s1 + $0x668] sm:$0xf]
    %v502 = vld [vmem:[%s1 + $0x66c] sm:$0xf]
    %v503 = vld [vmem:[%s1 + $0x670] sm:$0xf]
    %v504 = vld [vmem:[%s1 + $0x674] sm:$0xf]
    %v505 = vld [vmem:[%s1 + $0x678] sm:$0xf]
    %v506 = vld [vmem:[%s1 + $0x67c] sm:$0xf]
    %v507 = vld [vmem:[%s1 + $0x680] sm:$0xf]
    %v508 = vld [vmem:[%s1 + $0x684] sm:$0xf]
    %v509 = vld [vmem:[%s1 + $0x688] sm:$0xf]
    %v510 = vld [vmem:[%s1 + $0x68c] sm:$0xf]
    %v511 = vld [vmem:[%s1 + $0x690] sm:$0xf]
    %v512 = vld [vmem:[%s1 + $0x694] sm:$0xf]
    %v513 = vld [vmem:[%s1 + $0x698] sm:$0xf]
    %v514 = vld [vmem:[%s1 + $0x69c] sm:$0xf]
    %v515 = vld [vmem:[%s1 + $0x6a0] sm:$0xf]
    %v516 = vld [vmem:[%s1 + $0x6a4] sm:$0xf]
    %v517 = vld [vmem:[%s1 + $0x6a8] sm:$0xf]
    %v518 = vld [vmem:[%s1 + $0x6ac] sm:$0xf]
    %v519 = vld [vmem:[%s1 + $0x6b0] sm:$0xf]
    %v520 = vld [vmem:[%s1 + $0x6b4] sm:$0xf]
    %v521 = vld [vmem:[%s1 + $0x6b8] sm:$0xf]
    %v522 = vld [vmem:[%s1 + $0x6bc] sm:$0xf]
    %v523 = vld [vmem:[%s1 + $0x6c0] sm:$0xf]
    %v524 = vld [vmem:[%s1 + $0x6c4] sm:$0xf]
    %v525 = vld [vmem:[%s1 + $0x6c8] sm:$0xf]
    %v526 = vld [vmem:[%s1 + $0x6cc] sm:$0xf]
    %v527 = vld [vmem:[%s1 + $0x6d0] sm:$0xf]
    %v528 = vld [vmem:[%s1 + $0x6d4] sm:$0xf]
    %v529 = vld [vmem:[%s1 + $0x6d8] sm:$0xf]
    %v530 = vld [vmem:[%s1 + $0x6dc] sm:$0xf]
    %v531 = vld [vmem:[%s1 + $0x6e0] sm:$0xf]
    %v532 = vld [vmem:[%s1 + $0x6e4] sm:$0xf]
    %v533 = vld [vmem:[%s1 + $0x6e8] sm:$0xf]
    %v534 = vld [vmem:[%s1 + $0x6ec] sm:$0xf]
    %v535 = vld [vmem:[%s1 + $0x6f0] sm:$0xf]
    %v536 = vld [vmem:[%s1 + $0x6f4] sm:$0xf]
    %v537 = vld [vmem:[%s1 + $0x6f8] sm:$0xf]
    %v538 = vld [vmem:[%s1 + $0x6fc] sm:$0xf]
    %v539 = vld [vmem:[%s1 + $0x700] sm:$0xf]
    %v540 = vld [vmem:[%s1 + $0x704] sm:$0xf]
    %v541 = vld [vmem:[%s1 + $0x708] sm:$0xf]
    %v542 = vld [vmem:[%s1 + $0x70c] sm:$0xf]
    %v543 = vld [vmem:[%s1 + $0x710] sm:$0xf]
    %v544 = vld [vmem:[%s1 + $0x714] sm:$0xf]
    %v545 = vld [vmem:[%s1 + $0x718] sm:$0xf]
    %v546 = vld [vmem:[%s1 + $0x71c] sm:$0xf]
    %v547 = vld [vmem:[%s1 + $0x720] sm:$0xf]
    %v548 = vld [vmem:[%s1 + $0x724] sm:$0xf]
    %v549 = vld [vmem:[%s1 + $0x728] sm:$0xf]
    %v550 = vld [vmem:[%s1 + $0x72c] sm:$0xf]
    %v551 = vld [vmem:[%s1 + $0x730] sm:$0xf]
    %v552 = vld [vmem:[%s1 + $0x734] sm:$0xf]
    %v553 = vld [vmem:[%s1 + $0x738] sm:$0xf]
    %v554 = vld [vmem:[%s1 + $0x73c] sm:$0xf]
    %v555 = vld [vmem:[%s1 + $0x740] sm:$0xf]
    %v556 = vld [vmem:[%s1 + $0x744] sm:$0xf]
    %v557 = vld [vmem:[%s1 + $0x748] sm:$0xf]
    %v558 = vld [vmem:[%s1 + $0x74c] sm:$0xf]
    %v559 = vld [vmem:[%s1 + $0x750] sm:$0xf]
    %v560 = vld [vmem:[%s1 + $0x754] sm:$0xf]
    %v561 = vld [vmem:[%s1 + $0x758] sm:$0xf]
    %v562 = vld [vmem:[%s1 + $0x75c] sm:$0xf]
    %v563 = vld [vmem:[%s1 + $0x760] sm:$0xf]
    %v564 = vld [vmem:[%s1 + $0x764] sm:$0xf]
    %v565 = vld [vmem:[%s1 + $0x768] sm:$0xf]
    %v566 = vld [vmem:[%s1 + $0x76c] sm:$0xf]
    %v567 = vld [vmem:[%s1 + $0x770] sm:$0xf]
    %v568 = vld [vmem:[%s1 + $0x774] sm:$0xf]
    %v569 = vld [vmem:[%s1 + $0x778] sm:$0xf]
    %v570 = vld [vmem:[%s1 + $0x77c] sm:$0xf]
    %v571 = vld [vmem:[%s1 + $0x780] sm:$0xf]
    %v572 = vld [vmem:[%s1 + $0x784] sm:$0xf]
    %v573 = vld [vmem:[%s1 + $0x788] sm:$0xf]
    %v574 = vld [vmem:[%s1 + $0x78c] sm:$0xf]
    %v575 = vld [vmem:[%s1 + $0x790] sm:$0xf]
    %v576 = vld [vmem:[%s1 + $0x794] sm:$0xf]
    %v577 = vld [vmem:[%s1 + $0x798] sm:$0xf]
    %v578 = vld [vmem:[%s1 + $0x79c] sm:$0xf]
    %v579 = vld [vmem:[%s1 + $0x7a0] sm:$0xf]
    %v580 = vld [vmem:[%s1 + $0x7a4] sm:$0xf]
    %v581 = vld [vmem:[%s1 + $0x7a8] sm:$0xf]
    %v582 = vld [vmem:[%s1 + $0x7ac] sm:$0xf]
    %v583 = vld [vmem:[%s1 + $0x7b0] sm:$0xf]
    %v584 = vld [vmem:[%s1 + $0x7b4] sm:$0xf]
    %v585 = vld [vmem:[%s1 + $0x7b8] sm:$0xf]
    %v586 = vld [vmem:[%s1 + $0x7bc] sm:$0xf]
    %v587 = vld [vmem:[%s1 + $0x7c0] sm:$0xf]
    %v588 = vld [vmem:[%s1 + $0x7c4] sm:$0xf]
    %v589 = vld [vmem:[%s1 + $0x7c8] sm:$0xf]
    %v590 = vld [vmem:[%s1 + $0x7cc] sm:$0xf]
    %v591 = vld [vmem:[%s1 + $0x7d0] sm:$0xf]
    %v592 = vld [vmem:[%s1 + $0x7d4] sm:$0xf]
    %v593 = vld [vmem:[%s1 + $0x7d8] sm:$0xf]
    %v594 = vld [vmem:[%s1 + $0x7dc] sm:$0xf]
    %v595 = vld [vmem:[%s1 + $0x7e0] sm:$0xf]
    %v596 = vld [vmem:[%s1 + $0x7e4] sm:$0xf]
    %v597 = vld [vmem:[%s1 + $0x7e8] sm:$0xf]
    %v598 = vld [vmem:[%s1 + $0x7ec] sm:$0xf]
    %v599 = vld [vmem:[%s1 + $0x7f0] sm:$0xf]
    %v600 = vld [vmem:[%s1 + $0x7f4] sm:$0xf]
    %v601 = vld [vmem:[%s1 + $0x7f8] sm:$0xf]
    %v602 = vld [vmem:[%s1 + $0x7fc] sm:$0xf]
    %v603 = vld [vmem:[%s1 + $0x800] sm:$0xf]
    %v604 = vld [vmem:[%s1 + $0x804] sm:$0xf]
    %v605 = vld [vmem:[%s1 + $0x808] sm:$0xf]
    %v606 = vld [vmem:[%s1 + $0x80c] sm:$0xf]
    %v607 = vld [vmem:[%s1 + $0x810] sm:$0xf]
    %v608 = vld [vmem:[%s1 + $0x814] sm:$0xf]
    %v609 = vld [vmem:[%s1 + $0x818] sm:$0xf]
    %v610 = vld [vmem:[%s1 + $0x81c] sm:$0xf]
    %v611 = vld [vmem:[%s1 + $0x820] sm:$0xf]
    %v612 = vld [vmem:[%s1 + $0x824] sm:$0xf]
    %v613 = vld [vmem:[%s1 + $0x828] sm:$0xf]
    %v614 = vld [vmem:[%s1 + $0x82c] sm:$0xf]
    %v615 = vld [vmem:[%s1 + $0x830] sm:$0xf]
    %v616 = vld [vmem:[%s1 + $0x834] sm:$0xf]
    %v617 = vld [vmem:[%s1 + $0x838] sm:$0xf]
    %v618 = vld [vmem:[%s1 + $0x83c] sm:$0xf]
    %v619 = vld [vmem:[%s1 + $0x840] sm:$0xf]
    %v620 = vld [vmem:[%s1 + $0x844] sm:$0xf]
    %v621 = vld [vmem:[%s1 + $0x848] sm:$0xf]
    %v622 = vld [vmem:[%s1 + $0x84c] sm:$0xf]
    %v623 = vld [vmem:[%s1 + $0x850] sm:$0xf]
    %v624 = vld [vmem:[%s1 + $0x854] sm:$0xf]
    %v625 = vld [vmem:[%s1 + $0x858] sm:$0xf]
    %v626 = vld [vmem:[%s1 + $0x85c] sm:$0xf]
    %v627 = vld [vmem:[%s1 + $0x860] sm:$0xf]
    %v628 = vld [vmem:[%s1 + $0x864] sm:$0xf]
    %v629 = vld [vmem:[%s1 + $0x868] sm:$0xf]
    %v630 = vld [vmem:[%s1 + $0x86c] sm:$0xf]
    %v631 = vld [vmem:[%s1 + $0x870] sm:$0xf]
    %v632 = vld [vmem:[%s1 + $0x874] sm:$0xf]
    %v633 = vld [vmem:[%s1 + $0x878] sm:$0xf]
    %v634 = vld [vmem:[%s1 + $0x87c] sm:$0xf]
    %v635 = vld [vmem:[%s1 + $0x880] sm:$0xf]
    %v636 = vld [vmem:[%s1 + $0x884] sm:$0xf]
    %v637 = vld [vmem:[%s1 + $0x888] sm:$0xf]
    %v638 = vld [vmem:[%s1 + $0x88c] sm:$0xf]
    %v639 = vld [vmem:[%s1 + $0x890] sm:$0xf]
    %v640 = vld [vmem:[%s1 + $0x894] sm:$0xf]
    %v641 = vld [vmem:[%s1 + $0x898] sm:$0xf]
    %v642 = vld [vmem:[%s1 + $0x89c] sm:$0xf]
    %v643 = vld [vmem:[%s1 + $0x8a0] sm:$0xf]
    %v644 = vld [vmem:[%s1 + $0x8a4] sm:$0xf]
    %v645 = vld [vmem:[%s1 + $0x8a8] sm:$0xf]
    %v646 = vld [vmem:[%s1 + $0x8ac] sm:$0xf]
    %v647 = vld [vmem:[%s1 + $0x8b0] sm:$0xf]
    %v648 = vld [vmem:[%s1 + $0x8b4] sm:$0xf]
    %v649 = vld [vmem:[%s1 + $0x8b8] sm:$0xf]
    %v650 = vld [vmem:[%s1 + $0x8bc] sm:$0xf]
    %v651 = vld [vmem:[%s1 + $0x8c0] sm:$0xf]
    %v652 = vld [vmem:[%s1 + $0x8c4] sm:$0xf]
    %v653 = vld [vmem:[%s1 + $0x8c8] sm:$0xf]
    %v654 = vld [vmem:[%s1 + $0x8cc] sm:$0xf]
    %v655 = vld [vmem:[%s1 + $0x8d0] sm:$0xf]
    %v656 = vld [vmem:[%s1 + $0x8d4] sm:$0xf]
    %v657 = vld [vmem:[%s1 + $0x8d8] sm:$0xf]
    %v658 = vld [vmem:[%s1 + $0x8dc] sm:$0xf]
    %v659 = vld [vmem:[%s1 + $0x8e0] sm:$0xf]
    %v660 = vld [vmem:[%s1 + $0x8e4] sm:$0xf]
    %v661 = vld [vmem:[%s1 + $0x8e8] sm:$0xf]
    %v662 = vld [vmem:[%s1 + $0x8ec] sm:$0xf]
    %v663 = vld [vmem:[%s1 + $0x8f0] sm:$0xf]
    %v664 = vld [vmem:[%s1 + $0x8f4] sm:$0xf]
    %v665 = vld [vmem:[%s1 + $0x8f8] sm:$0xf]
    %v666 = vld [vmem:[%s1 + $0x8fc] sm:$0xf]
    %v667 = vld [vmem:[%s1 + $0x900] sm:$0xf]
    %v668 = vld [vmem:[%s1 + $0x904] sm:$0xf]
    %v669 = vld [vmem:[%s1 + $0x908] sm:$0xf]
    %v670 = vld [vmem:[%s1 + $0x90c] sm:$0xf]
    %v671 = vld [vmem:[%s1 + $0x910] sm:$0xf]
    %v672 = vld [vmem:[%s1 + $0x914] sm:$0xf]
    %v673 = vld [vmem:[%s1 + $0x918] sm:$0xf]
    %v674 = vld [vmem:[%s1 + $0x91c] sm:$0xf]
    %v675 = vld [vmem:[%s1 + $0x920] sm:$0xf]
    %v676 = vld [vmem:[%s1 + $0x924] sm:$0xf]
    %v677 = vld [vmem:[%s1 + $0x928] sm:$0xf]
    %v678 = vld [vmem:[%s1 + $0x92c] sm:$0xf]
    %v679 = vld [vmem:[%s1 + $0x930] sm:$0xf]
    %v680 = vld [vmem:[%s1 + $0x934] sm:$0xf]
    %v681 = vld [vmem:[%s1 + $0x938] sm:$0xf]
    %v682 = vld [vmem:[%s1 + $0x93c] sm:$0xf]
    %v683 = vld [vmem:[%s1 + $0x940] sm:$0xf]
    %v684 = vld [vmem:[%s1 + $0x944] sm:$0xf]
    %v685 = vld [vmem:[%s1 + $0x948] sm:$0xf]
    %v686 = vld [vmem:[%s1 + $0x94c] sm:$0xf]
    %v687 = vld [vmem:[%s1 + $0x950] sm:$0xf]
    %v688 = vld [vmem:[%s1 + $0x954] sm:$0xf]
    %v689 = vld [vmem:[%s1 + $0x958] sm:$0xf]
    %v690 = vld [vmem:[%s1 + $0x95c] sm:$0xf]
    %v691 = vld [vmem:[%s1 + $0x960] sm:$0xf]
    %v692 = vld [vmem:[%s1 + $0x964] sm:$0xf]
    %v693 = vld [vmem:[%s1 + $0x968] sm:$0xf]
    %v694 = vld [vmem:[%s1 + $0x96c] sm:$0xf]
    %v695 = vld [vmem:[%s1 + $0x970] sm:$0xf]
    %v696 = vld [vmem:[%s1 + $0x974] sm:$0xf]
    %v697 = vld [vmem:[%s1 + $0x978] sm:$0xf]
    %v698 = vld [vmem:[%s1 + $0x97c] sm:$0xf]
    %v699 = vld [vmem:[%s1 + $0x980] sm:$0xf]
    %v700 = vld [vmem:[%s1 + $0x984] sm:$0xf]
    %v701 = vld [vmem:[%s1 + $0x988] sm:$0xf]
    %v702 = vld [vmem:[%s1 + $0x98c] sm:$0xf]
    %v703 = vld [vmem:[%s1 + $0x990] sm:$0xf]
    %v704 = vld [vmem:[%s1 + $0x994] sm:$0xf]
    %v705 = vld [vmem:[%s1 + $0x998] sm:$0xf]
    %v706 = vld [vmem:[%s1 + $0x99c] sm:$0xf]
    %v707 = vld [vmem:[%s1 + $0x9a0] sm:$0xf]
    %v708 = vld [vmem:[%s1 + $0x9a4] sm:$0xf]
    %v709 = vld [vmem:[%s1 + $0x9a8] sm:$0xf]
    %v710 = vld [vmem:[%s1 + $0x9ac] sm:$0xf]
    %v711 = vld [vmem:[%s1 + $0x9b0] sm:$0xf]
    %v712 = vld [vmem:[%s1 + $0x9b4] sm:$0xf]
    %v713 = vld [vmem:[%s1 + $0x9b8] sm:$0xf]
    %v714 = vld [vmem:[%s1 + $0x9bc] sm:$0xf]
    %v715 = vld [vmem:[%s1 + $0x9c0] sm:$0xf]
    %v716 = vld [vmem:[%s1 + $0x9c4] sm:$0xf]
    %v717 = vld [vmem:[%s1 + $0x9c8] sm:$0xf]
    %v718 = vld [vmem:[%s1 + $0x9cc] sm:$0xf]
    %v719 = vld [vmem:[%s1 + $0x9d0] sm:$0xf]
    %v720 = vld [vmem:[%s1 + $0x9d4] sm:$0xf]
    %v721 = vld [vmem:[%s1 + $0x9d8] sm:$0xf]
    %v722 = vld [vmem:[%s1 + $0x9dc] sm:$0xf]
    %v723 = vld [vmem:[%s1 + $0x9e0] sm:$0xf]
    %v724 = vld [vmem:[%s1 + $0x9e4] sm:$0xf]
    %v725 = vld [vmem:[%s1 + $0x9e8] sm:$0xf]
    %v726 = vld [vmem:[%s1 + $0x9ec] sm:$0xf]
    %v727 = vld [vmem:[%s1 + $0x9f0] sm:$0xf]
    %v728 = vld [vmem:[%s1 + $0x9f4] sm:$0xf]
    %v729 = vld [vmem:[%s1 + $0x9f8] sm:$0xf]
    %v730 = vld [vmem:[%s1 + $0x9fc] sm:$0xf]
    %v731 = vld [vmem:[%s1 + $0xa00] sm:$0xf]
    %v732 = vld [vmem:[%s1 + $0xa04] sm:$0xf]
    %v733 = vld [vmem:[%s1 + $0xa08] sm:$0xf]
    %v734 = vld [vmem:[%s1 + $0xa0c] sm:$0xf]
    %v735 = vld [vmem:[%s1 + $0xa10] sm:$0xf]
    %v736 = vld [vmem:[%s1 + $0xa14] sm:$0xf]
    %v737 = vld [vmem:[%s1 + $0xa18] sm:$0xf]
    %v738 = vld [vmem:[%s1 + $0xa1c] sm:$0xf]
    %v739 = vld [vmem:[%s1 + $0xa20] sm:$0xf]
    %v740 = vld [vmem:[%s1 + $0xa24] sm:$0xf]
    %v741 = vld [vmem:[%s1 + $0xa28] sm:$0xf]
    %v742 = vld [vmem:[%s1 + $0xa2c] sm:$0xf]
    %v743 = vld [vmem:[%s1 + $0xa30] sm:$0xf]
    %v744 = vld [vmem:[%s1 + $0xa34] sm:$0xf]
    %v745 = vld [vmem:[%s1 + $0xa38] sm:$0xf]
    %v746 = vld [vmem:[%s1 + $0xa3c] sm:$0xf]
    %v747 = vld [vmem:[%s1 + $0xa40] sm:$0xf]
    %v748 = vld [vmem:[%s1 + $0xa44] sm:$0xf]
    %v749 = vld [vmem:[%s1 + $0xa48] sm:$0xf]
    %v750 = vld [vmem:[%s1 + $0xa4c] sm:$0xf]
    %v751 = vld [vmem:[%s1 + $0xa50] sm:$0xf]
    %v752 = vld [vmem:[%s1 + $0xa54] sm:$0xf]
    %v753 = vld [vmem:[%s1 + $0xa58] sm:$0xf]
    %v754 = vld [vmem:[%s1 + $0xa5c] sm:$0xf]
    %v755 = vld [vmem:[%s1 + $0xa60] sm:$0xf]
    %v756 = vld [vmem:[%s1 + $0xa64] sm:$0xf]
    %v757 = vld [vmem:[%s1 + $0xa68] sm:$0xf]
    %v758 = vld [vmem:[%s1 + $0xa6c] sm:$0xf]
    %v759 = vld [vmem:[%s1 + $0xa70] sm:$0xf]
    %v760 = vld [vmem:[%s1 + $0xa74] sm:$0xf]
    %v761 = vld [vmem:[%s1 + $0xa78] sm:$0xf]
    %v762 = vld [vmem:[%s1 + $0xa7c] sm:$0xf]
    %v763 = vld [vmem:[%s1 + $0xa80] sm:$0xf]
    %v764 = vld [vmem:[%s1 + $0xa84] sm:$0xf]
    %v765 = vld [vmem:[%s1 + $0xa88] sm:$0xf]
    %v766 = vld [vmem:[%s1 + $0xa8c] sm:$0xf]
    %v767 = vld [vmem:[%s1 + $0xa90] sm:$0xf]
    %v768 = vld [vmem:[%s1 + $0xa94] sm:$0xf]
    %v769 = vld [vmem:[%s1 + $0xa98] sm:$0xf]
    %v770 = vld [vmem:[%s1 + $0xa9c] sm:$0xf]
    %v771 = vld [vmem:[%s1 + $0xaa0] sm:$0xf]
    %v772 = vld [vmem:[%s1 + $0xaa4] sm:$0xf]
    %v773 = vld [vmem:[%s1 + $0xaa8] sm:$0xf]
    %v774 = vld [vmem:[%s1 + $0xaac] sm:$0xf]
    %v775 = vld [vmem:[%s1 + $0xab0] sm:$0xf]
    %v776 = vld [vmem:[%s1 + $0xab4] sm:$0xf]
    %v777 = vld [vmem:[%s1 + $0xab8] sm:$0xf]
    %v778 = vld [vmem:[%s1 + $0xabc] sm:$0xf]
    %v779 = vld [vmem:[%s1 + $0xac0] sm:$0xf]
    %v780 = vld [vmem:[%s1 + $0xac4] sm:$0xf]
    %v781 = vld [vmem:[%s1 + $0xac8] sm:$0xf]
    %v782 = vld [vmem:[%s1 + $0xacc] sm:$0xf]
    %v783 = vld [vmem:[%s1 + $0xad0] sm:$0xf]
    %v784 = vld [vmem:[%s1 + $0xad4] sm:$0xf]
    %v785 = vld [vmem:[%s1 + $0xad8] sm:$0xf]
    %v786 = vld [vmem:[%s1 + $0xadc] sm:$0xf]
    %v787 = vld [vmem:[%s1 + $0xae0] sm:$0xf]
    %v788 = vld [vmem:[%s1 + $0xae4] sm:$0xf]
    %v789 = vld [vmem:[%s1 + $0xae8] sm:$0xf]
    %v790 = vld [vmem:[%s1 + $0xaec] sm:$0xf]
    %v791 = vld [vmem:[%s1 + $0xaf0] sm:$0xf]
    %v792 = vld [vmem:[%s1 + $0xaf4] sm:$0xf]
    %v793 = vld [vmem:[%s1 + $0xaf8] sm:$0xf]
    %v794 = vld [vmem:[%s1 + $0xafc] sm:$0xf]
    %v795 = vld [vmem:[%s1 + $0xb00] sm:$0xf]
    %v796 = vld [vmem:[%s1 + $0xb04] sm:$0xf]
    %v797 = vld [vmem:[%s1 + $0xb08] sm:$0xf]
    %v798 = vld [vmem:[%s1 + $0xb0c] sm:$0xf]
    %v799 = vld [vmem:[%s1 + $0xb10] sm:$0xf]
    %v800 = vld [vmem:[%s1 + $0xb14] sm:$0xf]
    %v801 = vld [vmem:[%s1 + $0xb18] sm:$0xf]
    %v802 = vld [vmem:[%s1 + $0xb1c] sm:$0xf]
    %v803 = vld [vmem:[%s1 + $0xb20] sm:$0xf]
    %v804 = vld [vmem:[%s1 + $0xb24] sm:$0xf]
    %v805 = vld [vmem:[%s1 + $0xb28] sm:$0xf]
    %v806 = vld [vmem:[%s1 + $0xb2c] sm:$0xf]
    %v807 = vld [vmem:[%s1 + $0xb30] sm:$0xf]
    %v808 = vld [vmem:[%s1 + $0xb34] sm:$0xf]
    %v809 = vld [vmem:[%s1 + $0xb38] sm:$0xf]
    %v810 = vld [vmem:[%s1 + $0xb3c] sm:$0xf]
    %v811 = vld [vmem:[%s1 + $0xb40] sm:$0xf]
    %v812 = vld [vmem:[%s1 + $0xb44] sm:$0xf]
    %v813 = vld [vmem:[%s1 + $0xb48] sm:$0xf]
    %v814 = vld [vmem:[%s1 + $0xb4c] sm:$0xf]
    %v815 = vld [vmem:[%s1 + $0xb50] sm:$0xf]
    %v816 = vld [vmem:[%s1 + $0xb54] sm:$0xf]
    %v817 = vld [vmem:[%s1 + $0xb58] sm:$0xf]
    %v818 = vld [vmem:[%s1 + $0xb5c] sm:$0xf]
    %v819 = vld [vmem:[%s1 + $0xb60] sm:$0xf]
    %v820 = vld [vmem:[%s1 + $0xb64] sm:$0xf]
    %v821 = vld [vmem:[%s1 + $0xb68] sm:$0xf]
    %v822 = vld [vmem:[%s1 + $0xb6c] sm:$0xf]
    %v823 = vld [vmem:[%s1 + $0xb70] sm:$0xf]
    %v824 = vld [vmem:[%s1 + $0xb74] sm:$0xf]
    %v825 = vld [vmem:[%s1 + $0xb78] sm:$0xf]
    %v826 = vld [vmem:[%s1 + $0xb7c] sm:$0xf]
    %v827 = vld [vmem:[%s1 + $0xb80] sm:$0xf]
    %v828 = vld [vmem:[%s1 + $0xb84] sm:$0xf]
    %v829 = vld [vmem:[%s1 + $0xb88] sm:$0xf]
    %v830 = vld [vmem:[%s1 + $0xb8c] sm:$0xf]
    %v831 = vld [vmem:[%s1 + $0xb90] sm:$0xf]
    %v832 = vld [vmem:[%s1 + $0xb94] sm:$0xf]
    %v833 = vld [vmem:[%s1 + $0xb98] sm:$0xf]
    %v834 = vld [vmem:[%s1 + $0xb9c] sm:$0xf]
    %v835 = vld [vmem:[%s1 + $0xba0] sm:$0xf]
    %v836 = vld [vmem:[%s1 + $0xba4] sm:$0xf]
    %v837 = vld [vmem:[%s1 + $0xba8] sm:$0xf]
    %v838 = vld [vmem:[%s1 + $0xbac] sm:$0xf]
    %v839 = vld [vmem:[%s1 + $0xbb0] sm:$0xf]
    %v840 = vld [vmem:[%s1 + $0xbb4] sm:$0xf]
    %v841 = vld [vmem:[%s1 + $0xbb8] sm:$0xf]
    %v842 = vld [vmem:[%s1 + $0xbbc] sm:$0xf]
    %v843 = vld [vmem:[%s1 + $0xbc0] sm:$0xf]
    %v844 = vld [vmem:[%s1 + $0xbc4] sm:$0xf]
    %v845 = vld [vmem:[%s1 + $0xbc8] sm:$0xf]
    %v846 = vld [vmem:[%s1 + $0xbcc] sm:$0xf]
    %v847 = vld [vmem:[%s1 + $0xbd0] sm:$0xf]
    %v848 = vld [vmem:[%s1 + $0xbd4] sm:$0xf]
    %v849 = vld [vmem:[%s1 + $0xbd8] sm:$0xf]
    %v850 = vld [vmem:[%s1 + $0xbdc] sm:$0xf]
    %v851 = vld [vmem:[%s1 + $0xbe0] sm:$0xf]
    %v852 = vld [vmem:[%s1 + $0xbe4] sm:$0xf]
    %v853 = vld [vmem:[%s1 + $0xbe8] sm:$0xf]
    %v854 = vld [vmem:[%s1 + $0xbec] sm:$0xf]
    %v855 = vld [vmem:[%s1 + $0xbf0] sm:$0xf]
    %v856 = vld [vmem:[%s1 + $0xbf4] sm:$0xf]
    %v857 = vld [vmem:[%s1 + $0xbf8] sm:$0xf]
    %v858 = vld [vmem:[%s1 + $0xbfc] sm:$0xf]
    %v859 = vld [vmem:[%s1 + $0xc00] sm:$0xf]
    %v860 = vld [vmem:[%s1 + $0xc04] sm:$0xf]
    %v861 = vld [vmem:[%s1 + $0xc08] sm:$0xf]
    %v862 = vld [vmem:[%s1 + $0xc0c] sm:$0xf]
    %v863 = vld [vmem:[%s1 + $0xc10] sm:$0xf]
    %v864 = vld [vmem:[%s1 + $0xc14] sm:$0xf]
    %v865 = vld [vmem:[%s1 + $0xc18] sm:$0xf]
    %v866 = vld [vmem:[%s1 + $0xc1c] sm:$0xf]
    %v867 = vld [vmem:[%s1 + $0xc20] sm:$0xf]
    %v868 = vld [vmem:[%s1 + $0xc24] sm:$0xf]
    %v869 = vld [vmem:[%s1 + $0xc28] sm:$0xf]
    %v870 = vld [vmem:[%s1 + $0xc2c] sm:$0xf]
    %v871 = vld [vmem:[%s1 + $0xc30] sm:$0xf]
    %v872 = vld [vmem:[%s1 + $0xc34] sm:$0xf]
    %v873 = vld [vmem:[%s1 + $0xc38] sm:$0xf]
    %v874 = vld [vmem:[%s1 + $0xc3c] sm:$0xf]
    %v875 = vld [vmem:[%s1 + $0xc40] sm:$0xf]
    %v876 = vld [vmem:[%s1 + $0xc44] sm:$0xf]
    %v877 = vld [vmem:[%s1 + $0xc48] sm:$0xf]
    %v878 = vld [vmem:[%s1 + $0xc4c] sm:$0xf]
    %v879 = vld [vmem:[%s1 + $0xc50] sm:$0xf]
    %v880 = vld [vmem:[%s1 + $0xc54] sm:$0xf]
    %v881 = vld [vmem:[%s1 + $0xc58] sm:$0xf]
    %v882 = vld [vmem:[%s1 + $0xc5c] sm:$0xf]
    %v883 = vld [vmem:[%s1 + $0xc60] sm:$0xf]
    %v884 = vld [vmem:[%s1 + $0xc64] sm:$0xf]
    %v885 = vld [vmem:[%s1 + $0xc68] sm:$0xf]
    %v886 = vld [vmem:[%s1 + $0xc6c] sm:$0xf]
    %v887 = vld [vmem:[%s1 + $0xc70] sm:$0xf]
    %v888 = vld [vmem:[%s1 + $0xc74] sm:$0xf]
    %v889 = vld [vmem:[%s1 + $0xc78] sm:$0xf]
    %v890 = vld [vmem:[%s1 + $0xc7c] sm:$0xf]
    %v891 = vld [vmem:[%s1 + $0xc80] sm:$0xf]
    %v892 = vld [vmem:[%s1 + $0xc84] sm:$0xf]
    %v893 = vld [vmem:[%s1 + $0xc88] sm:$0xf]
    %v894 = vld [vmem:[%s1 + $0xc8c] sm:$0xf]
    %v895 = vld [vmem:[%s1 + $0xc90] sm:$0xf]
    %v896 = vld [vmem:[%s1 + $0xc94] sm:$0xf]
    %v897 = vld [vmem:[%s1 + $0xc98] sm:$0xf]
    %v898 = vld [vmem:[%s1 + $0xc9c] sm:$0xf]
    %v899 = vld [vmem:[%s1 + $0xca0] sm:$0xf]
    %v900 = vld [vmem:[%s1 + $0xca4] sm:$0xf]
    %v901 = vld [vmem:[%s1 + $0xca8] sm:$0xf]
    %v902 = vld [vmem:[%s1 + $0xcac] sm:$0xf]
    %v903 = vld [vmem:[%s1 + $0xcb0] sm:$0xf]
    %v904 = vld [vmem:[%s1 + $0xcb4] sm:$0xf]
    %v905 = vld [vmem:[%s1 + $0xcb8] sm:$0xf]
    %v906 = vld [vmem:[%s1 + $0xcbc] sm:$0xf]
    %v907 = vld [vmem:[%s1 + $0xcc0] sm:$0xf]
    %v908 = vld [vmem:[%s1 + $0xcc4] sm:$0xf]
    %v909 = vld [vmem:[%s1 + $0xcc8] sm:$0xf]
    %v910 = vld [vmem:[%s1 + $0xccc] sm:$0xf]
    %v911 = vld [vmem:[%s1 + $0xcd0] sm:$0xf]
    %v912 = vld [vmem:[%s1 + $0xcd4] sm:$0xf]
    %v913 = vld [vmem:[%s1 + $0xcd8] sm:$0xf]
    %v914 = vld [vmem:[%s1 + $0xcdc] sm:$0xf]
    %v915 = vld [vmem:[%s1 + $0xce0] sm:$0xf]
    %v916 = vld [vmem:[%s1 + $0xce4] sm:$0xf]
    %v917 = vld [vmem:[%s1 + $0xce8] sm:$0xf]
    %v918 = vld [vmem:[%s1 + $0xcec] sm:$0xf]
    %v919 = vld [vmem:[%s1 + $0xcf0] sm:$0xf]
    %v920 = vld [vmem:[%s1 + $0xcf4] sm:$0xf]
    %v921 = vld [vmem:[%s1 + $0xcf8] sm:$0xf]
    %v922 = vld [vmem:[%s1 + $0xcfc] sm:$0xf]
    %v923 = vld [vmem:[%s1 + $0xd00] sm:$0xf]
    %v924 = vld [vmem:[%s1 + $0xd04] sm:$0xf]
    %v925 = vld [vmem:[%s1 + $0xd08] sm:$0xf]
    %v926 = vld [vmem:[%s1 + $0xd0c] sm:$0xf]
    %v927 = vld [vmem:[%s1 + $0xd10] sm:$0xf]
    %v928 = vld [vmem:[%s1 + $0xd14] sm:$0xf]
    %v929 = vld [vmem:[%s1 + $0xd18] sm:$0xf]
    %v930 = vld [vmem:[%s1 + $0xd1c] sm:$0xf]
    %v931 = vld [vmem:[%s1 + $0xd20] sm:$0xf]
    %v932 = vld [vmem:[%s1 + $0xd24] sm:$0xf]
    %v933 = vld [vmem:[%s1 + $0xd28] sm:$0xf]
    %v934 = vld [vmem:[%s1 + $0xd2c] sm:$0xf]
    %v935 = vld [vmem:[%s1 + $0xd30] sm:$0xf]
    %v936 = vld [vmem:[%s1 + $0xd34] sm:$0xf]
    %v937 = vld [vmem:[%s1 + $0xd38] sm:$0xf]
    %v938 = vld [vmem:[%s1 + $0xd3c] sm:$0xf]
    %v939 = vld [vmem:[%s1 + $0xd40] sm:$0xf]
    %v940 = vld [vmem:[%s1 + $0xd44] sm:$0xf]
    %v941 = vld [vmem:[%s1 + $0xd48] sm:$0xf]
    %v942 = vld [vmem:[%s1 + $0xd4c] sm:$0xf]
    %v943 = vld [vmem:[%s1 + $0xd50] sm:$0xf]
    %v944 = vld [vmem:[%s1 + $0xd54] sm:$0xf]
    %v945 = vld [vmem:[%s1 + $0xd58] sm:$0xf]
    %v946 = vld [vmem:[%s1 + $0xd5c] sm:$0xf]
    %v947 = vld [vmem:[%s1 + $0xd60] sm:$0xf]
    %v948 = vld [vmem:[%s1 + $0xd64] sm:$0xf]
    %v949 = vld [vmem:[%s1 + $0xd68] sm:$0xf]
    %v950 = vld [vmem:[%s1 + $0xd6c] sm:$0xf]
    %v951 = vld [vmem:[%s1 + $0xd70] sm:$0xf]
    %v952 = vld [vmem:[%s1 + $0xd74] sm:$0xf]
    %v953 = vld [vmem:[%s1 + $0xd78] sm:$0xf]
    %v954 = vld [vmem:[%s1 + $0xd7c] sm:$0xf]
    %v955 = vld [vmem:[%s1 + $0xd80] sm:$0xf]
    %v956 = vld [vmem:[%s1 + $0xd84] sm:$0xf]
    %v957 = vld [vmem:[%s1 + $0xd88] sm:$0xf]
    %v958 = vld [vmem:[%s1 + $0xd8c] sm:$0xf]
    %v959 = vld [vmem:[%s1 + $0xd90] sm:$0xf]
    %v960 = vld [vmem:[%s1 + $0xd94] sm:$0xf]
    %v961 = vld [vmem:[%s1 + $0xd98] sm:$0xf]
    %v962 = vld [vmem:[%s1 + $0xd9c] sm:$0xf]
    %v963 = vld [vmem:[%s1 + $0xda0] sm:$0xf]
    %v964 = vld [vmem:[%s1 + $0xda4] sm:$0xf]
    %v965 = vld [vmem:[%s1 + $0xda8] sm:$0xf]
    %v966 = vld [vmem:[%s1 + $0xdac] sm:$0xf]
    %v967 = vld [vmem:[%s1 + $0xdb0] sm:$0xf]
    %v968 = vld [vmem:[%s1 + $0xdb4] sm:$0xf]
    %v969 = vld [vmem:[%s1 + $0xdb8] sm:$0xf]
    %v970 = vld [vmem:[%s1 + $0xdbc] sm:$0xf]
    %v971 = vld [vmem:[%s1 + $0xdc0] sm:$0xf]
    %v972 = vld [vmem:[%s1 + $0xdc4] sm:$0xf]
    %v973 = vld [vmem:[%s1 + $0xdc8] sm:$0xf]
    %v974 = vld [vmem:[%s1 + $0xdcc] sm:$0xf]
    %v975 = vld [vmem:[%s1 + $0xdd0] sm:$0xf]
    %v976 = vld [vmem:[%s1 + $0xdd4] sm:$0xf]
    %v977 = vld [vmem:[%s1 + $0xdd8] sm:$0xf]
    %v978 = vld [vmem:[%s1 + $0xddc] sm:$0xf]
    %v979 = vld [vmem:[%s1 + $0xde0] sm:$0xf]
    %v980 = vld [vmem:[%s1 + $0xde4] sm:$0xf]
    %v981 = vld [vmem:[%s1 + $0xde8] sm:$0xf]
    %v982 = vld [vmem:[%s1 + $0xdec] sm:$0xf]
    %v983 = vld [vmem:[%s1 + $0xdf0] sm:$0xf]
    %v984 = vld [vmem:[%s1 + $0xdf4] sm:$0xf]
    %v985 = vld [vmem:[%s1 + $0xdf8] sm:$0xf]
    %v986 = vld [vmem:[%s1 + $0xdfc] sm:$0xf]
    %v987 = vld [vmem:[%s1 + $0xe00] sm:$0xf]
    %v988 = vld [vmem:[%s1 + $0xe04] sm:$0xf]
    %v989 = vld [vmem:[%s1 + $0xe08] sm:$0xf]
    %v990 = vld [vmem:[%s1 + $0xe0c] sm:$0xf]
    %v991 = vld [vmem:[%s1 + $0xe10] sm:$0xf]
    %v992 = vld [vmem:[%s1 + $0xe14] sm:$0xf]
    %v993 = vld [vmem:[%s1 + $0xe18] sm:$0xf]
    %v994 = vld [vmem:[%s1 + $0xe1c] sm:$0xf]
    %v995 = vld [vmem:[%s1 + $0xe20] sm:$0xf]
    %v996 = vld [vmem:[%s1 + $0xe24] sm:$0xf]
    %v997 = vld [vmem:[%s1 + $0xe28] sm:$0xf]
    %v998 = vld [vmem:[%s1 + $0xe2c] sm:$0xf]
    %v999 = vld [vmem:[%s1 + $0xe30] sm:$0xf]
    %v1000 = vld [vmem:[%s1 + $0xe34] sm:$0xf]
    %v1001 = vld [vmem:[%s1 + $0xe38] sm:$0xf]
    %v1002 = vld [vmem:[%s1 + $0xe3c] sm:$0xf]
    %v1003 = vld [vmem:[%s1 + $0xe40] sm:$0xf]
    %v1004 = vld [vmem:[%s1 + $0xe44] sm:$0xf]
    %v1005 = vld [vmem:[%s1 + $0xe48] sm:$0xf]
    %v1006 = vld [vmem:[%s1 + $0xe4c] sm:$0xf]
    %v1007 = vld [vmem:[%s1 + $0xe50] sm:$0xf]
    %v1008 = vld [vmem:[%s1 + $0xe54] sm:$0xf]
    %v1009 = vld [vmem:[%s1 + $0xe58] sm:$0xf]
    %v1010 = vld [vmem:[%s1 + $0xe5c] sm:$0xf]
    %v1011 = vld [vmem:[%s1 + $0xe60] sm:$0xf]
    %v1012 = vld [vmem:[%s1 + $0xe64] sm:$0xf]
    %v1013 = vld [vmem:[%s1 + $0xe68] sm:$0xf]
    %v1014 = vld [vmem:[%s1 + $0xe6c] sm:$0xf]
    %v1015 = vld [vmem:[%s1 + $0xe70] sm:$0xf]
    %v1016 = vld [vmem:[%s1 + $0xe74] sm:$0xf]
    %v1017 = vld [vmem:[%s1 + $0xe78] sm:$0xf]
    %v1018 = vld [vmem:[%s1 + $0xe7c] sm:$0xf]
    %v1019 = vld [vmem:[%s1 + $0xe80] sm:$0xf]
    %v1020 = vld [vmem:[%s1 + $0xe84] sm:$0xf]
    %v1021 = vld [vmem:[%s1 + $0xe88] sm:$0xf]
    %v1022 = vld [vmem:[%s1 + $0xe8c] sm:$0xf]
    %v1023 = vld [vmem:[%s1 + $0xe90] sm:$0xf]
    %v1024 = vld [vmem:[%s1 + $0xe94] sm:$0xf]
    %v1025 = vld [vmem:[%s1 + $0xe98] sm:$0xf]
    %v1026 = vld [vmem:[%s1 + $0xe9c] sm:$0xf]
    %v1027 = vld [vmem:[%s1 + $0xea0] sm:$0xf]
    %v1028 = vld [vmem:[%s1 + $0xea4] sm:$0xf]
    %v1029 = vld [vmem:[%s1 + $0xea8] sm:$0xf]
    %v1030 = vld [vmem:[%s1 + $0xeac] sm:$0xf]
    %v1031 = vld [vmem:[%s1 + $0xeb0] sm:$0xf]
    %v1032 = vld [vmem:[%s1 + $0xeb4] sm:$0xf]
    %v1033 = vld [vmem:[%s1 + $0xeb8] sm:$0xf]
    %v1034 = vld [vmem:[%s1 + $0xebc] sm:$0xf]
    %v1035 = vld [vmem:[%s1 + $0xec0] sm:$0xf]
    %v1036 = vld [vmem:[%s1 + $0xec4] sm:$0xf]
    %v1037 = vld [vmem:[%s1 + $0xec8] sm:$0xf]
    %v1038 = vld [vmem:[%s1 + $0xecc] sm:$0xf]
    %v1039 = vld [vmem:[%s1 + $0xed0] sm:$0xf]
    %v1040 = vld [vmem:[%s1 + $0xed4] sm:$0xf]
    %v1041 = vld [vmem:[%s1 + $0xed8] sm:$0xf]
    %v1042 = vld [vmem:[%s1 + $0xedc] sm:$0xf]
    %v1043 = vld [vmem:[%s1 + $0xee0] sm:$0xf]
    %v1044 = vld [vmem:[%s1 + $0xee4] sm:$0xf]
    %v1045 = vld [vmem:[%s1 + $0xee8] sm:$0xf]
    %v1046 = vld [vmem:[%s1 + $0xeec] sm:$0xf]
    %v1047 = vld [vmem:[%s1 + $0xef0] sm:$0xf]
    %v1048 = vld [vmem:[%s1 + $0xef4] sm:$0xf]
    %v1049 = vld [vmem:[%s1 + $0xef8] sm:$0xf]
    %v1050 = vld [vmem:[%s1 + $0xefc] sm:$0xf]
    %v1051 = vld [vmem:[%s1 + $0xf00] sm:$0xf]
    %v1052 = vld [vmem:[%s1 + $0xf04] sm:$0xf]
    %v1053 = vld [vmem:[%s1 + $0xf08] sm:$0xf]
    %v1054 = vld [vmem:[%s1 + $0xf0c] sm:$0xf]
    %v1055 = vld [vmem:[%s1 + $0xf10] sm:$0xf]
    %v1056 = vld [vmem:[%s1 + $0xf14] sm:$0xf]
    %v1057 = vld [vmem:[%s1 + $0xf18] sm:$0xf]
    %v1058 = vld [vmem:[%s1 + $0xf1c] sm:$0xf]
    %v1059 = vld [vmem:[%s1 + $0xf20] sm:$0xf]
    %v1060 = vld [vmem:[%s1 + $0xf24] sm:$0xf]
    %v1061 = vld [vmem:[%s1 + $0xf28] sm:$0xf]
    %v1062 = vld [vmem:[%s1 + $0xf2c] sm:$0xf]
    %v1063 = vld [vmem:[%s1 + $0xf30] sm:$0xf]
    %v1064 = vld [vmem:[%s1 + $0xf34] sm:$0xf]
    %v1065 = vld [vmem:[%s1 + $0xf38] sm:$0xf]
    %v1066 = vld [vmem:[%s1 + $0xf3c] sm:$0xf]
    %v1067 = vld [vmem:[%s1 + $0xf40] sm:$0xf]
    %v1068 = vld [vmem:[%s1 + $0xf44] sm:$0xf]
    %v1069 = vld [vmem:[%s1 + $0xf48] sm:$0xf]
    %v1070 = vld [vmem:[%s1 + $0xf4c] sm:$0xf]
    %v1071 = vld [vmem:[%s1 + $0xf50] sm:$0xf]
    %v1072 = vld [vmem:[%s1 + $0xf54] sm:$0xf]
    %v1073 = vld [vmem:[%s1 + $0xf58] sm:$0xf]
    %v1074 = vld [vmem:[%s1 + $0xf5c] sm:$0xf]
    %v1075 = vld [vmem:[%s1 + $0xf60] sm:$0xf]
    %v1076 = vld [vmem:[%s1 + $0xf64] sm:$0xf]
    %v1077 = vld [vmem:[%s1 + $0xf68] sm:$0xf]
    %v1078 = vld [vmem:[%s1 + $0xf6c] sm:$0xf]
    %v1079 = vld [vmem:[%s1 + $0xf70] sm:$0xf]
    %v1080 = vld [vmem:[%s1 + $0xf74] sm:$0xf]
    %v1081 = vld [vmem:[%s1 + $0xf78] sm:$0xf]
    %v1082 = vld [vmem:[%s1 + $0xf7c] sm:$0xf]
    %v1083 = vld [vmem:[%s1 + $0xf80] sm:$0xf]
    %v1084 = vld [vmem:[%s1 + $0xf84] sm:$0xf]
    %v1085 = vld [vmem:[%s1 + $0xf88] sm:$0xf]
    %v1086 = vld [vmem:[%s1 + $0xf8c] sm:$0xf]
    %v1087 = vld [vmem:[%s1 + $0xf90] sm:$0xf]
    %v1088 = vld [vmem:[%s1 + $0xf94] sm:$0xf]
    %v1089 = vld [vmem:[%s1 + $0xf98] sm:$0xf]
    %v1090 = vld [vmem:[%s1 + $0xf9c] sm:$0xf]
    %v1091 = vld [vmem:[%s1 + $0xfa0] sm:$0xf]
    %v1092 = vld [vmem:[%s1 + $0xfa4] sm:$0xf]
    %v1093 = vld [vmem:[%s1 + $0xfa8] sm:$0xf]
    %v1094 = vld [vmem:[%s1 + $0xfac] sm:$0xf]
    %v1095 = vld [vmem:[%s1 + $0xfb0] sm:$0xf]
    %v1096 = vld [vmem:[%s1 + $0xfb4] sm:$0xf]
    %v1097 = vld [vmem:[%s1 + $0xfb8] sm:$0xf]
    %v1098 = vld [vmem:[%s1 + $0xfbc] sm:$0xf]
    %v1099 = vld [vmem:[%s1 + $0xfc0] sm:$0xf]
    %v1100 = vld [vmem:[%s1 + $0xfc4] sm:$0xf]
    %v1101 = vld [vmem:[%s1 + $0xfc8] sm:$0xf]
    %v1102 = vld [vmem:[%s1 + $0xfcc] sm:$0xf]
    %v1103 = vld [vmem:[%s1 + $0xfd0] sm:$0xf]
    %v1104 = vld [vmem:[%s1 + $0xfd4] sm:$0xf]
    %v1105 = vld [vmem:[%s1 + $0xfd8] sm:$0xf]
    %v1106 = vld [vmem:[%s1 + $0xfdc] sm:$0xf]
    %v1107 = vld [vmem:[%s1 + $0xfe0] sm:$0xf]
    %v1108 = vld [vmem:[%s1 + $0xfe4] sm:$0xf]
    %v1109 = vld [vmem:[%s1 + $0xfe8] sm:$0xf]
    %v1110 = vld [vmem:[%s1 + $0xfec] sm:$0xf]
    %v1111 = vld [vmem:[%s1 + $0xff0] sm:$0xf]
    %v1112 = vld [vmem:[%s1 + $0xff4] sm:$0xf]
    %v1113 = vld [vmem:[%s1 + $0xff8] sm:$0xf]
    %v1114 = vld [vmem:[%s1 + $0xffc] sm:$0xf]
    %v1115 = vld [vmem:[%s1 + $0x1000] sm:$0xf]
    %v1116 = vld [vmem:[%s1 + $0x1004] sm:$0xf]
    %v1117 = vld [vmem:[%s1 + $0x1008] sm:$0xf]
    %v1118 = vld [vmem:[%s1 + $0x100c] sm:$0xf]
    %v1119 = vld [vmem:[%s1 + $0x1010] sm:$0xf]
    %v1120 = vld [vmem:[%s1 + $0x1014] sm:$0xf]
    %v1121 = vld [vmem:[%s1 + $0x1018] sm:$0xf]
    %v1122 = vld [vmem:[%s1 + $0x101c] sm:$0xf]
    %v1123 = vld [vmem:[%s1 + $0x1020] sm:$0xf]
    %v1124 = vld [vmem:[%s1 + $0x1024] sm:$0xf]
    %v1125 = vld [vmem:[%s1 + $0x1028] sm:$0xf]
    %v1126 = vld [vmem:[%s1 + $0x102c] sm:$0xf]
    %v1127 = vld [vmem:[%s1 + $0x1030] sm:$0xf]
    %v1128 = vld [vmem:[%s1 + $0x1034] sm:$0xf]
    %v1129 = vld [vmem:[%s1 + $0x1038] sm:$0xf]
    %v1130 = vld [vmem:[%s1 + $0x103c] sm:$0xf]
    %v1131 = vld [vmem:[%s1 + $0x1040] sm:$0xf]
    %v1132 = vld [vmem:[%s1 + $0x1044] sm:$0xf]
    %v1133 = vld [vmem:[%s1 + $0x1048] sm:$0xf]
    %v1134 = vld [vmem:[%s1 + $0x104c] sm:$0xf]
    %v1135 = vld [vmem:[%s1 + $0x1050] sm:$0xf]
    %v1136 = vld [vmem:[%s1 + $0x1054] sm:$0xf]
    %v1137 = vld [vmem:[%s1 + $0x1058] sm:$0xf]
    %v1138 = vld [vmem:[%s1 + $0x105c] sm:$0xf]
    %v1139 = vld [vmem:[%s1 + $0x1060] sm:$0xf]
    %v1140 = vld [vmem:[%s1 + $0x1064] sm:$0xf]
    %v1141 = vld [vmem:[%s1 + $0x1068] sm:$0xf]
    %v1142 = vld [vmem:[%s1 + $0x106c] sm:$0xf]
    %v1143 = vld [vmem:[%s1 + $0x1070] sm:$0xf]
    %v1144 = vld [vmem:[%s1 + $0x1074] sm:$0xf]
    %v1145 = vld [vmem:[%s1 + $0x1078] sm:$0xf]
    %v1146 = vld [vmem:[%s1 + $0x107c] sm:$0xf]
    %v1147 = vld [vmem:[%s1 + $0x1080] sm:$0xf]
    %v1148 = vld [vmem:[%s1 + $0x1084] sm:$0xf]
    %v1149 = vld [vmem:[%s1 + $0x1088] sm:$0xf]
    %v1150 = vld [vmem:[%s1 + $0x108c] sm:$0xf]
    %v1151 = vld [vmem:[%s1 + $0x1090] sm:$0xf]
    %v1152 = vld [vmem:[%s1 + $0x1094] sm:$0xf]
    %v1153 = vld [vmem:[%s1 + $0x1098] sm:$0xf]
    %v1154 = vld [vmem:[%s1 + $0x109c] sm:$0xf]
    %v1155 = vld [vmem:[%s1 + $0x10a0] sm:$0xf]
    %v1156 = vld [vmem:[%s1 + $0x10a4] sm:$0xf]
    %v1157 = vld [vmem:[%s1 + $0x10a8] sm:$0xf]
    %v1158 = vld [vmem:[%s1 + $0x10ac] sm:$0xf]
    %v1159 = vld [vmem:[%s1 + $0x10b0] sm:$0xf]
    %v1160 = vld [vmem:[%s1 + $0x10b4] sm:$0xf]
    %v1161 = vld [vmem:[%s1 + $0x10b8] sm:$0xf]
    %v1162 = vld [vmem:[%s1 + $0x10bc] sm:$0xf]
    %v1163 = vld [vmem:[%s1 + $0x10c0] sm:$0xf]
    %v1164 = vld [vmem:[%s1 + $0x10c4] sm:$0xf]
    %v1165 = vld [vmem:[%s1 + $0x10c8] sm:$0xf]
    %v1166 = vld [vmem:[%s1 + $0x10cc] sm:$0xf]
    %v1167 = vld [vmem:[%s1 + $0x10d0] sm:$0xf]
    %v1168 = vld [vmem:[%s1 + $0x10d4] sm:$0xf]
    %v1169 = vld [vmem:[%s1 + $0x10d8] sm:$0xf]
    %v1170 = vld [vmem:[%s1 + $0x10dc] sm:$0xf]
    %v1171 = vld [vmem:[%s1 + $0x10e0] sm:$0xf]
    %v1172 = vld [vmem:[%s1 + $0x10e4] sm:$0xf]
    %v1173 = vld [vmem:[%s1 + $0x10e8] sm:$0xf]
    %v1174 = vld [vmem:[%s1 + $0x10ec] sm:$0xf]
    %v1175 = vld [vmem:[%s1 + $0x10f0] sm:$0xf]
    %v1176 = vld [vmem:[%s1 + $0x10f4] sm:$0xf]
    %v1177 = vld [vmem:[%s1 + $0x10f8] sm:$0xf]
    %v1178 = vld [vmem:[%s1 + $0x10fc] sm:$0xf]
    %v1179 = vld [vmem:[%s1 + $0x1100] sm:$0xf]
    %v1180 = vld [vmem:[%s1 + $0x1104] sm:$0xf]
    %v1181 = vld [vmem:[%s1 + $0x1108] sm:$0xf]
    %v1182 = vld [vmem:[%s1 + $0x110c] sm:$0xf]
    %v1183 = vld [vmem:[%s1 + $0x1110] sm:$0xf]
    %v1184 = vld [vmem:[%s1 + $0x1114] sm:$0xf]
    %v1185 = vld [vmem:[%s1 + $0x1118] sm:$0xf]
    %v1186 = vld [vmem:[%s1 + $0x111c] sm:$0xf]
    %v1187 = vld [vmem:[%s1 + $0x1120] sm:$0xf]
    %v1188 = vld [vmem:[%s1 + $0x1124] sm:$0xf]
    %v1189 = vld [vmem:[%s1 + $0x1128] sm:$0xf]
    %v1190 = vld [vmem:[%s1 + $0x112c] sm:$0xf]
    %v1191 = vld [vmem:[%s1 + $0x1130] sm:$0xf]
    %v1192 = vld [vmem:[%s1 + $0x1134] sm:$0xf]
    %v1193 = vld [vmem:[%s1 + $0x1138] sm:$0xf]
    %v1194 = vld [vmem:[%s1 + $0x113c] sm:$0xf]
    %v1195 = vld [vmem:[%s1 + $0x1140] sm:$0xf]
    %v1196 = vld [vmem:[%s1 + $0x1144] sm:$0xf]
    %v1197 = vld [vmem:[%s1 + $0x1148] sm:$0xf]
    %v1198 = vld [vmem:[%s1 + $0x114c] sm:$0xf]
    %v1199 = vld [vmem:[%s1 + $0x1150] sm:$0xf]
    %v1200 = vld [vmem:[%s1 + $0x1154] sm:$0xf]
    %v1201 = vld [vmem:[%s1 + $0x1158] sm:$0xf]
    %v1202 = vld [vmem:[%s1 + $0x115c] sm:$0xf]
    %v1203 = vld [vmem:[%s1 + $0x1160] sm:$0xf]
    %v1204 = vld [vmem:[%s1 + $0x1164] sm:$0xf]
    %v1205 = vld [vmem:[%s1 + $0x1168] sm:$0xf]
    %v1206 = vld [vmem:[%s1 + $0x116c] sm:$0xf]
    %v1207 = vld [vmem:[%s1 + $0x1170] sm:$0xf]
    %v1208 = vld [vmem:[%s1 + $0x1174] sm:$0xf]
    %v1209 = vld [vmem:[%s1 + $0x1178] sm:$0xf]
    %v1210 = vld [vmem:[%s1 + $0x117c] sm:$0xf]
    %v1211 = vld [vmem:[%s1 + $0x1180] sm:$0xf]
    %v1212 = vld [vmem:[%s1 + $0x1184] sm:$0xf]
    %v1213 = vld [vmem:[%s1 + $0x1188] sm:$0xf]
    %v1214 = vld [vmem:[%s1 + $0x118c] sm:$0xf]
    %v1215 = vld [vmem:[%s1 + $0x1190] sm:$0xf]
    %v1216 = vld [vmem:[%s1 + $0x1194] sm:$0xf]
    %v1217 = vld [vmem:[%s1 + $0x1198] sm:$0xf]
    %v1218 = vld [vmem:[%s1 + $0x119c] sm:$0xf]
    %v1219 = vld [vmem:[%s1 + $0x11a0] sm:$0xf]
    %v1220 = vld [vmem:[%s1 + $0x11a4] sm:$0xf]
    %v1221 = vld [vmem:[%s1 + $0x11a8] sm:$0xf]
    %v1222 = vld [vmem:[%s1 + $0x11ac] sm:$0xf]
    %v1223 = vld [vmem:[%s1 + $0x11b0] sm:$0xf]
    %v1224 = vld [vmem:[%s1 + $0x11b4] sm:$0xf]
    %v1225 = vld [vmem:[%s1 + $0x11b8] sm:$0xf]
    %v1226 = vld [vmem:[%s1 + $0x11bc] sm:$0xf]
    %v1227 = vld [vmem:[%s1 + $0x11c0] sm:$0xf]
    %v1228 = vld [vmem:[%s1 + $0x11c4] sm:$0xf]
    %v1229 = vld [vmem:[%s1 + $0x11c8] sm:$0xf]
    %v1230 = vld [vmem:[%s1 + $0x11cc] sm:$0xf]
    %v1231 = vld [vmem:[%s1 + $0x11d0] sm:$0xf]
    %v1232 = vld [vmem:[%s1 + $0x11d4] sm:$0xf]
    %v1233 = vld [vmem:[%s1 + $0x11d8] sm:$0xf]
    %v1234 = vld [vmem:[%s1 + $0x11dc] sm:$0xf]
    %v1235 = vld [vmem:[%s1 + $0x11e0] sm:$0xf]
    %v1236 = vld [vmem:[%s1 + $0x11e4] sm:$0xf]
    %v1237 = vld [vmem:[%s1 + $0x11e8] sm:$0xf]
    %v1238 = vld [vmem:[%s1 + $0x11ec] sm:$0xf]
    %v1239 = vld [vmem:[%s1 + $0x11f0] sm:$0xf]
    %v1240 = vld [vmem:[%s1 + $0x11f4] sm:$0xf]
    %v1241 = vld [vmem:[%s1 + $0x11f8] sm:$0xf]
    %v1242 = vld [vmem:[%s1 + $0x11fc] sm:$0xf]
    %v1243 = vld [vmem:[%s1 + $0x1200] sm:$0xf]
    %v1244 = vld [vmem:[%s1 + $0x1204] sm:$0xf]
    %v1245 = vld [vmem:[%s1 + $0x1208] sm:$0xf]
    %v1246 = vld [vmem:[%s1 + $0x120c] sm:$0xf]
    %v1247 = vld [vmem:[%s1 + $0x1210] sm:$0xf]
    %v1248 = vld [vmem:[%s1 + $0x1214] sm:$0xf]
    %v1249 = vld [vmem:[%s1 + $0x1218] sm:$0xf]
    %v1250 = vld [vmem:[%s1 + $0x121c] sm:$0xf]
    %v1251 = vld [vmem:[%s1 + $0x1220] sm:$0xf]
    %v1252 = vld [vmem:[%s1 + $0x1224] sm:$0xf]
    %v1253 = vld [vmem:[%s1 + $0x1228] sm:$0xf]
    %v1254 = vld [vmem:[%s1 + $0x122c] sm:$0xf]
    %v1255 = vld [vmem:[%s1 + $0x1230] sm:$0xf]
    %v1256 = vld [vmem:[%s1 + $0x1234] sm:$0xf]
    %v1257 = vld [vmem:[%s1 + $0x1238] sm:$0xf]
    %v1258 = vld [vmem:[%s1 + $0x123c] sm:$0xf]
    %v1259 = vld [vmem:[%s1 + $0x1240] sm:$0xf]
    %v1260 = vld [vmem:[%s1 + $0x1244] sm:$0xf]
    %v1261 = vld [vmem:[%s1 + $0x1248] sm:$0xf]
    %v1262 = vld [vmem:[%s1 + $0x124c] sm:$0xf]
    %v1263 = vld [vmem:[%s1 + $0x1250] sm:$0xf]
    %v1264 = vld [vmem:[%s1 + $0x1254] sm:$0xf]
    %v1265 = vld [vmem:[%s1 + $0x1258] sm:$0xf]
    %v1266 = vld [vmem:[%s1 + $0x125c] sm:$0xf]
    %v1267 = vld [vmem:[%s1 + $0x1260] sm:$0xf]
    %v1268 = vld [vmem:[%s1 + $0x1264] sm:$0xf]
    %v1269 = vld [vmem:[%s1 + $0x1268] sm:$0xf]
    %v1270 = vld [vmem:[%s1 + $0x126c] sm:$0xf]
    %v1271 = vld [vmem:[%s1 + $0x1270] sm:$0xf]
    %v1272 = vld [vmem:[%s1 + $0x1274] sm:$0xf]
    %v1273 = vld [vmem:[%s1 + $0x1278] sm:$0xf]
    %v1274 = vld [vmem:[%s1 + $0x127c] sm:$0xf]
    %v1275 = vld [vmem:[%s1 + $0x1280] sm:$0xf]
    %v1276 = vld [vmem:[%s1 + $0x1284] sm:$0xf]
    %v1277 = vld [vmem:[%s1 + $0x1288] sm:$0xf]
    %v1278 = vld [vmem:[%s1 + $0x128c] sm:$0xf]
    %v1279 = vld [vmem:[%s1 + $0x1290] sm:$0xf]
    %v1280 = vld [vmem:[%s1 + $0x1294] sm:$0xf]
    %v1281 = vld [vmem:[%s1 + $0x1298] sm:$0xf]
    %v1282 = vld [vmem:[%s1 + $0x129c] sm:$0xf]
    %v1283 = vld [vmem:[%s1 + $0x12a0] sm:$0xf]
    %v1284 = vld [vmem:[%s1 + $0x12a4] sm:$0xf]
    %v1285 = vld [vmem:[%s1 + $0x12a8] sm:$0xf]
    %v1286 = vld [vmem:[%s1 + $0x12ac] sm:$0xf]
    %v1287 = vld [vmem:[%s1 + $0x12b0] sm:$0xf]
    %v1288 = vld [vmem:[%s1 + $0x12b4] sm:$0xf]
    %v1289 = vld [vmem:[%s1 + $0x12b8] sm:$0xf]
    %v1290 = vld [vmem:[%s1 + $0x12bc] sm:$0xf]
    %v1291 = vld [vmem:[%s1 + $0x12c0] sm:$0xf]
    %v1292 = vld [vmem:[%s1 + $0x12c4] sm:$0xf]
    %v1293 = vld [vmem:[%s1 + $0x12c8] sm:$0xf]
    %v1294 = vld [vmem:[%s1 + $0x12cc] sm:$0xf]
    %v1295 = vld [vmem:[%s1 + $0x12d0] sm:$0xf]
    %v1296 = vld [vmem:[%s1 + $0x12d4] sm:$0xf]
    %v1297 = vld [vmem:[%s1 + $0x12d8] sm:$0xf]
    %v1298 = vld [vmem:[%s1 + $0x12dc] sm:$0xf]
    %v1299 = vld [vmem:[%s1 + $0x12e0] sm:$0xf]
    %v1300 = vld [vmem:[%s1 + $0x12e4] sm:$0xf]
    %v1301 = vld [vmem:[%s1 + $0x12e8] sm:$0xf]
    %v1302 = vld [vmem:[%s1 + $0x12ec] sm:$0xf]
    %v1303 = vld [vmem:[%s1 + $0x12f0] sm:$0xf]
    %v1304 = vld [vmem:[%s1 + $0x12f4] sm:$0xf]
    %v1305 = vld [vmem:[%s1 + $0x12f8] sm:$0xf]
    %v1306 = vld [vmem:[%s1 + $0x12fc] sm:$0xf]
    %v1307 = vunpack.c.l.bf16 %v91
    %v1308 = vunpack.c.l.bf16 %v92
    %v1309 = vunpack.c.l.bf16 %v93
    %v1310 = vunpack.c.l.bf16 %v94
    %v1311 = vunpack.c.l.bf16 %v95
    %v1312 = vunpack.c.l.bf16 %v96
    %v1313 = vunpack.c.l.bf16 %v97
    %v1314 = vunpack.c.l.bf16 %v98
    %v1315 = vunpack.c.l.bf16 %v99
    %v1316 = vunpack.c.l.bf16 %v100
    %v1317 = vunpack.c.l.bf16 %v101
    %v1318 = vunpack.c.l.bf16 %v102
    %v1319 = vunpack.c.l.bf16 %v103
    %v1320 = vunpack.c.l.bf16 %v104
    %v1321 = vunpack.c.l.bf16 %v105
    %v1322 = vunpack.c.l.bf16 %v106
    %v1323 = vunpack.c.l.bf16 %v107
    %v1324 = vunpack.c.l.bf16 %v108
    %v1325 = vunpack.c.l.bf16 %v109
    %v1326 = vunpack.c.l.bf16 %v110
    %v1327 = vunpack.c.l.bf16 %v111
    %v1328 = vunpack.c.l.bf16 %v112
    %v1329 = vunpack.c.l.bf16 %v113
    %v1330 = vunpack.c.l.bf16 %v114
    %v1331 = vunpack.c.l.bf16 %v115
    %v1332 = vunpack.c.l.bf16 %v116
    %v1333 = vunpack.c.l.bf16 %v117
    %v1334 = vunpack.c.l.bf16 %v118
    %v1335 = vunpack.c.l.bf16 %v119
    %v1336 = vunpack.c.l.bf16 %v120
    %v1337 = vunpack.c.l.bf16 %v121
    %v1338 = vunpack.c.l.bf16 %v122
    %v1339 = vunpack.c.l.bf16 %v123
    %v1340 = vunpack.c.l.bf16 %v124
    %v1341 = vunpack.c.l.bf16 %v125
    %v1342 = vunpack.c.l.bf16 %v126
    %v1343 = vunpack.c.l.bf16 %v127
    %v1344 = vunpack.c.l.bf16 %v128
    %v1345 = vunpack.c.l.bf16 %v129
    %v1346 = vunpack.c.l.bf16 %v130
    %v1347 = vunpack.c.l.bf16 %v131
    %v1348 = vunpack.c.l.bf16 %v132
    %v1349 = vunpack.c.l.bf16 %v133
    %v1350 = vunpack.c.l.bf16 %v134
    %v1351 = vunpack.c.l.bf16 %v135
    %v1352 = vunpack.c.l.bf16 %v136
    %v1353 = vunpack.c.l.bf16 %v137
    %v1354 = vunpack.c.l.bf16 %v138
    %v1355 = vunpack.c.l.bf16 %v139
    %v1356 = vunpack.c.l.bf16 %v140
    %v1357 = vunpack.c.l.bf16 %v141
    %v1358 = vunpack.c.l.bf16 %v142
    %v1359 = vunpack.c.l.bf16 %v143
    %v1360 = vunpack.c.l.bf16 %v144
    %v1361 = vunpack.c.l.bf16 %v145
    %v1362 = vunpack.c.l.bf16 %v146
    %v1363 = vunpack.c.l.bf16 %v147
    %v1364 = vunpack.c.l.bf16 %v148
    %v1365 = vunpack.c.l.bf16 %v149
    %v1366 = vunpack.c.l.bf16 %v150
    %v1367 = vunpack.c.l.bf16 %v151
    %v1368 = vunpack.c.l.bf16 %v152
    %v1369 = vunpack.c.l.bf16 %v153
    %v1370 = vunpack.c.l.bf16 %v154
    %v1371 = vunpack.c.l.bf16 %v155
    %v1372 = vunpack.c.l.bf16 %v156
    %v1373 = vunpack.c.l.bf16 %v157
    %v1374 = vunpack.c.l.bf16 %v158
    %v1375 = vunpack.c.l.bf16 %v159
    %v1376 = vunpack.c.l.bf16 %v160
    %v1377 = vunpack.c.l.bf16 %v161
    %v1378 = vunpack.c.l.bf16 %v162
    %v1379 = vunpack.c.l.bf16 %v163
    %v1380 = vunpack.c.l.bf16 %v164
    %v1381 = vunpack.c.l.bf16 %v165
    %v1382 = vunpack.c.l.bf16 %v166
    %v1383 = vunpack.c.l.bf16 %v167
    %v1384 = vunpack.c.l.bf16 %v168
    %v1385 = vunpack.c.l.bf16 %v169
    %v1386 = vunpack.c.l.bf16 %v170
    %v1387 = vunpack.c.l.bf16 %v171
    %v1388 = vunpack.c.l.bf16 %v172
    %v1389 = vunpack.c.l.bf16 %v173
    %v1390 = vunpack.c.l.bf16 %v174
    %v1391 = vunpack.c.l.bf16 %v175
    %v1392 = vunpack.c.l.bf16 %v176
    %v1393 = vunpack.c.l.bf16 %v177
    %v1394 = vunpack.c.l.bf16 %v178
    %v1395 = vunpack.c.l.bf16 %v179
    %v1396 = vunpack.c.l.bf16 %v180
    %v1397 = vunpack.c.l.bf16 %v181
    %v1398 = vunpack.c.l.bf16 %v182
    %v1399 = vunpack.c.l.bf16 %v183
    %v1400 = vunpack.c.l.bf16 %v184
    %v1401 = vunpack.c.l.bf16 %v185
    %v1402 = vunpack.c.l.bf16 %v186
    %v1403 = vunpack.c.l.bf16 %v187
    %v1404 = vunpack.c.l.bf16 %v188
    %v1405 = vunpack.c.l.bf16 %v189
    %v1406 = vunpack.c.l.bf16 %v190
    %v1407 = vunpack.c.l.bf16 %v191
    %v1408 = vunpack.c.l.bf16 %v192
    %v1409 = vunpack.c.l.bf16 %v193
    %v1410 = vunpack.c.l.bf16 %v194
    %v1411 = vunpack.c.l.bf16 %v195
    %v1412 = vunpack.c.l.bf16 %v196
    %v1413 = vunpack.c.l.bf16 %v197
    %v1414 = vunpack.c.l.bf16 %v198
    %v1415 = vunpack.c.l.bf16 %v199
    %v1416 = vunpack.c.l.bf16 %v200
    %v1417 = vunpack.c.l.bf16 %v201
    %v1418 = vunpack.c.l.bf16 %v202
    %v1419 = vunpack.c.l.bf16 %v203
    %v1420 = vunpack.c.l.bf16 %v204
    %v1421 = vunpack.c.l.bf16 %v205
    %v1422 = vunpack.c.l.bf16 %v206
    %v1423 = vunpack.c.l.bf16 %v207
    %v1424 = vunpack.c.l.bf16 %v208
    %v1425 = vunpack.c.l.bf16 %v209
    %v1426 = vunpack.c.l.bf16 %v210
    %v1427 = vunpack.c.l.bf16 %v211
    %v1428 = vunpack.c.l.bf16 %v212
    %v1429 = vunpack.c.l.bf16 %v213
    %v1430 = vunpack.c.l.bf16 %v214
    %v1431 = vunpack.c.l.bf16 %v215
    %v1432 = vunpack.c.l.bf16 %v216
    %v1433 = vunpack.c.l.bf16 %v217
    %v1434 = vunpack.c.l.bf16 %v218
    %v1435 = vunpack.c.l.bf16 %v219
    %v1436 = vunpack.c.l.bf16 %v220
    %v1437 = vunpack.c.l.bf16 %v221
    %v1438 = vunpack.c.l.bf16 %v222
    %v1439 = vunpack.c.l.bf16 %v223
    %v1440 = vunpack.c.l.bf16 %v224
    %v1441 = vunpack.c.l.bf16 %v225
    %v1442 = vunpack.c.l.bf16 %v226
    %v1443 = vunpack.c.l.bf16 %v227
    %v1444 = vunpack.c.l.bf16 %v228
    %v1445 = vunpack.c.l.bf16 %v229
    %v1446 = vunpack.c.l.bf16 %v230
    %v1447 = vunpack.c.l.bf16 %v231
    %v1448 = vunpack.c.l.bf16 %v232
    %v1449 = vunpack.c.l.bf16 %v233
    %v1450 = vunpack.c.l.bf16 %v234
    %v1451 = vunpack.c.l.bf16 %v235
    %v1452 = vunpack.c.l.bf16 %v236
    %v1453 = vunpack.c.l.bf16 %v237
    %v1454 = vunpack.c.l.bf16 %v238
    %v1455 = vunpack.c.l.bf16 %v239
    %v1456 = vunpack.c.l.bf16 %v240
    %v1457 = vunpack.c.l.bf16 %v241
    %v1458 = vunpack.c.l.bf16 %v242
    %v1459 = vunpack.c.l.bf16 %v243
    %v1460 = vunpack.c.l.bf16 %v244
    %v1461 = vunpack.c.l.bf16 %v245
    %v1462 = vunpack.c.l.bf16 %v246
    %v1463 = vunpack.c.l.bf16 %v247
    %v1464 = vunpack.c.l.bf16 %v248
    %v1465 = vunpack.c.l.bf16 %v249
    %v1466 = vunpack.c.l.bf16 %v250
    %v1467 = vunpack.c.l.bf16 %v251
    %v1468 = vunpack.c.l.bf16 %v252
    %v1469 = vunpack.c.l.bf16 %v253
    %v1470 = vunpack.c.l.bf16 %v254
    %v1471 = vunpack.c.l.bf16 %v255
    %v1472 = vunpack.c.l.bf16 %v256
    %v1473 = vunpack.c.l.bf16 %v257
    %v1474 = vunpack.c.l.bf16 %v258
    %v1475 = vunpack.c.l.bf16 %v259
    %v1476 = vunpack.c.l.bf16 %v260
    %v1477 = vunpack.c.l.bf16 %v261
    %v1478 = vunpack.c.l.bf16 %v262
    %v1479 = vunpack.c.l.bf16 %v263
    %v1480 = vunpack.c.l.bf16 %v264
    %v1481 = vunpack.c.l.bf16 %v265
    %v1482 = vunpack.c.l.bf16 %v266
    %v1483 = vunpack.c.l.bf16 %v267
    %v1484 = vunpack.c.l.bf16 %v268
    %v1485 = vunpack.c.l.bf16 %v269
    %v1486 = vunpack.c.l.bf16 %v270
    %v1487 = vunpack.c.l.bf16 %v271
    %v1488 = vunpack.c.l.bf16 %v272
    %v1489 = vunpack.c.l.bf16 %v273
    %v1490 = vunpack.c.l.bf16 %v274
    %v1491 = vunpack.c.l.bf16 %v275
    %v1492 = vunpack.c.l.bf16 %v276
    %v1493 = vunpack.c.l.bf16 %v277
    %v1494 = vunpack.c.l.bf16 %v278
    %v1495 = vunpack.c.l.bf16 %v279
    %v1496 = vunpack.c.l.bf16 %v280
    %v1497 = vunpack.c.l.bf16 %v281
    %v1498 = vunpack.c.l.bf16 %v282
    %v1499 = vunpack.c.l.bf16 %v283
    %v1500 = vunpack.c.l.bf16 %v284
    %v1501 = vunpack.c.l.bf16 %v285
    %v1502 = vunpack.c.l.bf16 %v286
    %v1503 = vunpack.c.l.bf16 %v287
    %v1504 = vunpack.c.l.bf16 %v288
    %v1505 = vunpack.c.l.bf16 %v289
    %v1506 = vunpack.c.l.bf16 %v290
    %v1507 = vunpack.c.l.bf16 %v291
    %v1508 = vunpack.c.l.bf16 %v292
    %v1509 = vunpack.c.l.bf16 %v293
    %v1510 = vunpack.c.l.bf16 %v294
    %v1511 = vunpack.c.l.bf16 %v295
    %v1512 = vunpack.c.l.bf16 %v296
    %v1513 = vunpack.c.l.bf16 %v297
    %v1514 = vunpack.c.l.bf16 %v298
    %v1515 = vunpack.c.l.bf16 %v299
    %v1516 = vunpack.c.l.bf16 %v300
    %v1517 = vunpack.c.l.bf16 %v301
    %v1518 = vunpack.c.l.bf16 %v302
    %v1519 = vunpack.c.l.bf16 %v303
    %v1520 = vunpack.c.l.bf16 %v304
    %v1521 = vunpack.c.l.bf16 %v305
    %v1522 = vunpack.c.l.bf16 %v306
    %v1523 = vunpack.c.l.bf16 %v307
    %v1524 = vunpack.c.l.bf16 %v308
    %v1525 = vunpack.c.l.bf16 %v309
    %v1526 = vunpack.c.l.bf16 %v310
    %v1527 = vunpack.c.l.bf16 %v311
    %v1528 = vunpack.c.l.bf16 %v312
    %v1529 = vunpack.c.l.bf16 %v313
    %v1530 = vunpack.c.l.bf16 %v314
    %v1531 = vunpack.c.l.bf16 %v315
    %v1532 = vunpack.c.l.bf16 %v316
    %v1533 = vunpack.c.l.bf16 %v317
    %v1534 = vunpack.c.l.bf16 %v318
    %v1535 = vunpack.c.l.bf16 %v319
    %v1536 = vunpack.c.l.bf16 %v320
    %v1537 = vunpack.c.l.bf16 %v321
    %v1538 = vunpack.c.l.bf16 %v322
    %v1539 = vunpack.c.l.bf16 %v323
    %v1540 = vunpack.c.l.bf16 %v324
    %v1541 = vunpack.c.l.bf16 %v325
    %v1542 = vunpack.c.l.bf16 %v326
    %v1543 = vunpack.c.l.bf16 %v327
    %v1544 = vunpack.c.l.bf16 %v328
    %v1545 = vunpack.c.l.bf16 %v329
    %v1546 = vunpack.c.l.bf16 %v330
    %v1547 = vunpack.c.l.bf16 %v331
    %v1548 = vunpack.c.l.bf16 %v332
    %v1549 = vunpack.c.l.bf16 %v333
    %v1550 = vunpack.c.l.bf16 %v334
    %v1551 = vunpack.c.l.bf16 %v335
    %v1552 = vunpack.c.l.bf16 %v336
    %v1553 = vunpack.c.l.bf16 %v337
    %v1554 = vunpack.c.l.bf16 %v338
    %v1555 = vunpack.c.l.bf16 %v339
    %v1556 = vunpack.c.l.bf16 %v340
    %v1557 = vunpack.c.l.bf16 %v341
    %v1558 = vunpack.c.l.bf16 %v342
    %v1559 = vunpack.c.l.bf16 %v343
    %v1560 = vunpack.c.l.bf16 %v344
    %v1561 = vunpack.c.l.bf16 %v345
    %v1562 = vunpack.c.l.bf16 %v346
    %v1563 = vunpack.c.l.bf16 %v347
    %v1564 = vunpack.c.l.bf16 %v348
    %v1565 = vunpack.c.l.bf16 %v349
    %v1566 = vunpack.c.l.bf16 %v350
    %v1567 = vunpack.c.l.bf16 %v351
    %v1568 = vunpack.c.l.bf16 %v352
    %v1569 = vunpack.c.l.bf16 %v353
    %v1570 = vunpack.c.l.bf16 %v354
    %v1571 = vunpack.c.l.bf16 %v355
    %v1572 = vunpack.c.l.bf16 %v356
    %v1573 = vunpack.c.l.bf16 %v357
    %v1574 = vunpack.c.l.bf16 %v358
    %v1575 = vunpack.c.l.bf16 %v359
    %v1576 = vunpack.c.l.bf16 %v360
    %v1577 = vunpack.c.l.bf16 %v361
    %v1578 = vunpack.c.l.bf16 %v362
    %v1579 = vunpack.c.l.bf16 %v363
    %v1580 = vunpack.c.l.bf16 %v364
    %v1581 = vunpack.c.l.bf16 %v365
    %v1582 = vunpack.c.l.bf16 %v366
    %v1583 = vunpack.c.l.bf16 %v367
    %v1584 = vunpack.c.l.bf16 %v368
    %v1585 = vunpack.c.l.bf16 %v369
    %v1586 = vunpack.c.l.bf16 %v370
    %v1587 = vunpack.c.l.bf16 %v371
    %v1588 = vunpack.c.l.bf16 %v372
    %v1589 = vunpack.c.l.bf16 %v373
    %v1590 = vunpack.c.l.bf16 %v374
    %v1591 = vunpack.c.l.bf16 %v375
    %v1592 = vunpack.c.l.bf16 %v376
    %v1593 = vunpack.c.l.bf16 %v377
    %v1594 = vunpack.c.l.bf16 %v378
    %v1595 = vunpack.c.l.bf16 %v379
    %v1596 = vunpack.c.l.bf16 %v380
    %v1597 = vunpack.c.l.bf16 %v381
    %v1598 = vunpack.c.l.bf16 %v382
    %v1599 = vunpack.c.l.bf16 %v383
    %v1600 = vunpack.c.l.bf16 %v384
    %v1601 = vunpack.c.l.bf16 %v385
    %v1602 = vunpack.c.l.bf16 %v386
    %v1603 = vunpack.c.l.bf16 %v387
    %v1604 = vunpack.c.l.bf16 %v388
    %v1605 = vunpack.c.l.bf16 %v389
    %v1606 = vunpack.c.l.bf16 %v390
    %v1607 = vunpack.c.l.bf16 %v391
    %v1608 = vunpack.c.l.bf16 %v392
    %v1609 = vunpack.c.l.bf16 %v393
    %v1610 = vunpack.c.l.bf16 %v394
    %v1611 = vunpack.c.l.bf16 %v395
    %v1612 = vunpack.c.l.bf16 %v396
    %v1613 = vunpack.c.l.bf16 %v397
    %v1614 = vunpack.c.l.bf16 %v398
    %v1615 = vunpack.c.l.bf16 %v399
    %v1616 = vunpack.c.l.bf16 %v400
    %v1617 = vunpack.c.l.bf16 %v401
    %v1618 = vunpack.c.l.bf16 %v402
    %v1619 = vunpack.c.l.bf16 %v403
    %v1620 = vunpack.c.l.bf16 %v404
    %v1621 = vunpack.c.l.bf16 %v405
    %v1622 = vunpack.c.l.bf16 %v406
    %v1623 = vunpack.c.l.bf16 %v407
    %v1624 = vunpack.c.l.bf16 %v408
    %v1625 = vunpack.c.l.bf16 %v409
    %v1626 = vunpack.c.l.bf16 %v410
    %v1627 = vunpack.c.l.bf16 %v411
    %v1628 = vunpack.c.l.bf16 %v412
    %v1629 = vunpack.c.l.bf16 %v413
    %v1630 = vunpack.c.l.bf16 %v414
    %v1631 = vunpack.c.l.bf16 %v415
    %v1632 = vunpack.c.l.bf16 %v416
    %v1633 = vunpack.c.l.bf16 %v417
    %v1634 = vunpack.c.l.bf16 %v418
    %v1635 = vunpack.c.l.bf16 %v419
    %v1636 = vunpack.c.l.bf16 %v420
    %v1637 = vunpack.c.l.bf16 %v421
    %v1638 = vunpack.c.l.bf16 %v422
    %v1639 = vunpack.c.l.bf16 %v423
    %v1640 = vunpack.c.l.bf16 %v424
    %v1641 = vunpack.c.l.bf16 %v425
    %v1642 = vunpack.c.l.bf16 %v426
    %v1643 = vunpack.c.l.bf16 %v427
    %v1644 = vunpack.c.l.bf16 %v428
    %v1645 = vunpack.c.l.bf16 %v429
    %v1646 = vunpack.c.l.bf16 %v430
    %v1647 = vunpack.c.l.bf16 %v431
    %v1648 = vunpack.c.l.bf16 %v432
    %v1649 = vunpack.c.l.bf16 %v433
    %v1650 = vunpack.c.l.bf16 %v434
    %v1651 = vunpack.c.l.bf16 %v435
    %v1652 = vunpack.c.l.bf16 %v436
    %v1653 = vunpack.c.l.bf16 %v437
    %v1654 = vunpack.c.l.bf16 %v438
    %v1655 = vunpack.c.l.bf16 %v439
    %v1656 = vunpack.c.l.bf16 %v440
    %v1657 = vunpack.c.l.bf16 %v441
    %v1658 = vunpack.c.l.bf16 %v442
    %v1659 = vunpack.c.l.bf16 %v443
    %v1660 = vunpack.c.l.bf16 %v444
    %v1661 = vunpack.c.l.bf16 %v445
    %v1662 = vunpack.c.l.bf16 %v446
    %v1663 = vunpack.c.l.bf16 %v447
    %v1664 = vunpack.c.l.bf16 %v448
    %v1665 = vunpack.c.l.bf16 %v449
    %v1666 = vunpack.c.l.bf16 %v450
    %v1667 = vunpack.c.l.bf16 %v451
    %v1668 = vunpack.c.l.bf16 %v452
    %v1669 = vunpack.c.l.bf16 %v453
    %v1670 = vunpack.c.l.bf16 %v454
    %v1671 = vunpack.c.l.bf16 %v455
    %v1672 = vunpack.c.l.bf16 %v456
    %v1673 = vunpack.c.l.bf16 %v457
    %v1674 = vunpack.c.l.bf16 %v458
    %v1675 = vunpack.c.l.bf16 %v459
    %v1676 = vunpack.c.l.bf16 %v460
    %v1677 = vunpack.c.l.bf16 %v461
    %v1678 = vunpack.c.l.bf16 %v462
    %v1679 = vunpack.c.l.bf16 %v463
    %v1680 = vunpack.c.l.bf16 %v464
    %v1681 = vunpack.c.l.bf16 %v465
    %v1682 = vunpack.c.l.bf16 %v466
    %v1683 = vunpack.c.l.bf16 %v467
    %v1684 = vunpack.c.l.bf16 %v468
    %v1685 = vunpack.c.l.bf16 %v469
    %v1686 = vunpack.c.l.bf16 %v470
    %v1687 = vunpack.c.l.bf16 %v471
    %v1688 = vunpack.c.l.bf16 %v472
    %v1689 = vunpack.c.l.bf16 %v473
    %v1690 = vunpack.c.l.bf16 %v474
    %v1691 = vunpack.c.l.bf16 %v475
    %v1692 = vunpack.c.l.bf16 %v476
    %v1693 = vunpack.c.l.bf16 %v477
    %v1694 = vunpack.c.l.bf16 %v478
    %v1695 = vunpack.c.l.bf16 %v479
    %v1696 = vunpack.c.l.bf16 %v480
    %v1697 = vunpack.c.l.bf16 %v481
    %v1698 = vunpack.c.l.bf16 %v482
    %v1699 = vunpack.c.l.bf16 %v483
    %v1700 = vunpack.c.l.bf16 %v484
    %v1701 = vunpack.c.l.bf16 %v485
    %v1702 = vunpack.c.l.bf16 %v486
    %v1703 = vunpack.c.l.bf16 %v487
    %v1704 = vunpack.c.l.bf16 %v488
    %v1705 = vunpack.c.l.bf16 %v489
    %v1706 = vunpack.c.l.bf16 %v490
    %v1707 = vunpack.c.l.bf16 %v491
    %v1708 = vunpack.c.l.bf16 %v492
    %v1709 = vunpack.c.l.bf16 %v493
    %v1710 = vunpack.c.l.bf16 %v494
    %v1711 = vunpack.c.l.bf16 %v495
    %v1712 = vunpack.c.l.bf16 %v496
    %v1713 = vunpack.c.l.bf16 %v497
    %v1714 = vunpack.c.l.bf16 %v498
    %v1715 = vunpack.c.l.bf16 %v499
    %v1716 = vunpack.c.l.bf16 %v500
    %v1717 = vunpack.c.l.bf16 %v501
    %v1718 = vunpack.c.l.bf16 %v502
    %v1719 = vunpack.c.l.bf16 %v503
    %v1720 = vunpack.c.l.bf16 %v504
    %v1721 = vunpack.c.l.bf16 %v505
    %v1722 = vunpack.c.l.bf16 %v506
    %v1723 = vunpack.c.l.bf16 %v507
    %v1724 = vunpack.c.l.bf16 %v508
    %v1725 = vunpack.c.l.bf16 %v509
    %v1726 = vunpack.c.l.bf16 %v510
    %v1727 = vunpack.c.l.bf16 %v511
    %v1728 = vunpack.c.l.bf16 %v512
    %v1729 = vunpack.c.l.bf16 %v513
    %v1730 = vunpack.c.l.bf16 %v514
    %v1731 = vunpack.c.l.bf16 %v515
    %v1732 = vunpack.c.l.bf16 %v516
    %v1733 = vunpack.c.l.bf16 %v517
    %v1734 = vunpack.c.l.bf16 %v518
    %v1735 = vunpack.c.l.bf16 %v519
    %v1736 = vunpack.c.l.bf16 %v520
    %v1737 = vunpack.c.l.bf16 %v521
    %v1738 = vunpack.c.l.bf16 %v522
    %v1739 = vunpack.c.l.bf16 %v523
    %v1740 = vunpack.c.l.bf16 %v524
    %v1741 = vunpack.c.l.bf16 %v525
    %v1742 = vunpack.c.l.bf16 %v526
    %v1743 = vunpack.c.l.bf16 %v527
    %v1744 = vunpack.c.l.bf16 %v528
    %v1745 = vunpack.c.l.bf16 %v529
    %v1746 = vunpack.c.l.bf16 %v530
    %v1747 = vunpack.c.l.bf16 %v531
    %v1748 = vunpack.c.l.bf16 %v532
    %v1749 = vunpack.c.l.bf16 %v533
    %v1750 = vunpack.c.l.bf16 %v534
    %v1751 = vunpack.c.l.bf16 %v535
    %v1752 = vunpack.c.l.bf16 %v536
    %v1753 = vunpack.c.l.bf16 %v537
    %v1754 = vunpack.c.l.bf16 %v538
    %v1755 = vunpack.c.l.bf16 %v539
    %v1756 = vunpack.c.l.bf16 %v540
    %v1757 = vunpack.c.l.bf16 %v541
    %v1758 = vunpack.c.l.bf16 %v542
    %v1759 = vunpack.c.l.bf16 %v543
    %v1760 = vunpack.c.l.bf16 %v544
    %v1761 = vunpack.c.l.bf16 %v545
    %v1762 = vunpack.c.l.bf16 %v546
    %v1763 = vunpack.c.l.bf16 %v547
    %v1764 = vunpack.c.l.bf16 %v548
    %v1765 = vunpack.c.l.bf16 %v549
    %v1766 = vunpack.c.l.bf16 %v550
    %v1767 = vunpack.c.l.bf16 %v551
    %v1768 = vunpack.c.l.bf16 %v552
    %v1769 = vunpack.c.l.bf16 %v553
    %v1770 = vunpack.c.l.bf16 %v554
    %v1771 = vunpack.c.l.bf16 %v555
    %v1772 = vunpack.c.l.bf16 %v556
    %v1773 = vunpack.c.l.bf16 %v557
    %v1774 = vunpack.c.l.bf16 %v558
    %v1775 = vunpack.c.l.bf16 %v559
    %v1776 = vunpack.c.l.bf16 %v560
    %v1777 = vunpack.c.l.bf16 %v561
    %v1778 = vunpack.c.l.bf16 %v562
    %v1779 = vunpack.c.l.bf16 %v563
    %v1780 = vunpack.c.l.bf16 %v564
    %v1781 = vunpack.c.l.bf16 %v565
    %v1782 = vunpack.c.l.bf16 %v566
    %v1783 = vunpack.c.l.bf16 %v567
    %v1784 = vunpack.c.l.bf16 %v568
    %v1785 = vunpack.c.l.bf16 %v569
    %v1786 = vunpack.c.l.bf16 %v570
    %v1787 = vunpack.c.l.bf16 %v571
    %v1788 = vunpack.c.l.bf16 %v572
    %v1789 = vunpack.c.l.bf16 %v573
    %v1790 = vunpack.c.l.bf16 %v574
    %v1791 = vunpack.c.l.bf16 %v575
    %v1792 = vunpack.c.l.bf16 %v576
    %v1793 = vunpack.c.l.bf16 %v577
    %v1794 = vunpack.c.l.bf16 %v578
    %v1795 = vunpack.c.l.bf16 %v579
    %v1796 = vunpack.c.l.bf16 %v580
    %v1797 = vunpack.c.l.bf16 %v581
    %v1798 = vunpack.c.l.bf16 %v582
    %v1799 = vunpack.c.l.bf16 %v583
    %v1800 = vunpack.c.l.bf16 %v584
    %v1801 = vunpack.c.l.bf16 %v585
    %v1802 = vunpack.c.l.bf16 %v586
    %v1803 = vunpack.c.l.bf16 %v587
    %v1804 = vunpack.c.l.bf16 %v588
    %v1805 = vunpack.c.l.bf16 %v589
    %v1806 = vunpack.c.l.bf16 %v590
    %v1807 = vunpack.c.l.bf16 %v591
    %v1808 = vunpack.c.l.bf16 %v592
    %v1809 = vunpack.c.l.bf16 %v593
    %v1810 = vunpack.c.l.bf16 %v594
    %v1811 = vunpack.c.l.bf16 %v595
    %v1812 = vunpack.c.l.bf16 %v596
    %v1813 = vunpack.c.l.bf16 %v597
    %v1814 = vunpack.c.l.bf16 %v598
    %v1815 = vunpack.c.l.bf16 %v599
    %v1816 = vunpack.c.l.bf16 %v600
    %v1817 = vunpack.c.l.bf16 %v601
    %v1818 = vunpack.c.l.bf16 %v602
    %v1819 = vunpack.c.l.bf16 %v603
    %v1820 = vunpack.c.l.bf16 %v604
    %v1821 = vunpack.c.l.bf16 %v605
    %v1822 = vunpack.c.l.bf16 %v606
    %v1823 = vunpack.c.l.bf16 %v607
    %v1824 = vunpack.c.l.bf16 %v608
    %v1825 = vunpack.c.l.bf16 %v609
    %v1826 = vunpack.c.l.bf16 %v610
    %v1827 = vunpack.c.l.bf16 %v611
    %v1828 = vunpack.c.l.bf16 %v612
    %v1829 = vunpack.c.l.bf16 %v613
    %v1830 = vunpack.c.l.bf16 %v614
    %v1831 = vunpack.c.l.bf16 %v615
    %v1832 = vunpack.c.l.bf16 %v616
    %v1833 = vunpack.c.l.bf16 %v617
    %v1834 = vunpack.c.l.bf16 %v618
    %v1835 = vunpack.c.l.bf16 %v619
    %v1836 = vunpack.c.l.bf16 %v620
    %v1837 = vunpack.c.l.bf16 %v621
    %v1838 = vunpack.c.l.bf16 %v622
    %v1839 = vunpack.c.l.bf16 %v623
    %v1840 = vunpack.c.l.bf16 %v624
    %v1841 = vunpack.c.l.bf16 %v625
    %v1842 = vunpack.c.l.bf16 %v626
    %v1843 = vunpack.c.l.bf16 %v627
    %v1844 = vunpack.c.l.bf16 %v628
    %v1845 = vunpack.c.l.bf16 %v629
    %v1846 = vunpack.c.l.bf16 %v630
    %v1847 = vunpack.c.l.bf16 %v631
    %v1848 = vunpack.c.l.bf16 %v632
    %v1849 = vunpack.c.l.bf16 %v633
    %v1850 = vunpack.c.l.bf16 %v634
    %v1851 = vunpack.c.l.bf16 %v635
    %v1852 = vunpack.c.l.bf16 %v636
    %v1853 = vunpack.c.l.bf16 %v637
    %v1854 = vunpack.c.l.bf16 %v638
    %v1855 = vunpack.c.l.bf16 %v639
    %v1856 = vunpack.c.l.bf16 %v640
    %v1857 = vunpack.c.l.bf16 %v641
    %v1858 = vunpack.c.l.bf16 %v642
    %v1859 = vunpack.c.l.bf16 %v643
    %v1860 = vunpack.c.l.bf16 %v644
    %v1861 = vunpack.c.l.bf16 %v645
    %v1862 = vunpack.c.l.bf16 %v646
    %v1863 = vunpack.c.l.bf16 %v647
    %v1864 = vunpack.c.l.bf16 %v648
    %v1865 = vunpack.c.l.bf16 %v649
    %v1866 = vunpack.c.l.bf16 %v650
    %v1867 = vunpack.c.l.bf16 %v651
    %v1868 = vunpack.c.l.bf16 %v652
    %v1869 = vunpack.c.l.bf16 %v653
    %v1870 = vunpack.c.l.bf16 %v654
    %v1871 = vunpack.c.l.bf16 %v655
    %v1872 = vunpack.c.l.bf16 %v656
    %v1873 = vunpack.c.l.bf16 %v657
    %v1874 = vunpack.c.l.bf16 %v658
    %v1875 = vunpack.c.l.bf16 %v659
    %v1876 = vunpack.c.l.bf16 %v660
    %v1877 = vunpack.c.l.bf16 %v661
    %v1878 = vunpack.c.l.bf16 %v662
    %v1879 = vunpack.c.l.bf16 %v663
    %v1880 = vunpack.c.l.bf16 %v664
    %v1881 = vunpack.c.l.bf16 %v665
    %v1882 = vunpack.c.l.bf16 %v666
    %v1883 = vunpack.c.l.bf16 %v667
    %v1884 = vunpack.c.l.bf16 %v668
    %v1885 = vunpack.c.l.bf16 %v669
    %v1886 = vunpack.c.l.bf16 %v670
    %v1887 = vunpack.c.l.bf16 %v671
    %v1888 = vunpack.c.l.bf16 %v672
    %v1889 = vunpack.c.l.bf16 %v673
    %v1890 = vunpack.c.l.bf16 %v674
    %v1891 = vunpack.c.l.bf16 %v675
    %v1892 = vunpack.c.l.bf16 %v676
    %v1893 = vunpack.c.l.bf16 %v677
    %v1894 = vunpack.c.l.bf16 %v678
    %v1895 = vunpack.c.l.bf16 %v679
    %v1896 = vunpack.c.l.bf16 %v680
    %v1897 = vunpack.c.l.bf16 %v681
    %v1898 = vunpack.c.l.bf16 %v682
    %v1899 = vunpack.c.l.bf16 %v683
    %v1900 = vunpack.c.l.bf16 %v684
    %v1901 = vunpack.c.l.bf16 %v685
    %v1902 = vunpack.c.l.bf16 %v686
    %v1903 = vunpack.c.l.bf16 %v687
    %v1904 = vunpack.c.l.bf16 %v688
    %v1905 = vunpack.c.l.bf16 %v689
    %v1906 = vunpack.c.l.bf16 %v690
    %v1907 = vunpack.c.l.bf16 %v691
    %v1908 = vunpack.c.l.bf16 %v692
    %v1909 = vunpack.c.l.bf16 %v693
    %v1910 = vunpack.c.l.bf16 %v694
    %v1911 = vunpack.c.l.bf16 %v695
    %v1912 = vunpack.c.l.bf16 %v696
    %v1913 = vunpack.c.l.bf16 %v697
    %v1914 = vunpack.c.l.bf16 %v698
    %v1915 = vunpack.c.l.bf16 %v699
    %v1916 = vunpack.c.l.bf16 %v700
    %v1917 = vunpack.c.l.bf16 %v701
    %v1918 = vunpack.c.l.bf16 %v702
    %v1919 = vunpack.c.l.bf16 %v703
    %v1920 = vunpack.c.l.bf16 %v704
    %v1921 = vunpack.c.l.bf16 %v705
    %v1922 = vunpack.c.l.bf16 %v706
    %v1923 = vunpack.c.l.bf16 %v707
    %v1924 = vunpack.c.l.bf16 %v708
    %v1925 = vunpack.c.l.bf16 %v709
    %v1926 = vunpack.c.l.bf16 %v710
    %v1927 = vunpack.c.l.bf16 %v711
    %v1928 = vunpack.c.l.bf16 %v712
    %v1929 = vunpack.c.l.bf16 %v713
    %v1930 = vunpack.c.l.bf16 %v714
    %v1931 = vunpack.c.l.bf16 %v715
    %v1932 = vunpack.c.l.bf16 %v716
    %v1933 = vunpack.c.l.bf16 %v717
    %v1934 = vunpack.c.l.bf16 %v718
    %v1935 = vunpack.c.l.bf16 %v719
    %v1936 = vunpack.c.l.bf16 %v720
    %v1937 = vunpack.c.l.bf16 %v721
    %v1938 = vunpack.c.l.bf16 %v722
    %v1939 = vunpack.c.l.bf16 %v723
    %v1940 = vunpack.c.l.bf16 %v724
    %v1941 = vunpack.c.l.bf16 %v725
    %v1942 = vunpack.c.l.bf16 %v726
    %v1943 = vunpack.c.l.bf16 %v727
    %v1944 = vunpack.c.l.bf16 %v728
    %v1945 = vunpack.c.l.bf16 %v729
    %v1946 = vunpack.c.l.bf16 %v730
    %v1947 = vunpack.c.l.bf16 %v731
    %v1948 = vunpack.c.l.bf16 %v732
    %v1949 = vunpack.c.l.bf16 %v733
    %v1950 = vunpack.c.l.bf16 %v734
    %v1951 = vunpack.c.l.bf16 %v735
    %v1952 = vunpack.c.l.bf16 %v736
    %v1953 = vunpack.c.l.bf16 %v737
    %v1954 = vunpack.c.l.bf16 %v738
    %v1955 = vunpack.c.l.bf16 %v739
    %v1956 = vunpack.c.l.bf16 %v740
    %v1957 = vunpack.c.l.bf16 %v741
    %v1958 = vunpack.c.l.bf16 %v742
    %v1959 = vunpack.c.l.bf16 %v743
    %v1960 = vunpack.c.l.bf16 %v744
    %v1961 = vunpack.c.l.bf16 %v745
    %v1962 = vunpack.c.l.bf16 %v746
    %v1963 = vunpack.c.l.bf16 %v747
    %v1964 = vunpack.c.l.bf16 %v748
    %v1965 = vunpack.c.l.bf16 %v749
    %v1966 = vunpack.c.l.bf16 %v750
    %v1967 = vunpack.c.l.bf16 %v751
    %v1968 = vunpack.c.l.bf16 %v752
    %v1969 = vunpack.c.l.bf16 %v753
    %v1970 = vunpack.c.l.bf16 %v754
    %v1971 = vunpack.c.l.bf16 %v755
    %v1972 = vunpack.c.l.bf16 %v756
    %v1973 = vunpack.c.l.bf16 %v757
    %v1974 = vunpack.c.l.bf16 %v758
    %v1975 = vunpack.c.l.bf16 %v759
    %v1976 = vunpack.c.l.bf16 %v760
    %v1977 = vunpack.c.l.bf16 %v761
    %v1978 = vunpack.c.l.bf16 %v762
    %v1979 = vunpack.c.l.bf16 %v763
    %v1980 = vunpack.c.l.bf16 %v764
    %v1981 = vunpack.c.l.bf16 %v765
    %v1982 = vunpack.c.l.bf16 %v766
    %v1983 = vunpack.c.l.bf16 %v767
    %v1984 = vunpack.c.l.bf16 %v768
    %v1985 = vunpack.c.l.bf16 %v769
    %v1986 = vunpack.c.l.bf16 %v770
    %v1987 = vunpack.c.l.bf16 %v771
    %v1988 = vunpack.c.l.bf16 %v772
    %v1989 = vunpack.c.l.bf16 %v773
    %v1990 = vunpack.c.l.bf16 %v774
    %v1991 = vunpack.c.l.bf16 %v775
    %v1992 = vunpack.c.l.bf16 %v776
    %v1993 = vunpack.c.l.bf16 %v777
    %v1994 = vunpack.c.l.bf16 %v778
    %v1995 = vunpack.c.l.bf16 %v779
    %v1996 = vunpack.c.l.bf16 %v780
    %v1997 = vunpack.c.l.bf16 %v781
    %v1998 = vunpack.c.l.bf16 %v782
    %v1999 = vunpack.c.l.bf16 %v783
    %v2000 = vunpack.c.l.bf16 %v784
    %v2001 = vunpack.c.l.bf16 %v785
    %v2002 = vunpack.c.l.bf16 %v786
    %v2003 = vunpack.c.l.bf16 %v787
    %v2004 = vunpack.c.l.bf16 %v788
    %v2005 = vunpack.c.l.bf16 %v789
    %v2006 = vunpack.c.l.bf16 %v790
    %v2007 = vunpack.c.l.bf16 %v791
    %v2008 = vunpack.c.l.bf16 %v792
    %v2009 = vunpack.c.l.bf16 %v793
    %v2010 = vunpack.c.l.bf16 %v794
    %v2011 = vunpack.c.l.bf16 %v795
    %v2012 = vunpack.c.l.bf16 %v796
    %v2013 = vunpack.c.l.bf16 %v797
    %v2014 = vunpack.c.l.bf16 %v798
    %v2015 = vunpack.c.l.bf16 %v799
    %v2016 = vunpack.c.l.bf16 %v800
    %v2017 = vunpack.c.l.bf16 %v801
    %v2018 = vunpack.c.l.bf16 %v802
    %v2019 = vunpack.c.l.bf16 %v803
    %v2020 = vunpack.c.l.bf16 %v804
    %v2021 = vunpack.c.l.bf16 %v805
    %v2022 = vunpack.c.l.bf16 %v806
    %v2023 = vunpack.c.l.bf16 %v807
    %v2024 = vunpack.c.l.bf16 %v808
    %v2025 = vunpack.c.l.bf16 %v809
    %v2026 = vunpack.c.l.bf16 %v810
    %v2027 = vunpack.c.l.bf16 %v811
    %v2028 = vunpack.c.l.bf16 %v812
    %v2029 = vunpack.c.l.bf16 %v813
    %v2030 = vunpack.c.l.bf16 %v814
    %v2031 = vunpack.c.l.bf16 %v815
    %v2032 = vunpack.c.l.bf16 %v816
    %v2033 = vunpack.c.l.bf16 %v817
    %v2034 = vunpack.c.l.bf16 %v818
    %v2035 = vunpack.c.l.bf16 %v819
    %v2036 = vunpack.c.l.bf16 %v820
    %v2037 = vunpack.c.l.bf16 %v821
    %v2038 = vunpack.c.l.bf16 %v822
    %v2039 = vunpack.c.l.bf16 %v823
    %v2040 = vunpack.c.l.bf16 %v824
    %v2041 = vunpack.c.l.bf16 %v825
    %v2042 = vunpack.c.l.bf16 %v826
    %v2043 = vunpack.c.l.bf16 %v827
    %v2044 = vunpack.c.l.bf16 %v828
    %v2045 = vunpack.c.l.bf16 %v829
    %v2046 = vunpack.c.l.bf16 %v830
    %v2047 = vunpack.c.l.bf16 %v831
    %v2048 = vunpack.c.l.bf16 %v832
    %v2049 = vunpack.c.l.bf16 %v833
    %v2050 = vunpack.c.l.bf16 %v834
    %v2051 = vunpack.c.l.bf16 %v835
    %v2052 = vunpack.c.l.bf16 %v836
    %v2053 = vunpack.c.l.bf16 %v837
    %v2054 = vunpack.c.l.bf16 %v838
    %v2055 = vunpack.c.l.bf16 %v839
    %v2056 = vunpack.c.l.bf16 %v840
    %v2057 = vunpack.c.l.bf16 %v841
    %v2058 = vunpack.c.l.bf16 %v842
    %v2059 = vunpack.c.l.bf16 %v843
    %v2060 = vunpack.c.l.bf16 %v844
    %v2061 = vunpack.c.l.bf16 %v845
    %v2062 = vunpack.c.l.bf16 %v846
    %v2063 = vunpack.c.l.bf16 %v847
    %v2064 = vunpack.c.l.bf16 %v848
    %v2065 = vunpack.c.l.bf16 %v849
    %v2066 = vunpack.c.l.bf16 %v850
    %v2067 = vunpack.c.l.bf16 %v851
    %v2068 = vunpack.c.l.bf16 %v852
    %v2069 = vunpack.c.l.bf16 %v853
    %v2070 = vunpack.c.l.bf16 %v854
    %v2071 = vunpack.c.l.bf16 %v855
    %v2072 = vunpack.c.l.bf16 %v856
    %v2073 = vunpack.c.l.bf16 %v857
    %v2074 = vunpack.c.l.bf16 %v858
    %v2075 = vunpack.c.l.bf16 %v859
    %v2076 = vunpack.c.l.bf16 %v860
    %v2077 = vunpack.c.l.bf16 %v861
    %v2078 = vunpack.c.l.bf16 %v862
    %v2079 = vunpack.c.l.bf16 %v863
    %v2080 = vunpack.c.l.bf16 %v864
    %v2081 = vunpack.c.l.bf16 %v865
    %v2082 = vunpack.c.l.bf16 %v866
    %v2083 = vunpack.c.l.bf16 %v867
    %v2084 = vunpack.c.l.bf16 %v868
    %v2085 = vunpack.c.l.bf16 %v869
    %v2086 = vunpack.c.l.bf16 %v870
    %v2087 = vunpack.c.l.bf16 %v871
    %v2088 = vunpack.c.l.bf16 %v872
    %v2089 = vunpack.c.l.bf16 %v873
    %v2090 = vunpack.c.l.bf16 %v874
    %v2091 = vunpack.c.l.bf16 %v875
    %v2092 = vunpack.c.l.bf16 %v876
    %v2093 = vunpack.c.l.bf16 %v877
    %v2094 = vunpack.c.l.bf16 %v878
    %v2095 = vunpack.c.l.bf16 %v879
    %v2096 = vunpack.c.l.bf16 %v880
    %v2097 = vunpack.c.l.bf16 %v881
    %v2098 = vunpack.c.l.bf16 %v882
    %v2099 = vunpack.c.l.bf16 %v883
    %v2100 = vunpack.c.l.bf16 %v884
    %v2101 = vunpack.c.l.bf16 %v885
    %v2102 = vunpack.c.l.bf16 %v886
    %v2103 = vunpack.c.l.bf16 %v887
    %v2104 = vunpack.c.l.bf16 %v888
    %v2105 = vunpack.c.l.bf16 %v889
    %v2106 = vunpack.c.l.bf16 %v890
    %v2107 = vunpack.c.l.bf16 %v891
    %v2108 = vunpack.c.l.bf16 %v892
    %v2109 = vunpack.c.l.bf16 %v893
    %v2110 = vunpack.c.l.bf16 %v894
    %v2111 = vunpack.c.l.bf16 %v895
    %v2112 = vunpack.c.l.bf16 %v896
    %v2113 = vunpack.c.l.bf16 %v897
    %v2114 = vunpack.c.l.bf16 %v898
    %v2115 = vunpack.c.l.bf16 %v899
    %v2116 = vunpack.c.l.bf16 %v900
    %v2117 = vunpack.c.l.bf16 %v901
    %v2118 = vunpack.c.l.bf16 %v902
    %v2119 = vunpack.c.l.bf16 %v903
    %v2120 = vunpack.c.l.bf16 %v904
    %v2121 = vunpack.c.l.bf16 %v905
    %v2122 = vunpack.c.l.bf16 %v906
    %v2123 = vunpack.c.l.bf16 %v907
    %v2124 = vunpack.c.l.bf16 %v908
    %v2125 = vunpack.c.l.bf16 %v909
    %v2126 = vunpack.c.l.bf16 %v910
    %v2127 = vunpack.c.l.bf16 %v911
    %v2128 = vunpack.c.l.bf16 %v912
    %v2129 = vunpack.c.l.bf16 %v913
    %v2130 = vunpack.c.l.bf16 %v914
    %v2131 = vunpack.c.l.bf16 %v915
    %v2132 = vunpack.c.l.bf16 %v916
    %v2133 = vunpack.c.l.bf16 %v917
    %v2134 = vunpack.c.l.bf16 %v918
    %v2135 = vunpack.c.l.bf16 %v919
    %v2136 = vunpack.c.l.bf16 %v920
    %v2137 = vunpack.c.l.bf16 %v921
    %v2138 = vunpack.c.l.bf16 %v922
    %v2139 = vunpack.c.l.bf16 %v923
    %v2140 = vunpack.c.l.bf16 %v924
    %v2141 = vunpack.c.l.bf16 %v925
    %v2142 = vunpack.c.l.bf16 %v926
    %v2143 = vunpack.c.l.bf16 %v927
    %v2144 = vunpack.c.l.bf16 %v928
    %v2145 = vunpack.c.l.bf16 %v929
    %v2146 = vunpack.c.l.bf16 %v930
    %v2147 = vunpack.c.l.bf16 %v931
    %v2148 = vunpack.c.l.bf16 %v932
    %v2149 = vunpack.c.l.bf16 %v933
    %v2150 = vunpack.c.l.bf16 %v934
    %v2151 = vunpack.c.l.bf16 %v935
    %v2152 = vunpack.c.l.bf16 %v936
    %v2153 = vunpack.c.l.bf16 %v937
    %v2154 = vunpack.c.l.bf16 %v938
    %v2155 = vunpack.c.l.bf16 %v939
    %v2156 = vunpack.c.l.bf16 %v940
    %v2157 = vunpack.c.l.bf16 %v941
    %v2158 = vunpack.c.l.bf16 %v942
    %v2159 = vunpack.c.l.bf16 %v943
    %v2160 = vunpack.c.l.bf16 %v944
    %v2161 = vunpack.c.l.bf16 %v945
    %v2162 = vunpack.c.l.bf16 %v946
    %v2163 = vunpack.c.l.bf16 %v947
    %v2164 = vunpack.c.l.bf16 %v948
    %v2165 = vunpack.c.l.bf16 %v949
    %v2166 = vunpack.c.l.bf16 %v950
    %v2167 = vunpack.c.l.bf16 %v951
    %v2168 = vunpack.c.l.bf16 %v952
    %v2169 = vunpack.c.l.bf16 %v953
    %v2170 = vunpack.c.l.bf16 %v954
    %v2171 = vunpack.c.l.bf16 %v955
    %v2172 = vunpack.c.l.bf16 %v956
    %v2173 = vunpack.c.l.bf16 %v957
    %v2174 = vunpack.c.l.bf16 %v958
    %v2175 = vunpack.c.l.bf16 %v959
    %v2176 = vunpack.c.l.bf16 %v960
    %v2177 = vunpack.c.l.bf16 %v961
    %v2178 = vunpack.c.l.bf16 %v962
    %v2179 = vunpack.c.l.bf16 %v963
    %v2180 = vunpack.c.l.bf16 %v964
    %v2181 = vunpack.c.l.bf16 %v965
    %v2182 = vunpack.c.l.bf16 %v966
    %v2183 = vunpack.c.l.bf16 %v967
    %v2184 = vunpack.c.l.bf16 %v968
    %v2185 = vunpack.c.l.bf16 %v969
    %v2186 = vunpack.c.l.bf16 %v970
    %v2187 = vunpack.c.l.bf16 %v971
    %v2188 = vunpack.c.l.bf16 %v972
    %v2189 = vunpack.c.l.bf16 %v973
    %v2190 = vunpack.c.l.bf16 %v974
    %v2191 = vunpack.c.l.bf16 %v975
    %v2192 = vunpack.c.l.bf16 %v976
    %v2193 = vunpack.c.l.bf16 %v977
    %v2194 = vunpack.c.l.bf16 %v978
    %v2195 = vunpack.c.l.bf16 %v979
    %v2196 = vunpack.c.l.bf16 %v980
    %v2197 = vunpack.c.l.bf16 %v981
    %v2198 = vunpack.c.l.bf16 %v982
    %v2199 = vunpack.c.l.bf16 %v983
    %v2200 = vunpack.c.l.bf16 %v984
    %v2201 = vunpack.c.l.bf16 %v985
    %v2202 = vunpack.c.l.bf16 %v986
    %v2203 = vunpack.c.l.bf16 %v987
    %v2204 = vunpack.c.l.bf16 %v988
    %v2205 = vunpack.c.l.bf16 %v989
    %v2206 = vunpack.c.l.bf16 %v990
    %v2207 = vunpack.c.l.bf16 %v991
    %v2208 = vunpack.c.l.bf16 %v992
    %v2209 = vunpack.c.l.bf16 %v993
    %v2210 = vunpack.c.l.bf16 %v994
    %v2211 = vunpack.c.l.bf16 %v995
    %v2212 = vunpack.c.l.bf16 %v996
    %v2213 = vunpack.c.l.bf16 %v997
    %v2214 = vunpack.c.l.bf16 %v998
    %v2215 = vunpack.c.l.bf16 %v999
    %v2216 = vunpack.c.l.bf16 %v1000
    %v2217 = vunpack.c.l.bf16 %v1001
    %v2218 = vunpack.c.l.bf16 %v1002
    %v2219 = vunpack.c.l.bf16 %v1003
    %v2220 = vunpack.c.l.bf16 %v1004
    %v2221 = vunpack.c.l.bf16 %v1005
    %v2222 = vunpack.c.l.bf16 %v1006
    %v2223 = vunpack.c.l.bf16 %v1007
    %v2224 = vunpack.c.l.bf16 %v1008
    %v2225 = vunpack.c.l.bf16 %v1009
    %v2226 = vunpack.c.l.bf16 %v1010
    %v2227 = vunpack.c.l.bf16 %v1011
    %v2228 = vunpack.c.l.bf16 %v1012
    %v2229 = vunpack.c.l.bf16 %v1013
    %v2230 = vunpack.c.l.bf16 %v1014
    %v2231 = vunpack.c.l.bf16 %v1015
    %v2232 = vunpack.c.l.bf16 %v1016
    %v2233 = vunpack.c.l.bf16 %v1017
    %v2234 = vunpack.c.l.bf16 %v1018
    %v2235 = vunpack.c.l.bf16 %v1019
    %v2236 = vunpack.c.l.bf16 %v1020
    %v2237 = vunpack.c.l.bf16 %v1021
    %v2238 = vunpack.c.l.bf16 %v1022
    %v2239 = vunpack.c.l.bf16 %v1023
    %v2240 = vunpack.c.l.bf16 %v1024
    %v2241 = vunpack.c.l.bf16 %v1025
    %v2242 = vunpack.c.l.bf16 %v1026
    %v2243 = vunpack.c.l.bf16 %v1027
    %v2244 = vunpack.c.l.bf16 %v1028
    %v2245 = vunpack.c.l.bf16 %v1029
    %v2246 = vunpack.c.l.bf16 %v1030
    %v2247 = vunpack.c.l.bf16 %v1031
    %v2248 = vunpack.c.l.bf16 %v1032
    %v2249 = vunpack.c.l.bf16 %v1033
    %v2250 = vunpack.c.l.bf16 %v1034
    %v2251 = vunpack.c.l.bf16 %v1035
    %v2252 = vunpack.c.l.bf16 %v1036
    %v2253 = vunpack.c.l.bf16 %v1037
    %v2254 = vunpack.c.l.bf16 %v1038
    %v2255 = vunpack.c.l.bf16 %v1039
    %v2256 = vunpack.c.l.bf16 %v1040
    %v2257 = vunpack.c.l.bf16 %v1041
    %v2258 = vunpack.c.l.bf16 %v1042
    %v2259 = vunpack.c.l.bf16 %v1043
    %v2260 = vunpack.c.l.bf16 %v1044
    %v2261 = vunpack.c.l.bf16 %v1045
    %v2262 = vunpack.c.l.bf16 %v1046
    %v2263 = vunpack.c.l.bf16 %v1047
    %v2264 = vunpack.c.l.bf16 %v1048
    %v2265 = vunpack.c.l.bf16 %v1049
    %v2266 = vunpack.c.l.bf16 %v1050
    %v2267 = vunpack.c.l.bf16 %v1051
    %v2268 = vunpack.c.l.bf16 %v1052
    %v2269 = vunpack.c.l.bf16 %v1053
    %v2270 = vunpack.c.l.bf16 %v1054
    %v2271 = vunpack.c.l.bf16 %v1055
    %v2272 = vunpack.c.l.bf16 %v1056
    %v2273 = vunpack.c.l.bf16 %v1057
    %v2274 = vunpack.c.l.bf16 %v1058
    %v2275 = vunpack.c.l.bf16 %v1059
    %v2276 = vunpack.c.l.bf16 %v1060
    %v2277 = vunpack.c.l.bf16 %v1061
    %v2278 = vunpack.c.l.bf16 %v1062
    %v2279 = vunpack.c.l.bf16 %v1063
    %v2280 = vunpack.c.l.bf16 %v1064
    %v2281 = vunpack.c.l.bf16 %v1065
    %v2282 = vunpack.c.l.bf16 %v1066
    %v2283 = vunpack.c.l.bf16 %v1067
    %v2284 = vunpack.c.l.bf16 %v1068
    %v2285 = vunpack.c.l.bf16 %v1069
    %v2286 = vunpack.c.l.bf16 %v1070
    %v2287 = vunpack.c.l.bf16 %v1071
    %v2288 = vunpack.c.l.bf16 %v1072
    %v2289 = vunpack.c.l.bf16 %v1073
    %v2290 = vunpack.c.l.bf16 %v1074
    %v2291 = vunpack.c.l.bf16 %v1075
    %v2292 = vunpack.c.l.bf16 %v1076
    %v2293 = vunpack.c.l.bf16 %v1077
    %v2294 = vunpack.c.l.bf16 %v1078
    %v2295 = vunpack.c.l.bf16 %v1079
    %v2296 = vunpack.c.l.bf16 %v1080
    %v2297 = vunpack.c.l.bf16 %v1081
    %v2298 = vunpack.c.l.bf16 %v1082
    %v2299 = vunpack.c.l.bf16 %v1083
    %v2300 = vunpack.c.l.bf16 %v1084
    %v2301 = vunpack.c.l.bf16 %v1085
    %v2302 = vunpack.c.l.bf16 %v1086
    %v2303 = vunpack.c.l.bf16 %v1087
    %v2304 = vunpack.c.l.bf16 %v1088
    %v2305 = vunpack.c.l.bf16 %v1089
    %v2306 = vunpack.c.l.bf16 %v1090
    %v2307 = vunpack.c.l.bf16 %v1091
    %v2308 = vunpack.c.l.bf16 %v1092
    %v2309 = vunpack.c.l.bf16 %v1093
    %v2310 = vunpack.c.l.bf16 %v1094
    %v2311 = vunpack.c.l.bf16 %v1095
    %v2312 = vunpack.c.l.bf16 %v1096
    %v2313 = vunpack.c.l.bf16 %v1097
    %v2314 = vunpack.c.l.bf16 %v1098
    %v2315 = vunpack.c.l.bf16 %v1099
    %v2316 = vunpack.c.l.bf16 %v1100
    %v2317 = vunpack.c.l.bf16 %v1101
    %v2318 = vunpack.c.l.bf16 %v1102
    %v2319 = vunpack.c.l.bf16 %v1103
    %v2320 = vunpack.c.l.bf16 %v1104
    %v2321 = vunpack.c.l.bf16 %v1105
    %v2322 = vunpack.c.l.bf16 %v1106
    %v2323 = vunpack.c.l.bf16 %v1107
    %v2324 = vunpack.c.l.bf16 %v1108
    %v2325 = vunpack.c.l.bf16 %v1109
    %v2326 = vunpack.c.l.bf16 %v1110
    %v2327 = vunpack.c.l.bf16 %v1111
    %v2328 = vunpack.c.l.bf16 %v1112
    %v2329 = vunpack.c.l.bf16 %v1113
    %v2330 = vunpack.c.l.bf16 %v1114
    %v2331 = vunpack.c.l.bf16 %v1115
    %v2332 = vunpack.c.l.bf16 %v1116
    %v2333 = vunpack.c.l.bf16 %v1117
    %v2334 = vunpack.c.l.bf16 %v1118
    %v2335 = vunpack.c.l.bf16 %v1119
    %v2336 = vunpack.c.l.bf16 %v1120
    %v2337 = vunpack.c.l.bf16 %v1121
    %v2338 = vunpack.c.l.bf16 %v1122
    %v2339 = vunpack.c.l.bf16 %v1123
    %v2340 = vunpack.c.l.bf16 %v1124
    %v2341 = vunpack.c.l.bf16 %v1125
    %v2342 = vunpack.c.l.bf16 %v1126
    %v2343 = vunpack.c.l.bf16 %v1127
    %v2344 = vunpack.c.l.bf16 %v1128
    %v2345 = vunpack.c.l.bf16 %v1129
    %v2346 = vunpack.c.l.bf16 %v1130
    %v2347 = vunpack.c.l.bf16 %v1131
    %v2348 = vunpack.c.l.bf16 %v1132
    %v2349 = vunpack.c.l.bf16 %v1133
    %v2350 = vunpack.c.l.bf16 %v1134
    %v2351 = vunpack.c.l.bf16 %v1135
    %v2352 = vunpack.c.l.bf16 %v1136
    %v2353 = vunpack.c.l.bf16 %v1137
    %v2354 = vunpack.c.l.bf16 %v1138
    %v2355 = vunpack.c.l.bf16 %v1139
    %v2356 = vunpack.c.l.bf16 %v1140
    %v2357 = vunpack.c.l.bf16 %v1141
    %v2358 = vunpack.c.l.bf16 %v1142
    %v2359 = vunpack.c.l.bf16 %v1143
    %v2360 = vunpack.c.l.bf16 %v1144
    %v2361 = vunpack.c.l.bf16 %v1145
    %v2362 = vunpack.c.l.bf16 %v1146
    %v2363 = vunpack.c.l.bf16 %v1147
    %v2364 = vunpack.c.l.bf16 %v1148
    %v2365 = vunpack.c.l.bf16 %v1149
    %v2366 = vunpack.c.l.bf16 %v1150
    %v2367 = vunpack.c.l.bf16 %v1151
    %v2368 = vunpack.c.l.bf16 %v1152
    %v2369 = vunpack.c.l.bf16 %v1153
    %v2370 = vunpack.c.l.bf16 %v1154
    %v2371 = vunpack.c.l.bf16 %v1155
    %v2372 = vunpack.c.l.bf16 %v1156
    %v2373 = vunpack.c.l.bf16 %v1157
    %v2374 = vunpack.c.l.bf16 %v1158
    %v2375 = vunpack.c.l.bf16 %v1159
    %v2376 = vunpack.c.l.bf16 %v1160
    %v2377 = vunpack.c.l.bf16 %v1161
    %v2378 = vunpack.c.l.bf16 %v1162
    %v2379 = vunpack.c.l.bf16 %v1163
    %v2380 = vunpack.c.l.bf16 %v1164
    %v2381 = vunpack.c.l.bf16 %v1165
    %v2382 = vunpack.c.l.bf16 %v1166
    %v2383 = vunpack.c.l.bf16 %v1167
    %v2384 = vunpack.c.l.bf16 %v1168
    %v2385 = vunpack.c.l.bf16 %v1169
    %v2386 = vunpack.c.l.bf16 %v1170
    %v2387 = vunpack.c.l.bf16 %v1171
    %v2388 = vunpack.c.l.bf16 %v1172
    %v2389 = vunpack.c.l.bf16 %v1173
    %v2390 = vunpack.c.l.bf16 %v1174
    %v2391 = vunpack.c.l.bf16 %v1175
    %v2392 = vunpack.c.l.bf16 %v1176
    %v2393 = vunpack.c.l.bf16 %v1177
    %v2394 = vunpack.c.l.bf16 %v1178
    %v2395 = vunpack.c.l.bf16 %v1179
    %v2396 = vunpack.c.l.bf16 %v1180
    %v2397 = vunpack.c.l.bf16 %v1181
    %v2398 = vunpack.c.l.bf16 %v1182
    %v2399 = vunpack.c.l.bf16 %v1183
    %v2400 = vunpack.c.l.bf16 %v1184
    %v2401 = vunpack.c.l.bf16 %v1185
    %v2402 = vunpack.c.l.bf16 %v1186
    %v2403 = vunpack.c.l.bf16 %v1187
    %v2404 = vunpack.c.l.bf16 %v1188
    %v2405 = vunpack.c.l.bf16 %v1189
    %v2406 = vunpack.c.l.bf16 %v1190
    %v2407 = vunpack.c.l.bf16 %v1191
    %v2408 = vunpack.c.l.bf16 %v1192
    %v2409 = vunpack.c.l.bf16 %v1193
    %v2410 = vunpack.c.l.bf16 %v1194
    %v2411 = vunpack.c.l.bf16 %v1195
    %v2412 = vunpack.c.l.bf16 %v1196
    %v2413 = vunpack.c.l.bf16 %v1197
    %v2414 = vunpack.c.l.bf16 %v1198
    %v2415 = vunpack.c.l.bf16 %v1199
    %v2416 = vunpack.c.l.bf16 %v1200
    %v2417 = vunpack.c.l.bf16 %v1201
    %v2418 = vunpack.c.l.bf16 %v1202
    %v2419 = vunpack.c.l.bf16 %v1203
    %v2420 = vunpack.c.l.bf16 %v1204
    %v2421 = vunpack.c.l.bf16 %v1205
    %v2422 = vunpack.c.l.bf16 %v1206
    %v2423 = vunpack.c.l.bf16 %v1207
    %v2424 = vunpack.c.l.bf16 %v1208
    %v2425 = vunpack.c.l.bf16 %v1209
    %v2426 = vunpack.c.l.bf16 %v1210
    %v2427 = vunpack.c.l.bf16 %v1211
    %v2428 = vunpack.c.l.bf16 %v1212
    %v2429 = vunpack.c.l.bf16 %v1213
    %v2430 = vunpack.c.l.bf16 %v1214
    %v2431 = vunpack.c.l.bf16 %v1215
    %v2432 = vunpack.c.l.bf16 %v1216
    %v2433 = vunpack.c.l.bf16 %v1217
    %v2434 = vunpack.c.l.bf16 %v1218
    %v2435 = vunpack.c.l.bf16 %v1219
    %v2436 = vunpack.c.l.bf16 %v1220
    %v2437 = vunpack.c.l.bf16 %v1221
    %v2438 = vunpack.c.l.bf16 %v1222
    %v2439 = vunpack.c.l.bf16 %v1223
    %v2440 = vunpack.c.l.bf16 %v1224
    %v2441 = vunpack.c.l.bf16 %v1225
    %v2442 = vunpack.c.l.bf16 %v1226
    %v2443 = vunpack.c.l.bf16 %v1227
    %v2444 = vunpack.c.l.bf16 %v1228
    %v2445 = vunpack.c.l.bf16 %v1229
    %v2446 = vunpack.c.l.bf16 %v1230
    %v2447 = vunpack.c.l.bf16 %v1231
    %v2448 = vunpack.c.l.bf16 %v1232
    %v2449 = vunpack.c.l.bf16 %v1233
    %v2450 = vunpack.c.l.bf16 %v1234
    %v2451 = vunpack.c.l.bf16 %v1235
    %v2452 = vunpack.c.l.bf16 %v1236
    %v2453 = vunpack.c.l.bf16 %v1237
    %v2454 = vunpack.c.l.bf16 %v1238
    %v2455 = vunpack.c.l.bf16 %v1239
    %v2456 = vunpack.c.l.bf16 %v1240
    %v2457 = vunpack.c.l.bf16 %v1241
    %v2458 = vunpack.c.l.bf16 %v1242
    %v2459 = vunpack.c.l.bf16 %v1243
    %v2460 = vunpack.c.l.bf16 %v1244
    %v2461 = vunpack.c.l.bf16 %v1245
    %v2462 = vunpack.c.l.bf16 %v1246
    %v2463 = vunpack.c.l.bf16 %v1247
    %v2464 = vunpack.c.l.bf16 %v1248
    %v2465 = vunpack.c.l.bf16 %v1249
    %v2466 = vunpack.c.l.bf16 %v1250
    %v2467 = vunpack.c.l.bf16 %v1251
    %v2468 = vunpack.c.l.bf16 %v1252
    %v2469 = vunpack.c.l.bf16 %v1253
    %v2470 = vunpack.c.l.bf16 %v1254
    %v2471 = vunpack.c.l.bf16 %v1255
    %v2472 = vunpack.c.l.bf16 %v1256
    %v2473 = vunpack.c.l.bf16 %v1257
    %v2474 = vunpack.c.l.bf16 %v1258
    %v2475 = vunpack.c.l.bf16 %v1259
    %v2476 = vunpack.c.l.bf16 %v1260
    %v2477 = vunpack.c.l.bf16 %v1261
    %v2478 = vunpack.c.l.bf16 %v1262
    %v2479 = vunpack.c.l.bf16 %v1263
    %v2480 = vunpack.c.l.bf16 %v1264
    %v2481 = vunpack.c.l.bf16 %v1265
    %v2482 = vunpack.c.l.bf16 %v1266
    %v2483 = vunpack.c.l.bf16 %v1267
    %v2484 = vunpack.c.l.bf16 %v1268
    %v2485 = vunpack.c.l.bf16 %v1269
    %v2486 = vunpack.c.l.bf16 %v1270
    %v2487 = vunpack.c.l.bf16 %v1271
    %v2488 = vunpack.c.l.bf16 %v1272
    %v2489 = vunpack.c.l.bf16 %v1273
    %v2490 = vunpack.c.l.bf16 %v1274
    %v2491 = vunpack.c.l.bf16 %v1275
    %v2492 = vunpack.c.l.bf16 %v1276
    %v2493 = vunpack.c.l.bf16 %v1277
    %v2494 = vunpack.c.l.bf16 %v1278
    %v2495 = vunpack.c.l.bf16 %v1279
    %v2496 = vunpack.c.l.bf16 %v1280
    %v2497 = vunpack.c.l.bf16 %v1281
    %v2498 = vunpack.c.l.bf16 %v1282
    %v2499 = vunpack.c.l.bf16 %v1283
    %v2500 = vunpack.c.l.bf16 %v1284
    %v2501 = vunpack.c.l.bf16 %v1285
    %v2502 = vunpack.c.l.bf16 %v1286
    %v2503 = vunpack.c.l.bf16 %v1287
    %v2504 = vunpack.c.l.bf16 %v1288
    %v2505 = vunpack.c.l.bf16 %v1289
    %v2506 = vunpack.c.l.bf16 %v1290
    %v2507 = vunpack.c.l.bf16 %v1291
    %v2508 = vunpack.c.l.bf16 %v1292
    %v2509 = vunpack.c.l.bf16 %v1293
    %v2510 = vunpack.c.l.bf16 %v1294
    %v2511 = vunpack.c.l.bf16 %v1295
    %v2512 = vunpack.c.l.bf16 %v1296
    %v2513 = vunpack.c.l.bf16 %v1297
    %v2514 = vunpack.c.l.bf16 %v1298
    %v2515 = vunpack.c.l.bf16 %v1299
    %v2516 = vunpack.c.l.bf16 %v1300
    %v2517 = vunpack.c.l.bf16 %v1301
    %v2518 = vunpack.c.l.bf16 %v1302
    %v2519 = vunpack.c.l.bf16 %v1303
    %v2520 = vunpack.c.l.bf16 %v1304
    %v2521 = vunpack.c.l.bf16 %v1305
    %v2522 = vunpack.c.l.bf16 %v1306
    %v2523 = vld [vmem:[%s2] sm:$0x1]
    %v2525 = vlaneseq
    %v2526 = vshrl.u32 %v2525, 7
    %v2527 = vsub.s32 0, %v2526
    %v2528 = vrot.slane %v2523, %v2527
    %2530 = vmatprep.subr.mxu0 0.0
    %2531 = vmatpush1.msra.mxu0 %v1307
    %2532 = vmatprep.subr.mxu0 0.0
    %2533 = vmatpush1.msra.mxu0 %v1308
    %2534 = vmatprep.subr.mxu0 0.0
    %2535 = vmatpush1.msra.mxu0 %v1309
    %2536 = vmatprep.subr.mxu0 0.0
    %2537 = vmatpush1.msra.mxu0 %v1310
    %2538 = vmatprep.subr.mxu0 0.0
    %2539 = vmatpush1.msra.mxu0 %v1311
    %2540 = vmatprep.subr.mxu0 0.0
    %2541 = vmatpush1.msra.mxu0 %v1312
    %2542 = vmatprep.subr.mxu0 0.0
    %2543 = vmatpush1.msra.mxu0 %v1313
    %2544 = vmatprep.subr.mxu0 0.0
    %2545 = vmatpush1.msra.mxu0 %v1314
    %2546 = vmatprep.subr.mxu0 0.0
    %2547 = vmatpush1.msra.mxu0 %v1315
    %2548 = vmatprep.subr.mxu0 0.0
    %2549 = vmatpush1.msra.mxu0 %v1316
    %2550 = vmatprep.subr.mxu0 0.0
    %2551 = vmatpush1.msra.mxu0 %v1317
    %2552 = vmatprep.subr.mxu0 0.0
    %2553 = vmatpush1.msra.mxu0 %v1318
    %2554 = vmatprep.subr.mxu0 0.0
    %2555 = vmatpush1.msra.mxu0 %v1319
    %2556 = vmatprep.subr.mxu0 0.0
    %2557 = vmatpush1.msra.mxu0 %v1320
    %2558 = vmatprep.subr.mxu0 0.0
    %2559 = vmatpush1.msra.mxu0 %v1321
    %2560 = vmatprep.subr.mxu0 0.0
    %2561 = vmatpush1.msra.mxu0 %v1322
    %2562 = vmatprep.subr.mxu0 0.0
    %2563 = vmatpush1.msra.mxu0 %v1323
    %2564 = vmatprep.subr.mxu0 0.0
    %2565 = vmatpush1.msra.mxu0 %v1324
    %2566 = vmatprep.subr.mxu0 0.0
    %2567 = vmatpush1.msra.mxu0 %v1325
    %2568 = vmatprep.subr.mxu0 0.0
    %2569 = vmatpush1.msra.mxu0 %v1326
    %2570 = vmatprep.subr.mxu0 0.0
    %2571 = vmatpush1.msra.mxu0 %v1327
    %2572 = vmatprep.subr.mxu0 0.0
    %2573 = vmatpush1.msra.mxu0 %v1328
    %2574 = vmatprep.subr.mxu0 0.0
    %2575 = vmatpush1.msra.mxu0 %v1329
    %2576 = vmatprep.subr.mxu0 0.0
    %2577 = vmatpush1.msra.mxu0 %v1330
    %2578 = vmatprep.subr.mxu0 0.0
    %2579 = vmatpush1.msra.mxu0 %v1331
    %2580 = vmatprep.subr.mxu0 0.0
    %2581 = vmatpush1.msra.mxu0 %v1332
    %2582 = vmatprep.subr.mxu0 0.0
    %2583 = vmatpush1.msra.mxu0 %v1333
    %2584 = vmatprep.subr.mxu0 0.0
    %2585 = vmatpush1.msra.mxu0 %v1334
    %2586 = vmatprep.subr.mxu0 0.0
    %2587 = vmatpush1.msra.mxu0 %v1335
    %2588 = vmatprep.subr.mxu0 0.0
    %2589 = vmatpush1.msra.mxu0 %v1336
    %2590 = vmatprep.subr.mxu0 0.0
    %2591 = vmatpush1.msra.mxu0 %v1337
    %2592 = vmatprep.subr.mxu0 0.0
    %2593 = vmatpush1.msra.mxu0 %v1338
    %2594 = vmatprep.mubr.f32.mxu0 %v16
    %2595 = vmatmul.mubr.f32.gmra.mrb[0].mxu0 %v15
    %v2596 = vpop.f32.mrb[0].mxu0
    %v2597 = vadd.f32 %v2528, %v2596
    %v2598 = vpop.f32.mrb[0].mxu0
    %2599 = vdwg.mxu0
    %2600 = vmatprep.subr.mxu0 0.0
    %2601 = vmatpush1.msra.mxu0 %v1339
    %2602 = vmatprep.subr.mxu0 0.0
    %2603 = vmatpush1.msra.mxu0 %v1340
    %2604 = vmatprep.subr.mxu0 0.0
    %2605 = vmatpush1.msra.mxu0 %v1341
    %2606 = vmatprep.subr.mxu0 0.0
    %2607 = vmatpush1.msra.mxu0 %v1342
    %2608 = vmatprep.subr.mxu0 0.0
    %2609 = vmatpush1.msra.mxu0 %v1343
    %2610 = vmatprep.subr.mxu0 0.0
    %2611 = vmatpush1.msra.mxu0 %v1344
    %2612 = vmatprep.subr.mxu0 0.0
    %2613 = vmatpush1.msra.mxu0 %v1345
    %2614 = vmatprep.subr.mxu0 0.0
    %2615 = vmatpush1.msra.mxu0 %v1346
    %2616 = vmatprep.subr.mxu0 0.0
    %2617 = vmatpush1.msra.mxu0 %v1347
    %2618 = vmatprep.subr.mxu0 0.0
    %2619 = vmatpush1.msra.mxu0 %v1348
    %2620 = vmatprep.subr.mxu0 0.0
    %2621 = vmatpush1.msra.mxu0 %v1349
    %2622 = vmatprep.subr.mxu0 0.0
    %2623 = vmatpush1.msra.mxu0 %v1350
    %2624 = vmatprep.subr.mxu0 0.0
    %2625 = vmatpush1.msra.mxu0 %v1351
    %2626 = vmatprep.subr.mxu0 0.0
    %2627 = vmatpush1.msra.mxu0 %v1352
    %2628 = vmatprep.subr.mxu0 0.0
    %2629 = vmatpush1.msra.mxu0 %v1353
    %2630 = vmatprep.subr.mxu0 0.0
    %2631 = vmatpush1.msra.mxu0 %v1354
    %2632 = vmatprep.subr.mxu0 0.0
    %2633 = vmatpush1.msra.mxu0 %v1355
    %2634 = vmatprep.subr.mxu0 0.0
    %2635 = vmatpush1.msra.mxu0 %v1356
    %2636 = vmatprep.subr.mxu0 0.0
    %2637 = vmatpush1.msra.mxu0 %v1357
    %2638 = vmatprep.subr.mxu0 0.0
    %2639 = vmatpush1.msra.mxu0 %v1358
    %2640 = vmatprep.subr.mxu0 0.0
    %2641 = vmatpush1.msra.mxu0 %v1359
    %2642 = vmatprep.subr.mxu0 0.0
    %2643 = vmatpush1.msra.mxu0 %v1360
    %2644 = vmatprep.subr.mxu0 0.0
    %2645 = vmatpush1.msra.mxu0 %v1361
    %2646 = vmatprep.subr.mxu0 0.0
    %2647 = vmatpush1.msra.mxu0 %v1362
    %2648 = vmatprep.subr.mxu0 0.0
    %2649 = vmatpush1.msra.mxu0 %v1363
    %2650 = vmatprep.subr.mxu0 0.0
    %2651 = vmatpush1.msra.mxu0 %v1364
    %2652 = vmatprep.subr.mxu0 0.0
    %2653 = vmatpush1.msra.mxu0 %v1365
    %2654 = vmatprep.subr.mxu0 0.0
    %2655 = vmatpush1.msra.mxu0 %v1366
    %2656 = vmatprep.subr.mxu0 0.0
    %2657 = vmatpush1.msra.mxu0 %v1367
    %2658 = vmatprep.subr.mxu0 0.0
    %2659 = vmatpush1.msra.mxu0 %v1368
    %2660 = vmatprep.subr.mxu0 0.0
    %2661 = vmatpush1.msra.mxu0 %v1369
    %2662 = vmatprep.subr.mxu0 0.0
    %2663 = vmatpush1.msra.mxu0 %v1370
    %2664 = vmatprep.mubr.f32.mxu0 %v18
    %2665 = vmatmul.mubr.f32.gmra.mrb[0].mxu0 %v17
    %v2666 = vpop.f32.mrb[0].mxu0
    %v2667 = vadd.f32 %v2597, %v2666
    %v2668 = vpop.f32.mrb[0].mxu0
    %2669 = vdwg.mxu0
    %2670 = vmatprep.subr.mxu0 0.0
    %2671 = vmatpush1.msra.mxu0 %v1371
    %2672 = vmatprep.subr.mxu0 0.0
    %2673 = vmatpush1.msra.mxu0 %v1372
    %2674 = vmatprep.subr.mxu0 0.0
    %2675 = vmatpush1.msra.mxu0 %v1373
    %2676 = vmatprep.subr.mxu0 0.0
    %2677 = vmatpush1.msra.mxu0 %v1374
    %2678 = vmatprep.subr.mxu0 0.0
    %2679 = vmatpush1.msra.mxu0 %v1375
    %2680 = vmatprep.subr.mxu0 0.0
    %2681 = vmatpush1.msra.mxu0 %v1376
    %2682 = vmatprep.subr.mxu0 0.0
    %2683 = vmatpush1.msra.mxu0 %v1377
    %2684 = vmatprep.subr.mxu0 0.0
    %2685 = vmatpush1.msra.mxu0 %v1378
    %2686 = vmatprep.subr.mxu0 0.0
    %2687 = vmatpush1.msra.mxu0 %v1379
    %2688 = vmatprep.subr.mxu0 0.0
    %2689 = vmatpush1.msra.mxu0 %v1380
    %2690 = vmatprep.subr.mxu0 0.0
    %2691 = vmatpush1.msra.mxu0 %v1381
    %2692 = vmatprep.subr.mxu0 0.0
    %2693 = vmatpush1.msra.mxu0 %v1382
    %2694 = vmatprep.subr.mxu0 0.0
    %2695 = vmatpush1.msra.mxu0 %v1383
    %2696 = vmatprep.subr.mxu0 0.0
    %2697 = vmatpush1.msra.mxu0 %v1384
    %2698 = vmatprep.subr.mxu0 0.0
    %2699 = vmatpush1.msra.mxu0 %v1385
    %2700 = vmatprep.subr.mxu0 0.0
    %2701 = vmatpush1.msra.mxu0 %v1386
    %2702 = vmatprep.subr.mxu0 0.0
    %2703 = vmatpush1.msra.mxu0 %v1387
    %2704 = vmatprep.subr.mxu0 0.0
    %2705 = vmatpush1.msra.mxu0 %v1388
    %2706 = vmatprep.subr.mxu0 0.0
    %2707 = vmatpush1.msra.mxu0 %v1389
    %2708 = vmatprep.subr.mxu0 0.0
    %2709 = vmatpush1.msra.mxu0 %v1390
    %2710 = vmatprep.subr.mxu0 0.0
    %2711 = vmatpush1.msra.mxu0 %v1391
    %2712 = vmatprep.subr.mxu0 0.0
    %2713 = vmatpush1.msra.mxu0 %v1392
    %2714 = vmatprep.subr.mxu0 0.0
    %2715 = vmatpush1.msra.mxu0 %v1393
    %2716 = vmatprep.subr.mxu0 0.0
    %2717 = vmatpush1.msra.mxu0 %v1394
    %2718 = vmatprep.subr.mxu0 0.0
    %2719 = vmatpush1.msra.mxu0 %v1395
    %2720 = vmatprep.subr.mxu0 0.0
    %2721 = vmatpush1.msra.mxu0 %v1396
    %2722 = vmatprep.subr.mxu0 0.0
    %2723 = vmatpush1.msra.mxu0 %v1397
    %2724 = vmatprep.subr.mxu0 0.0
    %2725 = vmatpush1.msra.mxu0 %v1398
    %2726 = vmatprep.subr.mxu0 0.0
    %2727 = vmatpush1.msra.mxu0 %v1399
    %2728 = vmatprep.subr.mxu0 0.0
    %2729 = vmatpush1.msra.mxu0 %v1400
    %2730 = vmatprep.subr.mxu0 0.0
    %2731 = vmatpush1.msra.mxu0 %v1401
    %2732 = vmatprep.subr.mxu0 0.0
    %2733 = vmatpush1.msra.mxu0 %v1402
    %2734 = vmatprep.mubr.f32.mxu0 %v20
    %2735 = vmatmul.mubr.f32.gmra.mrb[0].mxu0 %v19
    %v2736 = vpop.f32.mrb[0].mxu0
    %v2737 = vadd.f32 %v2667, %v2736
    %v2738 = vpop.f32.mrb[0].mxu0
    %2739 = vdwg.mxu0
    %2740 = vmatprep.subr.mxu0 0.0
    %2741 = vmatpush1.msra.mxu0 %v1403
    %2742 = vmatprep.subr.mxu0 0.0
    %2743 = vmatpush1.msra.mxu0 %v1404
    %2744 = vmatprep.subr.mxu0 0.0
    %2745 = vmatpush1.msra.mxu0 %v1405
    %2746 = vmatprep.subr.mxu0 0.0
    %2747 = vmatpush1.msra.mxu0 %v1406
    %2748 = vmatprep.subr.mxu0 0.0
    %2749 = vmatpush1.msra.mxu0 %v1407
    %2750 = vmatprep.subr.mxu0 0.0
    %2751 = vmatpush1.msra.mxu0 %v1408
    %2752 = vmatprep.subr.mxu0 0.0
    %2753 = vmatpush1.msra.mxu0 %v1409
    %2754 = vmatprep.subr.mxu0 0.0
    %2755 = vmatpush1.msra.mxu0 %v1410
    %2756 = vmatprep.subr.mxu0 0.0
    %2757 = vmatpush1.msra.mxu0 %v1411
    %2758 = vmatprep.subr.mxu0 0.0
    %2759 = vmatpush1.msra.mxu0 %v1412
    %2760 = vmatprep.subr.mxu0 0.0
    %2761 = vmatpush1.msra.mxu0 %v1413
    %2762 = vmatprep.subr.mxu0 0.0
    %2763 = vmatpush1.msra.mxu0 %v1414
    %2764 = vmatprep.subr.mxu0 0.0
    %2765 = vmatpush1.msra.mxu0 %v1415
    %2766 = vmatprep.subr.mxu0 0.0
    %2767 = vmatpush1.msra.mxu0 %v1416
    %2768 = vmatprep.subr.mxu0 0.0
    %2769 = vmatpush1.msra.mxu0 %v1417
    %2770 = vmatprep.subr.mxu0 0.0
    %2771 = vmatpush1.msra.mxu0 %v1418
    %2772 = vmatprep.subr.mxu0 0.0
    %2773 = vmatpush1.msra.mxu0 %v1419
    %2774 = vmatprep.subr.mxu0 0.0
    %2775 = vmatpush1.msra.mxu0 %v1420
    %2776 = vmatprep.subr.mxu0 0.0
    %2777 = vmatpush1.msra.mxu0 %v1421
    %2778 = vmatprep.subr.mxu0 0.0
    %2779 = vmatpush1.msra.mxu0 %v1422
    %2780 = vmatprep.subr.mxu0 0.0
    %2781 = vmatpush1.msra.mxu0 %v1423
    %2782 = vmatprep.subr.mxu0 0.0
    %2783 = vmatpush1.msra.mxu0 %v1424
    %2784 = vmatprep.subr.mxu0 0.0
    %2785 = vmatpush1.msra.mxu0 %v1425
    %2786 = vmatprep.subr.mxu0 0.0
    %2787 = vmatpush1.msra.mxu0 %v1426
    %2788 = vmatprep.subr.mxu0 0.0
    %2789 = vmatpush1.msra.mxu0 %v1427
    %2790 = vmatprep.subr.mxu0 0.0
    %2791 = vmatpush1.msra.mxu0 %v1428
    %2792 = vmatprep.subr.mxu0 0.0
    %2793 = vmatpush1.msra.mxu0 %v1429
    %2794 = vmatprep.subr.mxu0 0.0
    %2795 = vmatpush1.msra.mxu0 %v1430
    %2796 = vmatprep.subr.mxu0 0.0
    %2797 = vmatpush1.msra.mxu0 %v1431
    %2798 = vmatprep.subr.mxu0 0.0
    %2799 = vmatpush1.msra.mxu0 %v1432
    %2800 = vmatprep.subr.mxu0 0.0
    %2801 = vmatpush1.msra.mxu0 %v1433
    %2802 = vmatprep.subr.mxu0 0.0
    %2803 = vmatpush1.msra.mxu0 %v1434
    %2804 = vmatprep.mubr.f32.mxu0 %v22
    %2805 = vmatmul.mubr.f32.gmra.mrb[0].mxu0 %v21
    %v2806 = vpop.f32.mrb[0].mxu0
    %v2807 = vadd.f32 %v2737, %v2806
    %v2808 = vpop.f32.mrb[0].mxu0
    %2809 = vdwg.mxu0
    %2810 = vmatprep.subr.mxu0 0.0
    %2811 = vmatpush1.msra.mxu0 %v1435
    %2812 = vmatprep.subr.mxu0 0.0
    %2813 = vmatpush1.msra.mxu0 %v1436
    %2814 = vmatprep.subr.mxu0 0.0
    %2815 = vmatpush1.msra.mxu0 %v1437
    %2816 = vmatprep.subr.mxu0 0.0
    %2817 = vmatpush1.msra.mxu0 %v1438
    %2818 = vmatprep.subr.mxu0 0.0
    %2819 = vmatpush1.msra.mxu0 %v1439
    %2820 = vmatprep.subr.mxu0 0.0
    %2821 = vmatpush1.msra.mxu0 %v1440
    %2822 = vmatprep.subr.mxu0 0.0
    %2823 = vmatpush1.msra.mxu0 %v1441
    %2824 = vmatprep.subr.mxu0 0.0
    %2825 = vmatpush1.msra.mxu0 %v1442
    %2826 = vmatprep.subr.mxu0 0.0
    %2827 = vmatpush1.msra.mxu0 %v1443
    %2828 = vmatprep.subr.mxu0 0.0
    %2829 = vmatpush1.msra.mxu0 %v1444
    %2830 = vmatprep.subr.mxu0 0.0
    %2831 = vmatpush1.msra.mxu0 %v1445
    %2832 = vmatprep.subr.mxu0 0.0
    %2833 = vmatpush1.msra.mxu0 %v1446
    %2834 = vmatprep.subr.mxu0 0.0
    %2835 = vmatpush1.msra.mxu0 %v1447
    %2836 = vmatprep.subr.mxu0 0.0
    %2837 = vmatpush1.msra.mxu0 %v1448
    %2838 = vmatprep.subr.mxu0 0.0
    %2839 = vmatpush1.msra.mxu0 %v1449
    %2840 = vmatprep.subr.mxu0 0.0
    %2841 = vmatpush1.msra.mxu0 %v1450
    %2842 = vmatprep.subr.mxu0 0.0
    %2843 = vmatpush1.msra.mxu0 %v1451
    %2844 = vmatprep.subr.mxu0 0.0
    %2845 = vmatpush1.msra.mxu0 %v1452
    %2846 = vmatprep.subr.mxu0 0.0
    %2847 = vmatpush1.msra.mxu0 %v1453
    %2848 = vmatprep.subr.mxu0 0.0
    %2849 = vmatpush1.msra.mxu0 %v1454
    %2850 = vmatprep.subr.mxu0 0.0
    %2851 = vmatpush1.msra.mxu0 %v1455
    %2852 = vmatprep.subr.mxu0 0.0
    %2853 = vmatpush1.msra.mxu0 %v1456
    %2854 = vmatprep.subr.mxu0 0.0
    %2855 = vmatpush1.msra.mxu0 %v1457
    %2856 = vmatprep.subr.mxu0 0.0
    %2857 = vmatpush1.msra.mxu0 %v1458
    %2858 = vmatprep.subr.mxu0 0.0
    %2859 = vmatpush1.msra.mxu0 %v1459
    %2860 = vmatprep.subr.mxu0 0.0
    %2861 = vmatpush1.msra.mxu0 %v1460
    %2862 = vmatprep.subr.mxu0 0.0
    %2863 = vmatpush1.msra.mxu0 %v1461
    %2864 = vmatprep.subr.mxu0 0.0
    %2865 = vmatpush1.msra.mxu0 %v1462
    %2866 = vmatprep.subr.mxu0 0.0
    %2867 = vmatpush1.msra.mxu0 %v1463
    %2868 = vmatprep.subr.mxu0 0.0
    %2869 = vmatpush1.msra.mxu0 %v1464
    %2870 = vmatprep.subr.mxu0 0.0
    %2871 = vmatpush1.msra.mxu0 %v1465
    %2872 = vmatprep.subr.mxu0 0.0
    %2873 = vmatpush1.msra.mxu0 %v1466
    %2874 = vmatprep.mubr.f32.mxu0 %v24
    %2875 = vmatmul.mubr.f32.gmra.mrb[0].mxu0 %v23
    %v2876 = vpop.f32.mrb[0].mxu0
    %v2877 = vadd.f32 %v2807, %v2876
    %v2878 = vpop.f32.mrb[0].mxu0
    %2879 = vdwg.mxu0
    %2880 = vmatprep.subr.mxu0 0.0
    %2881 = vmatpush1.msra.mxu0 %v1467
    %2882 = vmatprep.subr.mxu0 0.0
    %2883 = vmatpush1.msra.mxu0 %v1468
    %2884 = vmatprep.subr.mxu0 0.0
    %2885 = vmatpush1.msra.mxu0 %v1469
    %2886 = vmatprep.subr.mxu0 0.0
    %2887 = vmatpush1.msra.mxu0 %v1470
    %2888 = vmatprep.subr.mxu0 0.0
    %2889 = vmatpush1.msra.mxu0 %v1471
    %2890 = vmatprep.subr.mxu0 0.0
    %2891 = vmatpush1.msra.mxu0 %v1472
    %2892 = vmatprep.subr.mxu0 0.0
    %2893 = vmatpush1.msra.mxu0 %v1473
    %2894 = vmatprep.subr.mxu0 0.0
    %2895 = vmatpush1.msra.mxu0 %v1474
    %2896 = vmatprep.subr.mxu0 0.0
    %2897 = vmatpush1.msra.mxu0 %v1475
    %2898 = vmatprep.subr.mxu0 0.0
    %2899 = vmatpush1.msra.mxu0 %v1476
    %2900 = vmatprep.subr.mxu0 0.0
    %2901 = vmatpush1.msra.mxu0 %v1477
    %2902 = vmatprep.subr.mxu0 0.0
    %2903 = vmatpush1.msra.mxu0 %v1478
    %2904 = vmatprep.subr.mxu0 0.0
    %2905 = vmatpush1.msra.mxu0 %v1479
    %2906 = vmatprep.subr.mxu0 0.0
    %2907 = vmatpush1.msra.mxu0 %v1480
    %2908 = vmatprep.subr.mxu0 0.0
    %2909 = vmatpush1.msra.mxu0 %v1481
    %2910 = vmatprep.subr.mxu0 0.0
    %2911 = vmatpush1.msra.mxu0 %v1482
    %2912 = vmatprep.subr.mxu0 0.0
    %2913 = vmatpush1.msra.mxu0 %v1483
    %2914 = vmatprep.subr.mxu0 0.0
    %2915 = vmatpush1.msra.mxu0 %v1484
    %2916 = vmatprep.subr.mxu0 0.0
    %2917 = vmatpush1.msra.mxu0 %v1485
    %2918 = vmatprep.subr.mxu0 0.0
    %2919 = vmatpush1.msra.mxu0 %v1486
    %2920 = vmatprep.subr.mxu0 0.0
    %2921 = vmatpush1.msra.mxu0 %v1487
    %2922 = vmatprep.subr.mxu0 0.0
    %2923 = vmatpush1.msra.mxu0 %v1488
    %2924 = vmatprep.subr.mxu0 0.0
    %2925 = vmatpush1.msra.mxu0 %v1489
    %2926 = vmatprep.subr.mxu0 0.0
    %2927 = vmatpush1.msra.mxu0 %v1490
    %2928 = vmatprep.subr.mxu0 0.0
    %2929 = vmatpush1.msra.mxu0 %v1491
    %2930 = vmatprep.subr.mxu0 0.0
    %2931 = vmatpush1.msra.mxu0 %v1492
    %2932 = vmatprep.subr.mxu0 0.0
    %2933 = vmatpush1.msra.mxu0 %v1493
    %2934 = vmatprep.subr.mxu0 0.0
    %2935 = vmatpush1.msra.mxu0 %v1494
    %2936 = vmatprep.subr.mxu0 0.0
    %2937 = vmatpush1.msra.mxu0 %v1495
    %2938 = vmatprep.subr.mxu0 0.0
    %2939 = vmatpush1.msra.mxu0 %v1496
    %2940 = vmatprep.subr.mxu0 0.0
    %2941 = vmatpush1.msra.mxu0 %v1497
    %2942 = vmatprep.subr.mxu0 0.0
    %2943 = vmatpush1.msra.mxu0 %v1498
    %2944 = vmatprep.mubr.f32.mxu0 %v26
    %2945 = vmatmul.mubr.f32.gmra.mrb[0].mxu0 %v25
    %v2946 = vpop.f32.mrb[0].mxu0
    %v2947 = vadd.f32 %v2877, %v2946
    %v2948 = vpop.f32.mrb[0].mxu0
    %2949 = vdwg.mxu0
    %2950 = vmatprep.subr.mxu0 0.0
    %2951 = vmatpush1.msra.mxu0 %v1499
    %2952 = vmatprep.subr.mxu0 0.0
    %2953 = vmatpush1.msra.mxu0 %v1500
    %2954 = vmatprep.subr.mxu0 0.0
    %2955 = vmatpush1.msra.mxu0 %v1501
    %2956 = vmatprep.subr.mxu0 0.0
    %2957 = vmatpush1.msra.mxu0 %v1502
    %2958 = vmatprep.subr.mxu0 0.0
    %2959 = vmatpush1.msra.mxu0 %v1503
    %2960 = vmatprep.subr.mxu0 0.0
    %2961 = vmatpush1.msra.mxu0 %v1504
    %2962 = vmatprep.subr.mxu0 0.0
    %2963 = vmatpush1.msra.mxu0 %v1505
    %2964 = vmatprep.subr.mxu0 0.0
    %2965 = vmatpush1.msra.mxu0 %v1506
    %2966 = vmatprep.subr.mxu0 0.0
    %2967 = vmatpush1.msra.mxu0 %v1507
    %2968 = vmatprep.subr.mxu0 0.0
    %2969 = vmatpush1.msra.mxu0 %v1508
    %2970 = vmatprep.subr.mxu0 0.0
    %2971 = vmatpush1.msra.mxu0 %v1509
    %2972 = vmatprep.subr.mxu0 0.0
    %2973 = vmatpush1.msra.mxu0 %v1510
    %2974 = vmatprep.subr.mxu0 0.0
    %2975 = vmatpush1.msra.mxu0 %v1511
    %2976 = vmatprep.subr.mxu0 0.0
    %2977 = vmatpush1.msra.mxu0 %v1512
    %2978 = vmatprep.subr.mxu0 0.0
    %2979 = vmatpush1.msra.mxu0 %v1513
    %2980 = vmatprep.subr.mxu0 0.0
    %2981 = vmatpush1.msra.mxu0 %v1514
    %2982 = vmatprep.subr.mxu0 0.0
    %2983 = vmatpush1.msra.mxu0 %v1515
    %2984 = vmatprep.subr.mxu0 0.0
    %2985 = vmatpush1.msra.mxu0 %v1516
    %2986 = vmatprep.subr.mxu0 0.0
    %2987 = vmatpush1.msra.mxu0 %v1517
    %2988 = vmatprep.subr.mxu0 0.0
    %2989 = vmatpush1.msra.mxu0 %v1518
    %2990 = vmatprep.subr.mxu0 0.0
    %2991 = vmatpush1.msra.mxu0 %v1519
    %2992 = vmatprep.subr.mxu0 0.0
    %2993 = vmatpush1.msra.mxu0 %v1520
    %2994 = vmatprep.subr.mxu0 0.0
    %2995 = vmatpush1.msra.mxu0 %v1521
    %2996 = vmatprep.subr.mxu0 0.0
    %2997 = vmatpush1.msra.mxu0 %v1522
    %2998 = vmatprep.subr.mxu0 0.0
    %2999 = vmatpush1.msra.mxu0 %v1523
    %3000 = vmatprep.subr.mxu0 0.0
    %3001 = vmatpush1.msra.mxu0 %v1524
    %3002 = vmatprep.subr.mxu0 0.0
    %3003 = vmatpush1.msra.mxu0 %v1525
    %3004 = vmatprep.subr.mxu0 0.0
    %3005 = vmatpush1.msra.mxu0 %v1526
    %3006 = vmatprep.subr.mxu0 0.0
    %3007 = vmatpush1.msra.mxu0 %v1527
    %3008 = vmatprep.subr.mxu0 0.0
    %3009 = vmatpush1.msra.mxu0 %v1528
    %3010 = vmatprep.subr.mxu0 0.0
    %3011 = vmatpush1.msra.mxu0 %v1529
    %3012 = vmatprep.subr.mxu0 0.0
    %3013 = vmatpush1.msra.mxu0 %v1530
    %3014 = vmatprep.mubr.f32.mxu0 %v28
    %3015 = vmatmul.mubr.f32.gmra.mrb[0].mxu0 %v27
    %v3016 = vpop.f32.mrb[0].mxu0
    %v3017 = vadd.f32 %v2947, %v3016
    %v3018 = vpop.f32.mrb[0].mxu0
    %3019 = vdwg.mxu0
    %3020 = vmatprep.subr.mxu0 0.0
    %3021 = vmatpush1.msra.mxu0 %v1531
    %3022 = vmatprep.subr.mxu0 0.0
    %3023 = vmatpush1.msra.mxu0 %v1532
    %3024 = vmatprep.subr.mxu0 0.0
    %3025 = vmatpush1.msra.mxu0 %v1533
    %3026 = vmatprep.subr.mxu0 0.0
    %3027 = vmatpush1.msra.mxu0 %v1534
    %3028 = vmatprep.subr.mxu0 0.0
    %3029 = vmatpush1.msra.mxu0 %v1535
    %3030 = vmatprep.subr.mxu0 0.0
    %3031 = vmatpush1.msra.mxu0 %v1536
    %3032 = vmatprep.subr.mxu0 0.0
    %3033 = vmatpush1.msra.mxu0 %v1537
    %3034 = vmatprep.subr.mxu0 0.0
    %3035 = vmatpush1.msra.mxu0 %v1538
    %3036 = vmatprep.subr.mxu0 0.0
    %3037 = vmatpush1.msra.mxu0 %v1539
    %3038 = vmatprep.subr.mxu0 0.0
    %3039 = vmatpush1.msra.mxu0 %v1540
    %3040 = vmatprep.subr.mxu0 0.0
    %3041 = vmatpush1.msra.mxu0 %v1541
    %3042 = vmatprep.subr.mxu0 0.0
    %3043 = vmatpush1.msra.mxu0 %v1542
    %3044 = vmatprep.subr.mxu0 0.0
    %3045 = vmatpush1.msra.mxu0 %v1543
    %3046 = vmatprep.subr.mxu0 0.0
    %3047 = vmatpush1.msra.mxu0 %v1544
    %3048 = vmatprep.subr.mxu0 0.0
    %3049 = vmatpush1.msra.mxu0 %v1545
    %3050 = vmatprep.subr.mxu0 0.0
    %3051 = vmatpush1.msra.mxu0 %v1546
    %3052 = vmatprep.subr.mxu0 0.0
    %3053 = vmatpush1.msra.mxu0 %v1547
    %3054 = vmatprep.subr.mxu0 0.0
    %3055 = vmatpush1.msra.mxu0 %v1548
    %3056 = vmatprep.subr.mxu0 0.0
    %3057 = vmatpush1.msra.mxu0 %v1549
    %3058 = vmatprep.subr.mxu0 0.0
    %3059 = vmatpush1.msra.mxu0 %v1550
    %3060 = vmatprep.subr.mxu0 0.0
    %3061 = vmatpush1.msra.mxu0 %v1551
    %3062 = vmatprep.subr.mxu0 0.0
    %3063 = vmatpush1.msra.mxu0 %v1552
    %3064 = vmatprep.subr.mxu0 0.0
    %3065 = vmatpush1.msra.mxu0 %v1553
    %3066 = vmatprep.subr.mxu0 0.0
    %3067 = vmatpush1.msra.mxu0 %v1554
    %3068 = vmatprep.subr.mxu0 0.0
    %3069 = vmatpush1.msra.mxu0 %v1555
    %3070 = vmatprep.subr.mxu0 0.0
    %3071 = vmatpush1.msra.mxu0 %v1556
    %3072 = vmatprep.subr.mxu0 0.0
    %3073 = vmatpush1.msra.mxu0 %v1557
    %3074 = vmatprep.subr.mxu0 0.0
    %3075 = vmatpush1.msra.mxu0 %v1558
    %3076 = vmatprep.subr.mxu0 0.0
    %3077 = vmatpush1.msra.mxu0 %v1559
    %3078 = vmatprep.subr.mxu0 0.0
    %3079 = vmatpush1.msra.mxu0 %v1560
    %3080 = vmatprep.subr.mxu0 0.0
    %3081 = vmatpush1.msra.mxu0 %v1561
    %3082 = vmatprep.subr.mxu0 0.0
    %3083 = vmatpush1.msra.mxu0 %v1562
    %3084 = vmatprep.mubr.f32.mxu0 %v30
    %3085 = vmatmul.mubr.f32.gmra.mrb[0].mxu0 %v29
    %v3086 = vpop.f32.mrb[0].mxu0
    %v3087 = vadd.f32 %v3017, %v3086
    %v3088 = vpop.f32.mrb[0].mxu0
    %3089 = vdwg.mxu0
    %3090 = vmatprep.subr.mxu0 0.0
    %3091 = vmatpush1.msra.mxu0 %v1563
    %3092 = vmatprep.subr.mxu0 0.0
    %3093 = vmatpush1.msra.mxu0 %v1564
    %3094 = vmatprep.subr.mxu0 0.0
    %3095 = vmatpush1.msra.mxu0 %v1565
    %3096 = vmatprep.subr.mxu0 0.0
    %3097 = vmatpush1.msra.mxu0 %v1566
    %3098 = vmatprep.subr.mxu0 0.0
    %3099 = vmatpush1.msra.mxu0 %v1567
    %3100 = vmatprep.subr.mxu0 0.0
    %3101 = vmatpush1.msra.mxu0 %v1568
    %3102 = vmatprep.subr.mxu0 0.0
    %3103 = vmatpush1.msra.mxu0 %v1569
    %3104 = vmatprep.subr.mxu0 0.0
    %3105 = vmatpush1.msra.mxu0 %v1570
    %3106 = vmatprep.subr.mxu0 0.0
    %3107 = vmatpush1.msra.mxu0 %v1571
    %3108 = vmatprep.subr.mxu0 0.0
    %3109 = vmatpush1.msra.mxu0 %v1572
    %3110 = vmatprep.subr.mxu0 0.0
    %3111 = vmatpush1.msra.mxu0 %v1573
    %3112 = vmatprep.subr.mxu0 0.0
    %3113 = vmatpush1.msra.mxu0 %v1574
    %3114 = vmatprep.subr.mxu0 0.0
    %3115 = vmatpush1.msra.mxu0 %v1575
    %3116 = vmatprep.subr.mxu0 0.0
    %3117 = vmatpush1.msra.mxu0 %v1576
    %3118 = vmatprep.subr.mxu0 0.0
    %3119 = vmatpush1.msra.mxu0 %v1577
    %3120 = vmatprep.subr.mxu0 0.0
    %3121 = vmatpush1.msra.mxu0 %v1578
    %3122 = vmatprep.subr.mxu0 0.0
    %3123 = vmatpush1.msra.mxu0 %v1579
    %3124 = vmatprep.subr.mxu0 0.0
    %3125 = vmatpush1.msra.mxu0 %v1580
    %3126 = vmatprep.subr.mxu0 0.0
    %3127 = vmatpush1.msra.mxu0 %v1581
    %3128 = vmatprep.subr.mxu0 0.0
    %3129 = vmatpush1.msra.mxu0 %v1582
    %3130 = vmatprep.subr.mxu0 0.0
    %3131 = vmatpush1.msra.mxu0 %v1583
    %3132 = vmatprep.subr.mxu0 0.0
    %3133 = vmatpush1.msra.mxu0 %v1584
    %3134 = vmatprep.subr.mxu0 0.0
    %3135 = vmatpush1.msra.mxu0 %v1585
    %3136 = vmatprep.subr.mxu0 0.0
    %3137 = vmatpush1.msra.mxu0 %v1586
    %3138 = vmatprep.subr.mxu0 0.0
    %3139 = vmatpush1.msra.mxu0 %v1587
    %3140 = vmatprep.subr.mxu0 0.0
    %3141 = vmatpush1.msra.mxu0 %v1588
    %3142 = vmatprep.subr.mxu0 0.0
    %3143 = vmatpush1.msra.mxu0 %v1589
    %3144 = vmatprep.subr.mxu0 0.0
    %3145 = vmatpush1.msra.mxu0 %v1590
    %3146 = vmatprep.subr.mxu0 0.0
    %3147 = vmatpush1.msra.mxu0 %v1591
    %3148 = vmatprep.subr.mxu0 0.0
    %3149 = vmatpush1.msra.mxu0 %v1592
    %3150 = vmatprep.subr.mxu0 0.0
    %3151 = vmatpush1.msra.mxu0 %v1593
    %3152 = vmatprep.subr.mxu0 0.0
    %3153 = vmatpush1.msra.mxu0 %v1594
    %3154 = vmatprep.mubr.f32.mxu0 %v32
    %3155 = vmatmul.mubr.f32.gmra.mrb[0].mxu0 %v31
    %v3156 = vpop.f32.mrb[0].mxu0
    %v3157 = vadd.f32 %v3087, %v3156
    %v3158 = vpop.f32.mrb[0].mxu0
    %3159 = vdwg.mxu0
    %3160 = vmatprep.subr.mxu0 0.0
    %3161 = vmatpush1.msra.mxu0 %v1595
    %3162 = vmatprep.subr.mxu0 0.0
    %3163 = vmatpush1.msra.mxu0 %v1596
    %3164 = vmatprep.subr.mxu0 0.0
    %3165 = vmatpush1.msra.mxu0 %v1597
    %3166 = vmatprep.subr.mxu0 0.0
    %3167 = vmatpush1.msra.mxu0 %v1598
    %3168 = vmatprep.subr.mxu0 0.0
    %3169 = vmatpush1.msra.mxu0 %v1599
    %3170 = vmatprep.subr.mxu0 0.0
    %3171 = vmatpush1.msra.mxu0 %v1600
    %3172 = vmatprep.subr.mxu0 0.0
    %3173 = vmatpush1.msra.mxu0 %v1601
    %3174 = vmatprep.subr.mxu0 0.0
    %3175 = vmatpush1.msra.mxu0 %v1602
    %3176 = vmatprep.subr.mxu0 0.0
    %3177 = vmatpush1.msra.mxu0 %v1603
    %3178 = vmatprep.subr.mxu0 0.0
    %3179 = vmatpush1.msra.mxu0 %v1604
    %3180 = vmatprep.subr.mxu0 0.0
    %3181 = vmatpush1.msra.mxu0 %v1605
    %3182 = vmatprep.subr.mxu0 0.0
    %3183 = vmatpush1.msra.mxu0 %v1606
    %3184 = vmatprep.subr.mxu0 0.0
    %3185 = vmatpush1.msra.mxu0 %v1607
    %3186 = vmatprep.subr.mxu0 0.0
    %3187 = vmatpush1.msra.mxu0 %v1608
    %3188 = vmatprep.subr.mxu0 0.0
    %3189 = vmatpush1.msra.mxu0 %v1609
    %3190 = vmatprep.subr.mxu0 0.0
    %3191 = vmatpush1.msra.mxu0 %v1610
    %3192 = vmatprep.subr.mxu0 0.0
    %3193 = vmatpush1.msra.mxu0 %v1611
    %3194 = vmatprep.subr.mxu0 0.0
    %3195 = vmatpush1.msra.mxu0 %v1612
    %3196 = vmatprep.subr.mxu0 0.0
    %3197 = vmatpush1.msra.mxu0 %v1613
    %3198 = vmatprep.subr.mxu0 0.0
    %3199 = vmatpush1.msra.mxu0 %v1614
    %3200 = vmatprep.subr.mxu0 0.0
    %3201 = vmatpush1.msra.mxu0 %v1615
    %3202 = vmatprep.subr.mxu0 0.0
    %3203 = vmatpush1.msra.mxu0 %v1616
    %3204 = vmatprep.subr.mxu0 0.0
    %3205 = vmatpush1.msra.mxu0 %v1617
    %3206 = vmatprep.subr.mxu0 0.0
    %3207 = vmatpush1.msra.mxu0 %v1618
    %3208 = vmatprep.subr.mxu0 0.0
    %3209 = vmatpush1.msra.mxu0 %v1619
    %3210 = vmatprep.subr.mxu0 0.0
    %3211 = vmatpush1.msra.mxu0 %v1620
    %3212 = vmatprep.subr.mxu0 0.0
    %3213 = vmatpush1.msra.mxu0 %v1621
    %3214 = vmatprep.subr.mxu0 0.0
    %3215 = vmatpush1.msra.mxu0 %v1622
    %3216 = vmatprep.subr.mxu0 0.0
    %3217 = vmatpush1.msra.mxu0 %v1623
    %3218 = vmatprep.subr.mxu0 0.0
    %3219 = vmatpush1.msra.mxu0 %v1624
    %3220 = vmatprep.subr.mxu0 0.0
    %3221 = vmatpush1.msra.mxu0 %v1625
    %3222 = vmatprep.subr.mxu0 0.0
    %3223 = vmatpush1.msra.mxu0 %v1626
    %3224 = vmatprep.mubr.f32.mxu0 %v34
    %3225 = vmatmul.mubr.f32.gmra.mrb[0].mxu0 %v33
    %v3226 = vpop.f32.mrb[0].mxu0
    %v3227 = vadd.f32 %v3157, %v3226
    %v3228 = vpop.f32.mrb[0].mxu0
    %3229 = vdwg.mxu0
    %3230 = vmatprep.subr.mxu0 0.0
    %3231 = vmatpush1.msra.mxu0 %v1627
    %3232 = vmatprep.subr.mxu0 0.0
    %3233 = vmatpush1.msra.mxu0 %v1628
    %3234 = vmatprep.subr.mxu0 0.0
    %3235 = vmatpush1.msra.mxu0 %v1629
    %3236 = vmatprep.subr.mxu0 0.0
    %3237 = vmatpush1.msra.mxu0 %v1630
    %3238 = vmatprep.subr.mxu0 0.0
    %3239 = vmatpush1.msra.mxu0 %v1631
    %3240 = vmatprep.subr.mxu0 0.0
    %3241 = vmatpush1.msra.mxu0 %v1632
    %3242 = vmatprep.subr.mxu0 0.0
    %3243 = vmatpush1.msra.mxu0 %v1633
    %3244 = vmatprep.subr.mxu0 0.0
    %3245 = vmatpush1.msra.mxu0 %v1634
    %3246 = vmatprep.subr.mxu0 0.0
    %3247 = vmatpush1.msra.mxu0 %v1635
    %3248 = vmatprep.subr.mxu0 0.0
    %3249 = vmatpush1.msra.mxu0 %v1636
    %3250 = vmatprep.subr.mxu0 0.0
    %3251 = vmatpush1.msra.mxu0 %v1637
    %3252 = vmatprep.subr.mxu0 0.0
    %3253 = vmatpush1.msra.mxu0 %v1638
    %3254 = vmatprep.subr.mxu0 0.0
    %3255 = vmatpush1.msra.mxu0 %v1639
    %3256 = vmatprep.subr.mxu0 0.0
    %3257 = vmatpush1.msra.mxu0 %v1640
    %3258 = vmatprep.subr.mxu0 0.0
    %3259 = vmatpush1.msra.mxu0 %v1641
    %3260 = vmatprep.subr.mxu0 0.0
    %3261 = vmatpush1.msra.mxu0 %v1642
    %3262 = vmatprep.subr.mxu0 0.0
    %3263 = vmatpush1.msra.mxu0 %v1643
    %3264 = vmatprep.subr.mxu0 0.0
    %3265 = vmatpush1.msra.mxu0 %v1644
    %3266 = vmatprep.subr.mxu0 0.0
    %3267 = vmatpush1.msra.mxu0 %v1645
    %3268 = vmatprep.subr.mxu0 0.0
    %3269 = vmatpush1.msra.mxu0 %v1646
    %3270 = vmatprep.subr.mxu0 0.0
    %3271 = vmatpush1.msra.mxu0 %v1647
    %3272 = vmatprep.subr.mxu0 0.0
    %3273 = vmatpush1.msra.mxu0 %v1648
    %3274 = vmatprep.subr.mxu0 0.0
    %3275 = vmatpush1.msra.mxu0 %v1649
    %3276 = vmatprep.subr.mxu0 0.0
    %3277 = vmatpush1.msra.mxu0 %v1650
    %3278 = vmatprep.subr.mxu0 0.0
    %3279 = vmatpush1.msra.mxu0 %v1651
    %3280 = vmatprep.subr.mxu0 0.0
    %3281 = vmatpush1.msra.mxu0 %v1652
    %3282 = vmatprep.subr.mxu0 0.0
    %3283 = vmatpush1.msra.mxu0 %v1653
    %3284 = vmatprep.subr.mxu0 0.0
    %3285 = vmatpush1.msra.mxu0 %v1654
    %3286 = vmatprep.subr.mxu0 0.0
    %3287 = vmatpush1.msra.mxu0 %v1655
    %3288 = vmatprep.subr.mxu0 0.0
    %3289 = vmatpush1.msra.mxu0 %v1656
    %3290 = vmatprep.subr.mxu0 0.0
    %3291 = vmatpush1.msra.mxu0 %v1657
    %3292 = vmatprep.subr.mxu0 0.0
    %3293 = vmatpush1.msra.mxu0 %v1658
    %3294 = vmatprep.mubr.f32.mxu0 %v36
    %3295 = vmatmul.mubr.f32.gmra.mrb[0].mxu0 %v35
    %v3296 = vpop.f32.mrb[0].mxu0
    %v3297 = vadd.f32 %v3227, %v3296
    %v3298 = vpop.f32.mrb[0].mxu0
    %3299 = vdwg.mxu0
    %3300 = vmatprep.subr.mxu0 0.0
    %3301 = vmatpush1.msra.mxu0 %v1659
    %3302 = vmatprep.subr.mxu0 0.0
    %3303 = vmatpush1.msra.mxu0 %v1660
    %3304 = vmatprep.subr.mxu0 0.0
    %3305 = vmatpush1.msra.mxu0 %v1661
    %3306 = vmatprep.subr.mxu0 0.0
    %3307 = vmatpush1.msra.mxu0 %v1662
    %3308 = vmatprep.subr.mxu0 0.0
    %3309 = vmatpush1.msra.mxu0 %v1663
    %3310 = vmatprep.subr.mxu0 0.0
    %3311 = vmatpush1.msra.mxu0 %v1664
    %3312 = vmatprep.subr.mxu0 0.0
    %3313 = vmatpush1.msra.mxu0 %v1665
    %3314 = vmatprep.subr.mxu0 0.0
    %3315 = vmatpush1.msra.mxu0 %v1666
    %3316 = vmatprep.subr.mxu0 0.0
    %3317 = vmatpush1.msra.mxu0 %v1667
    %3318 = vmatprep.subr.mxu0 0.0
    %3319 = vmatpush1.msra.mxu0 %v1668
    %3320 = vmatprep.subr.mxu0 0.0
    %3321 = vmatpush1.msra.mxu0 %v1669
    %3322 = vmatprep.subr.mxu0 0.0
    %3323 = vmatpush1.msra.mxu0 %v1670
    %3324 = vmatprep.subr.mxu0 0.0
    %3325 = vmatpush1.msra.mxu0 %v1671
    %3326 = vmatprep.subr.mxu0 0.0
    %3327 = vmatpush1.msra.mxu0 %v1672
    %3328 = vmatprep.subr.mxu0 0.0
    %3329 = vmatpush1.msra.mxu0 %v1673
    %3330 = vmatprep.subr.mxu0 0.0
    %3331 = vmatpush1.msra.mxu0 %v1674
    %3332 = vmatprep.subr.mxu0 0.0
    %3333 = vmatpush1.msra.mxu0 %v1675
    %3334 = vmatprep.subr.mxu0 0.0
    %3335 = vmatpush1.msra.mxu0 %v1676
    %3336 = vmatprep.subr.mxu0 0.0
    %3337 = vmatpush1.msra.mxu0 %v1677
    %3338 = vmatprep.subr.mxu0 0.0
    %3339 = vmatpush1.msra.mxu0 %v1678
    %3340 = vmatprep.subr.mxu0 0.0
    %3341 = vmatpush1.msra.mxu0 %v1679
    %3342 = vmatprep.subr.mxu0 0.0
    %3343 = vmatpush1.msra.mxu0 %v1680
    %3344 = vmatprep.subr.mxu0 0.0
    %3345 = vmatpush1.msra.mxu0 %v1681
    %3346 = vmatprep.subr.mxu0 0.0
    %3347 = vmatpush1.msra.mxu0 %v1682
    %3348 = vmatprep.subr.mxu0 0.0
    %3349 = vmatpush1.msra.mxu0 %v1683
    %3350 = vmatprep.subr.mxu0 0.0
    %3351 = vmatpush1.msra.mxu0 %v1684
    %3352 = vmatprep.subr.mxu0 0.0
    %3353 = vmatpush1.msra.mxu0 %v1685
    %3354 = vmatprep.subr.mxu0 0.0
    %3355 = vmatpush1.msra.mxu0 %v1686
    %3356 = vmatprep.subr.mxu0 0.0
    %3357 = vmatpush1.msra.mxu0 %v1687
    %3358 = vmatprep.subr.mxu0 0.0
    %3359 = vmatpush1.msra.mxu0 %v1688
    %3360 = vmatprep.subr.mxu0 0.0
    %3361 = vmatpush1.msra.mxu0 %v1689
    %3362 = vmatprep.subr.mxu0 0.0
    %3363 = vmatpush1.msra.mxu0 %v1690
    %3364 = vmatprep.mubr.f32.mxu0 %v38
    %3365 = vmatmul.mubr.f32.gmra.mrb[0].mxu0 %v37
    %v3366 = vpop.f32.mrb[0].mxu0
    %v3367 = vadd.f32 %v3297, %v3366
    %v3368 = vpop.f32.mrb[0].mxu0
    %3369 = vdwg.mxu0
    %3370 = vmatprep.subr.mxu0 0.0
    %3371 = vmatpush1.msra.mxu0 %v1691
    %3372 = vmatprep.subr.mxu0 0.0
    %3373 = vmatpush1.msra.mxu0 %v1692
    %3374 = vmatprep.subr.mxu0 0.0
    %3375 = vmatpush1.msra.mxu0 %v1693
    %3376 = vmatprep.subr.mxu0 0.0
    %3377 = vmatpush1.msra.mxu0 %v1694
    %3378 = vmatprep.subr.mxu0 0.0
    %3379 = vmatpush1.msra.mxu0 %v1695
    %3380 = vmatprep.subr.mxu0 0.0
    %3381 = vmatpush1.msra.mxu0 %v1696
    %3382 = vmatprep.subr.mxu0 0.0
    %3383 = vmatpush1.msra.mxu0 %v1697
    %3384 = vmatprep.subr.mxu0 0.0
    %3385 = vmatpush1.msra.mxu0 %v1698
    %3386 = vmatprep.subr.mxu0 0.0
    %3387 = vmatpush1.msra.mxu0 %v1699
    %3388 = vmatprep.subr.mxu0 0.0
    %3389 = vmatpush1.msra.mxu0 %v1700
    %3390 = vmatprep.subr.mxu0 0.0
    %3391 = vmatpush1.msra.mxu0 %v1701
    %3392 = vmatprep.subr.mxu0 0.0
    %3393 = vmatpush1.msra.mxu0 %v1702
    %3394 = vmatprep.subr.mxu0 0.0
    %3395 = vmatpush1.msra.mxu0 %v1703
    %3396 = vmatprep.subr.mxu0 0.0
    %3397 = vmatpush1.msra.mxu0 %v1704
    %3398 = vmatprep.subr.mxu0 0.0
    %3399 = vmatpush1.msra.mxu0 %v1705
    %3400 = vmatprep.subr.mxu0 0.0
    %3401 = vmatpush1.msra.mxu0 %v1706
    %3402 = vmatprep.subr.mxu0 0.0
    %3403 = vmatpush1.msra.mxu0 %v1707
    %3404 = vmatprep.subr.mxu0 0.0
    %3405 = vmatpush1.msra.mxu0 %v1708
    %3406 = vmatprep.subr.mxu0 0.0
    %3407 = vmatpush1.msra.mxu0 %v1709
    %3408 = vmatprep.subr.mxu0 0.0
    %3409 = vmatpush1.msra.mxu0 %v1710
    %3410 = vmatprep.subr.mxu0 0.0
    %3411 = vmatpush1.msra.mxu0 %v1711
    %3412 = vmatprep.subr.mxu0 0.0
    %3413 = vmatpush1.msra.mxu0 %v1712
    %3414 = vmatprep.subr.mxu0 0.0
    %3415 = vmatpush1.msra.mxu0 %v1713
    %3416 = vmatprep.subr.mxu0 0.0
    %3417 = vmatpush1.msra.mxu0 %v1714
    %3418 = vmatprep.subr.mxu0 0.0
    %3419 = vmatpush1.msra.mxu0 %v1715
    %3420 = vmatprep.subr.mxu0 0.0
    %3421 = vmatpush1.msra.mxu0 %v1716
    %3422 = vmatprep.subr.mxu0 0.0
    %3423 = vmatpush1.msra.mxu0 %v1717
    %3424 = vmatprep.subr.mxu0 0.0
    %3425 = vmatpush1.msra.mxu0 %v1718
    %3426 = vmatprep.subr.mxu0 0.0
    %3427 = vmatpush1.msra.mxu0 %v1719
    %3428 = vmatprep.subr.mxu0 0.0
    %3429 = vmatpush1.msra.mxu0 %v1720
    %3430 = vmatprep.subr.mxu0 0.0
    %3431 = vmatpush1.msra.mxu0 %v1721
    %3432 = vmatprep.subr.mxu0 0.0
    %3433 = vmatpush1.msra.mxu0 %v1722
    %3434 = vmatprep.mubr.f32.mxu0 %v40
    %3435 = vmatmul.mubr.f32.gmra.mrb[0].mxu0 %v39
    %v3436 = vpop.f32.mrb[0].mxu0
    %v3437 = vadd.f32 %v3367, %v3436
    %v3438 = vpop.f32.mrb[0].mxu0
    %3439 = vdwg.mxu0
    %3440 = vmatprep.subr.mxu0 0.0
    %3441 = vmatpush1.msra.mxu0 %v1723
    %3442 = vmatprep.subr.mxu0 0.0
    %3443 = vmatpush1.msra.mxu0 %v1724
    %3444 = vmatprep.subr.mxu0 0.0
    %3445 = vmatpush1.msra.mxu0 %v1725
    %3446 = vmatprep.subr.mxu0 0.0
    %3447 = vmatpush1.msra.mxu0 %v1726
    %3448 = vmatprep.subr.mxu0 0.0
    %3449 = vmatpush1.msra.mxu0 %v1727
    %3450 = vmatprep.subr.mxu0 0.0
    %3451 = vmatpush1.msra.mxu0 %v1728
    %3452 = vmatprep.subr.mxu0 0.0
    %3453 = vmatpush1.msra.mxu0 %v1729
    %3454 = vmatprep.subr.mxu0 0.0
    %3455 = vmatpush1.msra.mxu0 %v1730
    %3456 = vmatprep.subr.mxu0 0.0
    %3457 = vmatpush1.msra.mxu0 %v1731
    %3458 = vmatprep.subr.mxu0 0.0
    %3459 = vmatpush1.msra.mxu0 %v1732
    %3460 = vmatprep.subr.mxu0 0.0
    %3461 = vmatpush1.msra.mxu0 %v1733
    %3462 = vmatprep.subr.mxu0 0.0
    %3463 = vmatpush1.msra.mxu0 %v1734
    %3464 = vmatprep.subr.mxu0 0.0
    %3465 = vmatpush1.msra.mxu0 %v1735
    %3466 = vmatprep.subr.mxu0 0.0
    %3467 = vmatpush1.msra.mxu0 %v1736
    %3468 = vmatprep.subr.mxu0 0.0
    %3469 = vmatpush1.msra.mxu0 %v1737
    %3470 = vmatprep.subr.mxu0 0.0
    %3471 = vmatpush1.msra.mxu0 %v1738
    %3472 = vmatprep.subr.mxu0 0.0
    %3473 = vmatpush1.msra.mxu0 %v1739
    %3474 = vmatprep.subr.mxu0 0.0
    %3475 = vmatpush1.msra.mxu0 %v1740
    %3476 = vmatprep.subr.mxu0 0.0
    %3477 = vmatpush1.msra.mxu0 %v1741
    %3478 = vmatprep.subr.mxu0 0.0
    %3479 = vmatpush1.msra.mxu0 %v1742
    %3480 = vmatprep.subr.mxu0 0.0
    %3481 = vmatpush1.msra.mxu0 %v1743
    %3482 = vmatprep.subr.mxu0 0.0
    %3483 = vmatpush1.msra.mxu0 %v1744
    %3484 = vmatprep.subr.mxu0 0.0
    %3485 = vmatpush1.msra.mxu0 %v1745
    %3486 = vmatprep.subr.mxu0 0.0
    %3487 = vmatpush1.msra.mxu0 %v1746
    %3488 = vmatprep.subr.mxu0 0.0
    %3489 = vmatpush1.msra.mxu0 %v1747
    %3490 = vmatprep.subr.mxu0 0.0
    %3491 = vmatpush1.msra.mxu0 %v1748
    %3492 = vmatprep.subr.mxu0 0.0
    %3493 = vmatpush1.msra.mxu0 %v1749
    %3494 = vmatprep.subr.mxu0 0.0
    %3495 = vmatpush1.msra.mxu0 %v1750
    %3496 = vmatprep.subr.mxu0 0.0
    %3497 = vmatpush1.msra.mxu0 %v1751
    %3498 = vmatprep.subr.mxu0 0.0
    %3499 = vmatpush1.msra.mxu0 %v1752
    %3500 = vmatprep.subr.mxu0 0.0
    %3501 = vmatpush1.msra.mxu0 %v1753
    %3502 = vmatprep.subr.mxu0 0.0
    %3503 = vmatpush1.msra.mxu0 %v1754
    %3504 = vmatprep.mubr.f32.mxu0 %v42
    %3505 = vmatmul.mubr.f32.gmra.mrb[0].mxu0 %v41
    %v3506 = vpop.f32.mrb[0].mxu0
    %v3507 = vadd.f32 %v3437, %v3506
    %v3508 = vpop.f32.mrb[0].mxu0
    %3509 = vdwg.mxu0
    %3510 = vmatprep.subr.mxu0 0.0
    %3511 = vmatpush1.msra.mxu0 %v1755
    %3512 = vmatprep.subr.mxu0 0.0
    %3513 = vmatpush1.msra.mxu0 %v1756
    %3514 = vmatprep.subr.mxu0 0.0
    %3515 = vmatpush1.msra.mxu0 %v1757
    %3516 = vmatprep.subr.mxu0 0.0
    %3517 = vmatpush1.msra.mxu0 %v1758
    %3518 = vmatprep.subr.mxu0 0.0
    %3519 = vmatpush1.msra.mxu0 %v1759
    %3520 = vmatprep.subr.mxu0 0.0
    %3521 = vmatpush1.msra.mxu0 %v1760
    %3522 = vmatprep.subr.mxu0 0.0
    %3523 = vmatpush1.msra.mxu0 %v1761
    %3524 = vmatprep.subr.mxu0 0.0
    %3525 = vmatpush1.msra.mxu0 %v1762
    %3526 = vmatprep.subr.mxu0 0.0
    %3527 = vmatpush1.msra.mxu0 %v1763
    %3528 = vmatprep.subr.mxu0 0.0
    %3529 = vmatpush1.msra.mxu0 %v1764
    %3530 = vmatprep.subr.mxu0 0.0
    %3531 = vmatpush1.msra.mxu0 %v1765
    %3532 = vmatprep.subr.mxu0 0.0
    %3533 = vmatpush1.msra.mxu0 %v1766
    %3534 = vmatprep.subr.mxu0 0.0
    %3535 = vmatpush1.msra.mxu0 %v1767
    %3536 = vmatprep.subr.mxu0 0.0
    %3537 = vmatpush1.msra.mxu0 %v1768
    %3538 = vmatprep.subr.mxu0 0.0
    %3539 = vmatpush1.msra.mxu0 %v1769
    %3540 = vmatprep.subr.mxu0 0.0
    %3541 = vmatpush1.msra.mxu0 %v1770
    %3542 = vmatprep.subr.mxu0 0.0
    %3543 = vmatpush1.msra.mxu0 %v1771
    %3544 = vmatprep.subr.mxu0 0.0
    %3545 = vmatpush1.msra.mxu0 %v1772
    %3546 = vmatprep.subr.mxu0 0.0
    %3547 = vmatpush1.msra.mxu0 %v1773
    %3548 = vmatprep.subr.mxu0 0.0
    %3549 = vmatpush1.msra.mxu0 %v1774
    %3550 = vmatprep.subr.mxu0 0.0
    %3551 = vmatpush1.msra.mxu0 %v1775
    %3552 = vmatprep.subr.mxu0 0.0
    %3553 = vmatpush1.msra.mxu0 %v1776
    %3554 = vmatprep.subr.mxu0 0.0
    %3555 = vmatpush1.msra.mxu0 %v1777
    %3556 = vmatprep.subr.mxu0 0.0
    %3557 = vmatpush1.msra.mxu0 %v1778
    %3558 = vmatprep.subr.mxu0 0.0
    %3559 = vmatpush1.msra.mxu0 %v1779
    %3560 = vmatprep.subr.mxu0 0.0
    %3561 = vmatpush1.msra.mxu0 %v1780
    %3562 = vmatprep.subr.mxu0 0.0
    %3563 = vmatpush1.msra.mxu0 %v1781
    %3564 = vmatprep.subr.mxu0 0.0
    %3565 = vmatpush1.msra.mxu0 %v1782
    %3566 = vmatprep.subr.mxu0 0.0
    %3567 = vmatpush1.msra.mxu0 %v1783
    %3568 = vmatprep.subr.mxu0 0.0
    %3569 = vmatpush1.msra.mxu0 %v1784
    %3570 = vmatprep.subr.mxu0 0.0
    %3571 = vmatpush1.msra.mxu0 %v1785
    %3572 = vmatprep.subr.mxu0 0.0
    %3573 = vmatpush1.msra.mxu0 %v1786
    %3574 = vmatprep.mubr.f32.mxu0 %v44
    %3575 = vmatmul.mubr.f32.gmra.mrb[0].mxu0 %v43
    %v3576 = vpop.f32.mrb[0].mxu0
    %v3577 = vadd.f32 %v3507, %v3576
    %v3578 = vpop.f32.mrb[0].mxu0
    %3579 = vdwg.mxu0
    %3580 = vmatprep.subr.mxu0 0.0
    %3581 = vmatpush1.msra.mxu0 %v1787
    %3582 = vmatprep.subr.mxu0 0.0
    %3583 = vmatpush1.msra.mxu0 %v1788
    %3584 = vmatprep.subr.mxu0 0.0
    %3585 = vmatpush1.msra.mxu0 %v1789
    %3586 = vmatprep.subr.mxu0 0.0
    %3587 = vmatpush1.msra.mxu0 %v1790
    %3588 = vmatprep.subr.mxu0 0.0
    %3589 = vmatpush1.msra.mxu0 %v1791
    %3590 = vmatprep.subr.mxu0 0.0
    %3591 = vmatpush1.msra.mxu0 %v1792
    %3592 = vmatprep.subr.mxu0 0.0
    %3593 = vmatpush1.msra.mxu0 %v1793
    %3594 = vmatprep.subr.mxu0 0.0
    %3595 = vmatpush1.msra.mxu0 %v1794
    %3596 = vmatprep.subr.mxu0 0.0
    %3597 = vmatpush1.msra.mxu0 %v1795
    %3598 = vmatprep.subr.mxu0 0.0
    %3599 = vmatpush1.msra.mxu0 %v1796
    %3600 = vmatprep.subr.mxu0 0.0
    %3601 = vmatpush1.msra.mxu0 %v1797
    %3602 = vmatprep.subr.mxu0 0.0
    %3603 = vmatpush1.msra.mxu0 %v1798
    %3604 = vmatprep.subr.mxu0 0.0
    %3605 = vmatpush1.msra.mxu0 %v1799
    %3606 = vmatprep.subr.mxu0 0.0
    %3607 = vmatpush1.msra.mxu0 %v1800
    %3608 = vmatprep.subr.mxu0 0.0
    %3609 = vmatpush1.msra.mxu0 %v1801
    %3610 = vmatprep.subr.mxu0 0.0
    %3611 = vmatpush1.msra.mxu0 %v1802
    %3612 = vmatprep.subr.mxu0 0.0
    %3613 = vmatpush1.msra.mxu0 %v1803
    %3614 = vmatprep.subr.mxu0 0.0
    %3615 = vmatpush1.msra.mxu0 %v1804
    %3616 = vmatprep.subr.mxu0 0.0
    %3617 = vmatpush1.msra.mxu0 %v1805
    %3618 = vmatprep.subr.mxu0 0.0
    %3619 = vmatpush1.msra.mxu0 %v1806
    %3620 = vmatprep.subr.mxu0 0.0
    %3621 = vmatpush1.msra.mxu0 %v1807
    %3622 = vmatprep.subr.mxu0 0.0
    %3623 = vmatpush1.msra.mxu0 %v1808
    %3624 = vmatprep.subr.mxu0 0.0
    %3625 = vmatpush1.msra.mxu0 %v1809
    %3626 = vmatprep.subr.mxu0 0.0
    %3627 = vmatpush1.msra.mxu0 %v1810
    %3628 = vmatprep.subr.mxu0 0.0
    %3629 = vmatpush1.msra.mxu0 %v1811
    %3630 = vmatprep.subr.mxu0 0.0
    %3631 = vmatpush1.msra.mxu0 %v1812
    %3632 = vmatprep.subr.mxu0 0.0
    %3633 = vmatpush1.msra.mxu0 %v1813
    %3634 = vmatprep.subr.mxu0 0.0
    %3635 = vmatpush1.msra.mxu0 %v1814
    %3636 = vmatprep.subr.mxu0 0.0
    %3637 = vmatpush1.msra.mxu0 %v1815
    %3638 = vmatprep.subr.mxu0 0.0
    %3639 = vmatpush1.msra.mxu0 %v1816
    %3640 = vmatprep.subr.mxu0 0.0
    %3641 = vmatpush1.msra.mxu0 %v1817
    %3642 = vmatprep.subr.mxu0 0.0
    %3643 = vmatpush1.msra.mxu0 %v1818
    %3644 = vmatprep.mubr.f32.mxu0 %v46
    %3645 = vmatmul.mubr.f32.gmra.mrb[0].mxu0 %v45
    %v3646 = vpop.f32.mrb[0].mxu0
    %v3647 = vadd.f32 %v3577, %v3646
    %v3648 = vpop.f32.mrb[0].mxu0
    %3649 = vdwg.mxu0
    %3650 = vmatprep.subr.mxu0 0.0
    %3651 = vmatpush1.msra.mxu0 %v1819
    %3652 = vmatprep.subr.mxu0 0.0
    %3653 = vmatpush1.msra.mxu0 %v1820
    %3654 = vmatprep.subr.mxu0 0.0
    %3655 = vmatpush1.msra.mxu0 %v1821
    %3656 = vmatprep.subr.mxu0 0.0
    %3657 = vmatpush1.msra.mxu0 %v1822
    %3658 = vmatprep.subr.mxu0 0.0
    %3659 = vmatpush1.msra.mxu0 %v1823
    %3660 = vmatprep.subr.mxu0 0.0
    %3661 = vmatpush1.msra.mxu0 %v1824
    %3662 = vmatprep.subr.mxu0 0.0
    %3663 = vmatpush1.msra.mxu0 %v1825
    %3664 = vmatprep.subr.mxu0 0.0
    %3665 = vmatpush1.msra.mxu0 %v1826
    %3666 = vmatprep.subr.mxu0 0.0
    %3667 = vmatpush1.msra.mxu0 %v1827
    %3668 = vmatprep.subr.mxu0 0.0
    %3669 = vmatpush1.msra.mxu0 %v1828
    %3670 = vmatprep.subr.mxu0 0.0
    %3671 = vmatpush1.msra.mxu0 %v1829
    %3672 = vmatprep.subr.mxu0 0.0
    %3673 = vmatpush1.msra.mxu0 %v1830
    %3674 = vmatprep.subr.mxu0 0.0
    %3675 = vmatpush1.msra.mxu0 %v1831
    %3676 = vmatprep.subr.mxu0 0.0
    %3677 = vmatpush1.msra.mxu0 %v1832
    %3678 = vmatprep.subr.mxu0 0.0
    %3679 = vmatpush1.msra.mxu0 %v1833
    %3680 = vmatprep.subr.mxu0 0.0
    %3681 = vmatpush1.msra.mxu0 %v1834
    %3682 = vmatprep.subr.mxu0 0.0
    %3683 = vmatpush1.msra.mxu0 %v1835
    %3684 = vmatprep.subr.mxu0 0.0
    %3685 = vmatpush1.msra.mxu0 %v1836
    %3686 = vmatprep.subr.mxu0 0.0
    %3687 = vmatpush1.msra.mxu0 %v1837
    %3688 = vmatprep.subr.mxu0 0.0
    %3689 = vmatpush1.msra.mxu0 %v1838
    %3690 = vmatprep.subr.mxu0 0.0
    %3691 = vmatpush1.msra.mxu0 %v1839
    %3692 = vmatprep.subr.mxu0 0.0
    %3693 = vmatpush1.msra.mxu0 %v1840
    %3694 = vmatprep.subr.mxu0 0.0
    %3695 = vmatpush1.msra.mxu0 %v1841
    %3696 = vmatprep.subr.mxu0 0.0
    %3697 = vmatpush1.msra.mxu0 %v1842
    %3698 = vmatprep.subr.mxu0 0.0
    %3699 = vmatpush1.msra.mxu0 %v1843
    %3700 = vmatprep.subr.mxu0 0.0
    %3701 = vmatpush1.msra.mxu0 %v1844
    %3702 = vmatprep.subr.mxu0 0.0
    %3703 = vmatpush1.msra.mxu0 %v1845
    %3704 = vmatprep.subr.mxu0 0.0
    %3705 = vmatpush1.msra.mxu0 %v1846
    %3706 = vmatprep.subr.mxu0 0.0
    %3707 = vmatpush1.msra.mxu0 %v1847
    %3708 = vmatprep.subr.mxu0 0.0
    %3709 = vmatpush1.msra.mxu0 %v1848
    %3710 = vmatprep.subr.mxu0 0.0
    %3711 = vmatpush1.msra.mxu0 %v1849
    %3712 = vmatprep.subr.mxu0 0.0
    %3713 = vmatpush1.msra.mxu0 %v1850
    %3714 = vmatprep.mubr.f32.mxu0 %v48
    %3715 = vmatmul.mubr.f32.gmra.mrb[0].mxu0 %v47
    %v3716 = vpop.f32.mrb[0].mxu0
    %v3717 = vadd.f32 %v3647, %v3716
    %v3718 = vpop.f32.mrb[0].mxu0
    %3719 = vdwg.mxu0
    %3720 = vmatprep.subr.mxu0 0.0
    %3721 = vmatpush1.msra.mxu0 %v1851
    %3722 = vmatprep.subr.mxu0 0.0
    %3723 = vmatpush1.msra.mxu0 %v1852
    %3724 = vmatprep.subr.mxu0 0.0
    %3725 = vmatpush1.msra.mxu0 %v1853
    %3726 = vmatprep.subr.mxu0 0.0
    %3727 = vmatpush1.msra.mxu0 %v1854
    %3728 = vmatprep.subr.mxu0 0.0
    %3729 = vmatpush1.msra.mxu0 %v1855
    %3730 = vmatprep.subr.mxu0 0.0
    %3731 = vmatpush1.msra.mxu0 %v1856
    %3732 = vmatprep.subr.mxu0 0.0
    %3733 = vmatpush1.msra.mxu0 %v1857
    %3734 = vmatprep.subr.mxu0 0.0
    %3735 = vmatpush1.msra.mxu0 %v1858
    %3736 = vmatprep.subr.mxu0 0.0
    %3737 = vmatpush1.msra.mxu0 %v1859
    %3738 = vmatprep.subr.mxu0 0.0
    %3739 = vmatpush1.msra.mxu0 %v1860
    %3740 = vmatprep.subr.mxu0 0.0
    %3741 = vmatpush1.msra.mxu0 %v1861
    %3742 = vmatprep.subr.mxu0 0.0
    %3743 = vmatpush1.msra.mxu0 %v1862
    %3744 = vmatprep.subr.mxu0 0.0
    %3745 = vmatpush1.msra.mxu0 %v1863
    %3746 = vmatprep.subr.mxu0 0.0
    %3747 = vmatpush1.msra.mxu0 %v1864
    %3748 = vmatprep.subr.mxu0 0.0
    %3749 = vmatpush1.msra.mxu0 %v1865
    %3750 = vmatprep.subr.mxu0 0.0
    %3751 = vmatpush1.msra.mxu0 %v1866
    %3752 = vmatprep.subr.mxu0 0.0
    %3753 = vmatpush1.msra.mxu0 %v1867
    %3754 = vmatprep.subr.mxu0 0.0
    %3755 = vmatpush1.msra.mxu0 %v1868
    %3756 = vmatprep.subr.mxu0 0.0
    %3757 = vmatpush1.msra.mxu0 %v1869
    %3758 = vmatprep.subr.mxu0 0.0
    %3759 = vmatpush1.msra.mxu0 %v1870
    %3760 = vmatprep.subr.mxu0 0.0
    %3761 = vmatpush1.msra.mxu0 %v1871
    %3762 = vmatprep.subr.mxu0 0.0
    %3763 = vmatpush1.msra.mxu0 %v1872
    %3764 = vmatprep.subr.mxu0 0.0
    %3765 = vmatpush1.msra.mxu0 %v1873
    %3766 = vmatprep.subr.mxu0 0.0
    %3767 = vmatpush1.msra.mxu0 %v1874
    %3768 = vmatprep.subr.mxu0 0.0
    %3769 = vmatpush1.msra.mxu0 %v1875
    %3770 = vmatprep.subr.mxu0 0.0
    %3771 = vmatpush1.msra.mxu0 %v1876
    %3772 = vmatprep.subr.mxu0 0.0
    %3773 = vmatpush1.msra.mxu0 %v1877
    %3774 = vmatprep.subr.mxu0 0.0
    %3775 = vmatpush1.msra.mxu0 %v1878
    %3776 = vmatprep.subr.mxu0 0.0
    %3777 = vmatpush1.msra.mxu0 %v1879
    %3778 = vmatprep.subr.mxu0 0.0
    %3779 = vmatpush1.msra.mxu0 %v1880
    %3780 = vmatprep.subr.mxu0 0.0
    %3781 = vmatpush1.msra.mxu0 %v1881
    %3782 = vmatprep.subr.mxu0 0.0
    %3783 = vmatpush1.msra.mxu0 %v1882
    %3784 = vmatprep.mubr.f32.mxu0 %v50
    %3785 = vmatmul.mubr.f32.gmra.mrb[0].mxu0 %v49
    %v3786 = vpop.f32.mrb[0].mxu0
    %v3787 = vadd.f32 %v3717, %v3786
    %v3788 = vpop.f32.mrb[0].mxu0
    %3789 = vdwg.mxu0
    %3790 = vmatprep.subr.mxu0 0.0
    %3791 = vmatpush1.msra.mxu0 %v1883
    %3792 = vmatprep.subr.mxu0 0.0
    %3793 = vmatpush1.msra.mxu0 %v1884
    %3794 = vmatprep.subr.mxu0 0.0
    %3795 = vmatpush1.msra.mxu0 %v1885
    %3796 = vmatprep.subr.mxu0 0.0
    %3797 = vmatpush1.msra.mxu0 %v1886
    %3798 = vmatprep.subr.mxu0 0.0
    %3799 = vmatpush1.msra.mxu0 %v1887
    %3800 = vmatprep.subr.mxu0 0.0
    %3801 = vmatpush1.msra.mxu0 %v1888
    %3802 = vmatprep.subr.mxu0 0.0
    %3803 = vmatpush1.msra.mxu0 %v1889
    %3804 = vmatprep.subr.mxu0 0.0
    %3805 = vmatpush1.msra.mxu0 %v1890
    %3806 = vmatprep.subr.mxu0 0.0
    %3807 = vmatpush1.msra.mxu0 %v1891
    %3808 = vmatprep.subr.mxu0 0.0
    %3809 = vmatpush1.msra.mxu0 %v1892
    %3810 = vmatprep.subr.mxu0 0.0
    %3811 = vmatpush1.msra.mxu0 %v1893
    %3812 = vmatprep.subr.mxu0 0.0
    %3813 = vmatpush1.msra.mxu0 %v1894
    %3814 = vmatprep.subr.mxu0 0.0
    %3815 = vmatpush1.msra.mxu0 %v1895
    %3816 = vmatprep.subr.mxu0 0.0
    %3817 = vmatpush1.msra.mxu0 %v1896
    %3818 = vmatprep.subr.mxu0 0.0
    %3819 = vmatpush1.msra.mxu0 %v1897
    %3820 = vmatprep.subr.mxu0 0.0
    %3821 = vmatpush1.msra.mxu0 %v1898
    %3822 = vmatprep.subr.mxu0 0.0
    %3823 = vmatpush1.msra.mxu0 %v1899
    %3824 = vmatprep.subr.mxu0 0.0
    %3825 = vmatpush1.msra.mxu0 %v1900
    %3826 = vmatprep.subr.mxu0 0.0
    %3827 = vmatpush1.msra.mxu0 %v1901
    %3828 = vmatprep.subr.mxu0 0.0
    %3829 = vmatpush1.msra.mxu0 %v1902
    %3830 = vmatprep.subr.mxu0 0.0
    %3831 = vmatpush1.msra.mxu0 %v1903
    %3832 = vmatprep.subr.mxu0 0.0
    %3833 = vmatpush1.msra.mxu0 %v1904
    %3834 = vmatprep.subr.mxu0 0.0
    %3835 = vmatpush1.msra.mxu0 %v1905
    %3836 = vmatprep.subr.mxu0 0.0
    %3837 = vmatpush1.msra.mxu0 %v1906
    %3838 = vmatprep.subr.mxu0 0.0
    %3839 = vmatpush1.msra.mxu0 %v1907
    %3840 = vmatprep.subr.mxu0 0.0
    %3841 = vmatpush1.msra.mxu0 %v1908
    %3842 = vmatprep.subr.mxu0 0.0
    %3843 = vmatpush1.msra.mxu0 %v1909
    %3844 = vmatprep.subr.mxu0 0.0
    %3845 = vmatpush1.msra.mxu0 %v1910
    %3846 = vmatprep.subr.mxu0 0.0
    %3847 = vmatpush1.msra.mxu0 %v1911
    %3848 = vmatprep.subr.mxu0 0.0
    %3849 = vmatpush1.msra.mxu0 %v1912
    %3850 = vmatprep.subr.mxu0 0.0
    %3851 = vmatpush1.msra.mxu0 %v1913
    %3852 = vmatprep.subr.mxu0 0.0
    %3853 = vmatpush1.msra.mxu0 %v1914
    %3854 = vmatprep.mubr.f32.mxu0 %v52
    %3855 = vmatmul.mubr.f32.gmra.mrb[0].mxu0 %v51
    %v3856 = vpop.f32.mrb[0].mxu0
    %v3857 = vadd.f32 %v3787, %v3856
    %v3858 = vpop.f32.mrb[0].mxu0
    %3859 = vdwg.mxu0
    %3860 = vmatprep.subr.mxu0 0.0
    %3861 = vmatpush1.msra.mxu0 %v1915
    %3862 = vmatprep.subr.mxu0 0.0
    %3863 = vmatpush1.msra.mxu0 %v1916
    %3864 = vmatprep.subr.mxu0 0.0
    %3865 = vmatpush1.msra.mxu0 %v1917
    %3866 = vmatprep.subr.mxu0 0.0
    %3867 = vmatpush1.msra.mxu0 %v1918
    %3868 = vmatprep.subr.mxu0 0.0
    %3869 = vmatpush1.msra.mxu0 %v1919
    %3870 = vmatprep.subr.mxu0 0.0
    %3871 = vmatpush1.msra.mxu0 %v1920
    %3872 = vmatprep.subr.mxu0 0.0
    %3873 = vmatpush1.msra.mxu0 %v1921
    %3874 = vmatprep.subr.mxu0 0.0
    %3875 = vmatpush1.msra.mxu0 %v1922
    %3876 = vmatprep.subr.mxu0 0.0
    %3877 = vmatpush1.msra.mxu0 %v1923
    %3878 = vmatprep.subr.mxu0 0.0
    %3879 = vmatpush1.msra.mxu0 %v1924
    %3880 = vmatprep.subr.mxu0 0.0
    %3881 = vmatpush1.msra.mxu0 %v1925
    %3882 = vmatprep.subr.mxu0 0.0
    %3883 = vmatpush1.msra.mxu0 %v1926
    %3884 = vmatprep.subr.mxu0 0.0
    %3885 = vmatpush1.msra.mxu0 %v1927
    %3886 = vmatprep.subr.mxu0 0.0
    %3887 = vmatpush1.msra.mxu0 %v1928
    %3888 = vmatprep.subr.mxu0 0.0
    %3889 = vmatpush1.msra.mxu0 %v1929
    %3890 = vmatprep.subr.mxu0 0.0
    %3891 = vmatpush1.msra.mxu0 %v1930
    %3892 = vmatprep.subr.mxu0 0.0
    %3893 = vmatpush1.msra.mxu0 %v1931
    %3894 = vmatprep.subr.mxu0 0.0
    %3895 = vmatpush1.msra.mxu0 %v1932
    %3896 = vmatprep.subr.mxu0 0.0
    %3897 = vmatpush1.msra.mxu0 %v1933
    %3898 = vmatprep.subr.mxu0 0.0
    %3899 = vmatpush1.msra.mxu0 %v1934
    %3900 = vmatprep.subr.mxu0 0.0
    %3901 = vmatpush1.msra.mxu0 %v1935
    %3902 = vmatprep.subr.mxu0 0.0
    %3903 = vmatpush1.msra.mxu0 %v1936
    %3904 = vmatprep.subr.mxu0 0.0
    %3905 = vmatpush1.msra.mxu0 %v1937
    %3906 = vmatprep.subr.mxu0 0.0
    %3907 = vmatpush1.msra.mxu0 %v1938
    %3908 = vmatprep.subr.mxu0 0.0
    %3909 = vmatpush1.msra.mxu0 %v1939
    %3910 = vmatprep.subr.mxu0 0.0
    %3911 = vmatpush1.msra.mxu0 %v1940
    %3912 = vmatprep.subr.mxu0 0.0
    %3913 = vmatpush1.msra.mxu0 %v1941
    %3914 = vmatprep.subr.mxu0 0.0
    %3915 = vmatpush1.msra.mxu0 %v1942
    %3916 = vmatprep.subr.mxu0 0.0
    %3917 = vmatpush1.msra.mxu0 %v1943
    %3918 = vmatprep.subr.mxu0 0.0
    %3919 = vmatpush1.msra.mxu0 %v1944
    %3920 = vmatprep.subr.mxu0 0.0
    %3921 = vmatpush1.msra.mxu0 %v1945
    %3922 = vmatprep.subr.mxu0 0.0
    %3923 = vmatpush1.msra.mxu0 %v1946
    %3924 = vmatprep.mubr.f32.mxu0 %v54
    %3925 = vmatmul.mubr.f32.gmra.mrb[0].mxu0 %v53
    %v3926 = vpop.f32.mrb[0].mxu0
    %v3927 = vadd.f32 %v3857, %v3926
    %v3928 = vpop.f32.mrb[0].mxu0
    %3929 = vdwg.mxu0
    %3930 = vmatprep.subr.mxu0 0.0
    %3931 = vmatpush1.msra.mxu0 %v1947
    %3932 = vmatprep.subr.mxu0 0.0
    %3933 = vmatpush1.msra.mxu0 %v1948
    %3934 = vmatprep.subr.mxu0 0.0
    %3935 = vmatpush1.msra.mxu0 %v1949
    %3936 = vmatprep.subr.mxu0 0.0
    %3937 = vmatpush1.msra.mxu0 %v1950
    %3938 = vmatprep.subr.mxu0 0.0
    %3939 = vmatpush1.msra.mxu0 %v1951
    %3940 = vmatprep.subr.mxu0 0.0
    %3941 = vmatpush1.msra.mxu0 %v1952
    %3942 = vmatprep.subr.mxu0 0.0
    %3943 = vmatpush1.msra.mxu0 %v1953
    %3944 = vmatprep.subr.mxu0 0.0
    %3945 = vmatpush1.msra.mxu0 %v1954
    %3946 = vmatprep.subr.mxu0 0.0
    %3947 = vmatpush1.msra.mxu0 %v1955
    %3948 = vmatprep.subr.mxu0 0.0
    %3949 = vmatpush1.msra.mxu0 %v1956
    %3950 = vmatprep.subr.mxu0 0.0
    %3951 = vmatpush1.msra.mxu0 %v1957
    %3952 = vmatprep.subr.mxu0 0.0
    %3953 = vmatpush1.msra.mxu0 %v1958
    %3954 = vmatprep.subr.mxu0 0.0
    %3955 = vmatpush1.msra.mxu0 %v1959
    %3956 = vmatprep.subr.mxu0 0.0
    %3957 = vmatpush1.msra.mxu0 %v1960
    %3958 = vmatprep.subr.mxu0 0.0
    %3959 = vmatpush1.msra.mxu0 %v1961
    %3960 = vmatprep.subr.mxu0 0.0
    %3961 = vmatpush1.msra.mxu0 %v1962
    %3962 = vmatprep.subr.mxu0 0.0
    %3963 = vmatpush1.msra.mxu0 %v1963
    %3964 = vmatprep.subr.mxu0 0.0
    %3965 = vmatpush1.msra.mxu0 %v1964
    %3966 = vmatprep.subr.mxu0 0.0
    %3967 = vmatpush1.msra.mxu0 %v1965
    %3968 = vmatprep.subr.mxu0 0.0
    %3969 = vmatpush1.msra.mxu0 %v1966
    %3970 = vmatprep.subr.mxu0 0.0
    %3971 = vmatpush1.msra.mxu0 %v1967
    %3972 = vmatprep.subr.mxu0 0.0
    %3973 = vmatpush1.msra.mxu0 %v1968
    %3974 = vmatprep.subr.mxu0 0.0
    %3975 = vmatpush1.msra.mxu0 %v1969
    %3976 = vmatprep.subr.mxu0 0.0
    %3977 = vmatpush1.msra.mxu0 %v1970
    %3978 = vmatprep.subr.mxu0 0.0
    %3979 = vmatpush1.msra.mxu0 %v1971
    %3980 = vmatprep.subr.mxu0 0.0
    %3981 = vmatpush1.msra.mxu0 %v1972
    %3982 = vmatprep.subr.mxu0 0.0
    %3983 = vmatpush1.msra.mxu0 %v1973
    %3984 = vmatprep.subr.mxu0 0.0
    %3985 = vmatpush1.msra.mxu0 %v1974
    %3986 = vmatprep.subr.mxu0 0.0
    %3987 = vmatpush1.msra.mxu0 %v1975
    %3988 = vmatprep.subr.mxu0 0.0
    %3989 = vmatpush1.msra.mxu0 %v1976
    %3990 = vmatprep.subr.mxu0 0.0
    %3991 = vmatpush1.msra.mxu0 %v1977
    %3992 = vmatprep.subr.mxu0 0.0
    %3993 = vmatpush1.msra.mxu0 %v1978
    %3994 = vmatprep.mubr.f32.mxu0 %v56
    %3995 = vmatmul.mubr.f32.gmra.mrb[0].mxu0 %v55
    %v3996 = vpop.f32.mrb[0].mxu0
    %v3997 = vadd.f32 %v3927, %v3996
    %v3998 = vpop.f32.mrb[0].mxu0
    %3999 = vdwg.mxu0
    %4000 = vmatprep.subr.mxu0 0.0
    %4001 = vmatpush1.msra.mxu0 %v1979
    %4002 = vmatprep.subr.mxu0 0.0
    %4003 = vmatpush1.msra.mxu0 %v1980
    %4004 = vmatprep.subr.mxu0 0.0
    %4005 = vmatpush1.msra.mxu0 %v1981
    %4006 = vmatprep.subr.mxu0 0.0
    %4007 = vmatpush1.msra.mxu0 %v1982
    %4008 = vmatprep.subr.mxu0 0.0
    %4009 = vmatpush1.msra.mxu0 %v1983
    %4010 = vmatprep.subr.mxu0 0.0
    %4011 = vmatpush1.msra.mxu0 %v1984
    %4012 = vmatprep.subr.mxu0 0.0
    %4013 = vmatpush1.msra.mxu0 %v1985
    %4014 = vmatprep.subr.mxu0 0.0
    %4015 = vmatpush1.msra.mxu0 %v1986
    %4016 = vmatprep.subr.mxu0 0.0
    %4017 = vmatpush1.msra.mxu0 %v1987
    %4018 = vmatprep.subr.mxu0 0.0
    %4019 = vmatpush1.msra.mxu0 %v1988
    %4020 = vmatprep.subr.mxu0 0.0
    %4021 = vmatpush1.msra.mxu0 %v1989
    %4022 = vmatprep.subr.mxu0 0.0
    %4023 = vmatpush1.msra.mxu0 %v1990
    %4024 = vmatprep.subr.mxu0 0.0
    %4025 = vmatpush1.msra.mxu0 %v1991
    %4026 = vmatprep.subr.mxu0 0.0
    %4027 = vmatpush1.msra.mxu0 %v1992
    %4028 = vmatprep.subr.mxu0 0.0
    %4029 = vmatpush1.msra.mxu0 %v1993
    %4030 = vmatprep.subr.mxu0 0.0
    %4031 = vmatpush1.msra.mxu0 %v1994
    %4032 = vmatprep.subr.mxu0 0.0
    %4033 = vmatpush1.msra.mxu0 %v1995
    %4034 = vmatprep.subr.mxu0 0.0
    %4035 = vmatpush1.msra.mxu0 %v1996
    %4036 = vmatprep.subr.mxu0 0.0
    %4037 = vmatpush1.msra.mxu0 %v1997
    %4038 = vmatprep.subr.mxu0 0.0
    %4039 = vmatpush1.msra.mxu0 %v1998
    %4040 = vmatprep.subr.mxu0 0.0
    %4041 = vmatpush1.msra.mxu0 %v1999
    %4042 = vmatprep.subr.mxu0 0.0
    %4043 = vmatpush1.msra.mxu0 %v2000
    %4044 = vmatprep.subr.mxu0 0.0
    %4045 = vmatpush1.msra.mxu0 %v2001
    %4046 = vmatprep.subr.mxu0 0.0
    %4047 = vmatpush1.msra.mxu0 %v2002
    %4048 = vmatprep.subr.mxu0 0.0
    %4049 = vmatpush1.msra.mxu0 %v2003
    %4050 = vmatprep.subr.mxu0 0.0
    %4051 = vmatpush1.msra.mxu0 %v2004
    %4052 = vmatprep.subr.mxu0 0.0
    %4053 = vmatpush1.msra.mxu0 %v2005
    %4054 = vmatprep.subr.mxu0 0.0
    %4055 = vmatpush1.msra.mxu0 %v2006
    %4056 = vmatprep.subr.mxu0 0.0
    %4057 = vmatpush1.msra.mxu0 %v2007
    %4058 = vmatprep.subr.mxu0 0.0
    %4059 = vmatpush1.msra.mxu0 %v2008
    %4060 = vmatprep.subr.mxu0 0.0
    %4061 = vmatpush1.msra.mxu0 %v2009
    %4062 = vmatprep.subr.mxu0 0.0
    %4063 = vmatpush1.msra.mxu0 %v2010
    %4064 = vmatprep.mubr.f32.mxu0 %v58
    %4065 = vmatmul.mubr.f32.gmra.mrb[0].mxu0 %v57
    %v4066 = vpop.f32.mrb[0].mxu0
    %v4067 = vadd.f32 %v3997, %v4066
    %v4068 = vpop.f32.mrb[0].mxu0
    %4069 = vdwg.mxu0
    %4070 = vmatprep.subr.mxu0 0.0
    %4071 = vmatpush1.msra.mxu0 %v2011
    %4072 = vmatprep.subr.mxu0 0.0
    %4073 = vmatpush1.msra.mxu0 %v2012
    %4074 = vmatprep.subr.mxu0 0.0
    %4075 = vmatpush1.msra.mxu0 %v2013
    %4076 = vmatprep.subr.mxu0 0.0
    %4077 = vmatpush1.msra.mxu0 %v2014
    %4078 = vmatprep.subr.mxu0 0.0
    %4079 = vmatpush1.msra.mxu0 %v2015
    %4080 = vmatprep.subr.mxu0 0.0
    %4081 = vmatpush1.msra.mxu0 %v2016
    %4082 = vmatprep.subr.mxu0 0.0
    %4083 = vmatpush1.msra.mxu0 %v2017
    %4084 = vmatprep.subr.mxu0 0.0
    %4085 = vmatpush1.msra.mxu0 %v2018
    %4086 = vmatprep.subr.mxu0 0.0
    %4087 = vmatpush1.msra.mxu0 %v2019
    %4088 = vmatprep.subr.mxu0 0.0
    %4089 = vmatpush1.msra.mxu0 %v2020
    %4090 = vmatprep.subr.mxu0 0.0
    %4091 = vmatpush1.msra.mxu0 %v2021
    %4092 = vmatprep.subr.mxu0 0.0
    %4093 = vmatpush1.msra.mxu0 %v2022
    %4094 = vmatprep.subr.mxu0 0.0
    %4095 = vmatpush1.msra.mxu0 %v2023
    %4096 = vmatprep.subr.mxu0 0.0
    %4097 = vmatpush1.msra.mxu0 %v2024
    %4098 = vmatprep.subr.mxu0 0.0
    %4099 = vmatpush1.msra.mxu0 %v2025
    %4100 = vmatprep.subr.mxu0 0.0
    %4101 = vmatpush1.msra.mxu0 %v2026
    %4102 = vmatprep.subr.mxu0 0.0
    %4103 = vmatpush1.msra.mxu0 %v2027
    %4104 = vmatprep.subr.mxu0 0.0
    %4105 = vmatpush1.msra.mxu0 %v2028
    %4106 = vmatprep.subr.mxu0 0.0
    %4107 = vmatpush1.msra.mxu0 %v2029
    %4108 = vmatprep.subr.mxu0 0.0
    %4109 = vmatpush1.msra.mxu0 %v2030
    %4110 = vmatprep.subr.mxu0 0.0
    %4111 = vmatpush1.msra.mxu0 %v2031
    %4112 = vmatprep.subr.mxu0 0.0
    %4113 = vmatpush1.msra.mxu0 %v2032
    %4114 = vmatprep.subr.mxu0 0.0
    %4115 = vmatpush1.msra.mxu0 %v2033
    %4116 = vmatprep.subr.mxu0 0.0
    %4117 = vmatpush1.msra.mxu0 %v2034
    %4118 = vmatprep.subr.mxu0 0.0
    %4119 = vmatpush1.msra.mxu0 %v2035
    %4120 = vmatprep.subr.mxu0 0.0
    %4121 = vmatpush1.msra.mxu0 %v2036
    %4122 = vmatprep.subr.mxu0 0.0
    %4123 = vmatpush1.msra.mxu0 %v2037
    %4124 = vmatprep.subr.mxu0 0.0
    %4125 = vmatpush1.msra.mxu0 %v2038
    %4126 = vmatprep.subr.mxu0 0.0
    %4127 = vmatpush1.msra.mxu0 %v2039
    %4128 = vmatprep.subr.mxu0 0.0
    %4129 = vmatpush1.msra.mxu0 %v2040
    %4130 = vmatprep.subr.mxu0 0.0
    %4131 = vmatpush1.msra.mxu0 %v2041
    %4132 = vmatprep.subr.mxu0 0.0
    %4133 = vmatpush1.msra.mxu0 %v2042
    %4134 = vmatprep.mubr.f32.mxu0 %v60
    %4135 = vmatmul.mubr.f32.gmra.mrb[0].mxu0 %v59
    %v4136 = vpop.f32.mrb[0].mxu0
    %v4137 = vadd.f32 %v4067, %v4136
    %v4138 = vpop.f32.mrb[0].mxu0
    %4139 = vdwg.mxu0
    %4140 = vmatprep.subr.mxu0 0.0
    %4141 = vmatpush1.msra.mxu0 %v2043
    %4142 = vmatprep.subr.mxu0 0.0
    %4143 = vmatpush1.msra.mxu0 %v2044
    %4144 = vmatprep.subr.mxu0 0.0
    %4145 = vmatpush1.msra.mxu0 %v2045
    %4146 = vmatprep.subr.mxu0 0.0
    %4147 = vmatpush1.msra.mxu0 %v2046
    %4148 = vmatprep.subr.mxu0 0.0
    %4149 = vmatpush1.msra.mxu0 %v2047
    %4150 = vmatprep.subr.mxu0 0.0
    %4151 = vmatpush1.msra.mxu0 %v2048
    %4152 = vmatprep.subr.mxu0 0.0
    %4153 = vmatpush1.msra.mxu0 %v2049
    %4154 = vmatprep.subr.mxu0 0.0
    %4155 = vmatpush1.msra.mxu0 %v2050
    %4156 = vmatprep.subr.mxu0 0.0
    %4157 = vmatpush1.msra.mxu0 %v2051
    %4158 = vmatprep.subr.mxu0 0.0
    %4159 = vmatpush1.msra.mxu0 %v2052
    %4160 = vmatprep.subr.mxu0 0.0
    %4161 = vmatpush1.msra.mxu0 %v2053
    %4162 = vmatprep.subr.mxu0 0.0
    %4163 = vmatpush1.msra.mxu0 %v2054
    %4164 = vmatprep.subr.mxu0 0.0
    %4165 = vmatpush1.msra.mxu0 %v2055
    %4166 = vmatprep.subr.mxu0 0.0
    %4167 = vmatpush1.msra.mxu0 %v2056
    %4168 = vmatprep.subr.mxu0 0.0
    %4169 = vmatpush1.msra.mxu0 %v2057
    %4170 = vmatprep.subr.mxu0 0.0
    %4171 = vmatpush1.msra.mxu0 %v2058
    %4172 = vmatprep.subr.mxu0 0.0
    %4173 = vmatpush1.msra.mxu0 %v2059
    %4174 = vmatprep.subr.mxu0 0.0
    %4175 = vmatpush1.msra.mxu0 %v2060
    %4176 = vmatprep.subr.mxu0 0.0
    %4177 = vmatpush1.msra.mxu0 %v2061
    %4178 = vmatprep.subr.mxu0 0.0
    %4179 = vmatpush1.msra.mxu0 %v2062
    %4180 = vmatprep.subr.mxu0 0.0
    %4181 = vmatpush1.msra.mxu0 %v2063
    %4182 = vmatprep.subr.mxu0 0.0
    %4183 = vmatpush1.msra.mxu0 %v2064
    %4184 = vmatprep.subr.mxu0 0.0
    %4185 = vmatpush1.msra.mxu0 %v2065
    %4186 = vmatprep.subr.mxu0 0.0
    %4187 = vmatpush1.msra.mxu0 %v2066
    %4188 = vmatprep.subr.mxu0 0.0
    %4189 = vmatpush1.msra.mxu0 %v2067
    %4190 = vmatprep.subr.mxu0 0.0
    %4191 = vmatpush1.msra.mxu0 %v2068
    %4192 = vmatprep.subr.mxu0 0.0
    %4193 = vmatpush1.msra.mxu0 %v2069
    %4194 = vmatprep.subr.mxu0 0.0
    %4195 = vmatpush1.msra.mxu0 %v2070
    %4196 = vmatprep.subr.mxu0 0.0
    %4197 = vmatpush1.msra.mxu0 %v2071
    %4198 = vmatprep.subr.mxu0 0.0
    %4199 = vmatpush1.msra.mxu0 %v2072
    %4200 = vmatprep.subr.mxu0 0.0
    %4201 = vmatpush1.msra.mxu0 %v2073
    %4202 = vmatprep.subr.mxu0 0.0
    %4203 = vmatpush1.msra.mxu0 %v2074
    %4204 = vmatprep.mubr.f32.mxu0 %v62
    %4205 = vmatmul.mubr.f32.gmra.mrb[0].mxu0 %v61
    %v4206 = vpop.f32.mrb[0].mxu0
    %v4207 = vadd.f32 %v4137, %v4206
    %v4208 = vpop.f32.mrb[0].mxu0
    %4209 = vdwg.mxu0
    %4210 = vmatprep.subr.mxu0 0.0
    %4211 = vmatpush1.msra.mxu0 %v2075
    %4212 = vmatprep.subr.mxu0 0.0
    %4213 = vmatpush1.msra.mxu0 %v2076
    %4214 = vmatprep.subr.mxu0 0.0
    %4215 = vmatpush1.msra.mxu0 %v2077
    %4216 = vmatprep.subr.mxu0 0.0
    %4217 = vmatpush1.msra.mxu0 %v2078
    %4218 = vmatprep.subr.mxu0 0.0
    %4219 = vmatpush1.msra.mxu0 %v2079
    %4220 = vmatprep.subr.mxu0 0.0
    %4221 = vmatpush1.msra.mxu0 %v2080
    %4222 = vmatprep.subr.mxu0 0.0
    %4223 = vmatpush1.msra.mxu0 %v2081
    %4224 = vmatprep.subr.mxu0 0.0
    %4225 = vmatpush1.msra.mxu0 %v2082
    %4226 = vmatprep.subr.mxu0 0.0
    %4227 = vmatpush1.msra.mxu0 %v2083
    %4228 = vmatprep.subr.mxu0 0.0
    %4229 = vmatpush1.msra.mxu0 %v2084
    %4230 = vmatprep.subr.mxu0 0.0
    %4231 = vmatpush1.msra.mxu0 %v2085
    %4232 = vmatprep.subr.mxu0 0.0
    %4233 = vmatpush1.msra.mxu0 %v2086
    %4234 = vmatprep.subr.mxu0 0.0
    %4235 = vmatpush1.msra.mxu0 %v2087
    %4236 = vmatprep.subr.mxu0 0.0
    %4237 = vmatpush1.msra.mxu0 %v2088
    %4238 = vmatprep.subr.mxu0 0.0
    %4239 = vmatpush1.msra.mxu0 %v2089
    %4240 = vmatprep.subr.mxu0 0.0
    %4241 = vmatpush1.msra.mxu0 %v2090
    %4242 = vmatprep.subr.mxu0 0.0
    %4243 = vmatpush1.msra.mxu0 %v2091
    %4244 = vmatprep.subr.mxu0 0.0
    %4245 = vmatpush1.msra.mxu0 %v2092
    %4246 = vmatprep.subr.mxu0 0.0
    %4247 = vmatpush1.msra.mxu0 %v2093
    %4248 = vmatprep.subr.mxu0 0.0
    %4249 = vmatpush1.msra.mxu0 %v2094
    %4250 = vmatprep.subr.mxu0 0.0
    %4251 = vmatpush1.msra.mxu0 %v2095
    %4252 = vmatprep.subr.mxu0 0.0
    %4253 = vmatpush1.msra.mxu0 %v2096
    %4254 = vmatprep.subr.mxu0 0.0
    %4255 = vmatpush1.msra.mxu0 %v2097
    %4256 = vmatprep.subr.mxu0 0.0
    %4257 = vmatpush1.msra.mxu0 %v2098
    %4258 = vmatprep.subr.mxu0 0.0
    %4259 = vmatpush1.msra.mxu0 %v2099
    %4260 = vmatprep.subr.mxu0 0.0
    %4261 = vmatpush1.msra.mxu0 %v2100
    %4262 = vmatprep.subr.mxu0 0.0
    %4263 = vmatpush1.msra.mxu0 %v2101
    %4264 = vmatprep.subr.mxu0 0.0
    %4265 = vmatpush1.msra.mxu0 %v2102
    %4266 = vmatprep.subr.mxu0 0.0
    %4267 = vmatpush1.msra.mxu0 %v2103
    %4268 = vmatprep.subr.mxu0 0.0
    %4269 = vmatpush1.msra.mxu0 %v2104
    %4270 = vmatprep.subr.mxu0 0.0
    %4271 = vmatpush1.msra.mxu0 %v2105
    %4272 = vmatprep.subr.mxu0 0.0
    %4273 = vmatpush1.msra.mxu0 %v2106
    %4274 = vmatprep.mubr.f32.mxu0 %v64
    %4275 = vmatmul.mubr.f32.gmra.mrb[0].mxu0 %v63
    %v4276 = vpop.f32.mrb[0].mxu0
    %v4277 = vadd.f32 %v4207, %v4276
    %v4278 = vpop.f32.mrb[0].mxu0
    %4279 = vdwg.mxu0
    %4280 = vmatprep.subr.mxu0 0.0
    %4281 = vmatpush1.msra.mxu0 %v2107
    %4282 = vmatprep.subr.mxu0 0.0
    %4283 = vmatpush1.msra.mxu0 %v2108
    %4284 = vmatprep.subr.mxu0 0.0
    %4285 = vmatpush1.msra.mxu0 %v2109
    %4286 = vmatprep.subr.mxu0 0.0
    %4287 = vmatpush1.msra.mxu0 %v2110
    %4288 = vmatprep.subr.mxu0 0.0
    %4289 = vmatpush1.msra.mxu0 %v2111
    %4290 = vmatprep.subr.mxu0 0.0
    %4291 = vmatpush1.msra.mxu0 %v2112
    %4292 = vmatprep.subr.mxu0 0.0
    %4293 = vmatpush1.msra.mxu0 %v2113
    %4294 = vmatprep.subr.mxu0 0.0
    %4295 = vmatpush1.msra.mxu0 %v2114
    %4296 = vmatprep.subr.mxu0 0.0
    %4297 = vmatpush1.msra.mxu0 %v2115
    %4298 = vmatprep.subr.mxu0 0.0
    %4299 = vmatpush1.msra.mxu0 %v2116
    %4300 = vmatprep.subr.mxu0 0.0
    %4301 = vmatpush1.msra.mxu0 %v2117
    %4302 = vmatprep.subr.mxu0 0.0
    %4303 = vmatpush1.msra.mxu0 %v2118
    %4304 = vmatprep.subr.mxu0 0.0
    %4305 = vmatpush1.msra.mxu0 %v2119
    %4306 = vmatprep.subr.mxu0 0.0
    %4307 = vmatpush1.msra.mxu0 %v2120
    %4308 = vmatprep.subr.mxu0 0.0
    %4309 = vmatpush1.msra.mxu0 %v2121
    %4310 = vmatprep.subr.mxu0 0.0
    %4311 = vmatpush1.msra.mxu0 %v2122
    %4312 = vmatprep.subr.mxu0 0.0
    %4313 = vmatpush1.msra.mxu0 %v2123
    %4314 = vmatprep.subr.mxu0 0.0
    %4315 = vmatpush1.msra.mxu0 %v2124
    %4316 = vmatprep.subr.mxu0 0.0
    %4317 = vmatpush1.msra.mxu0 %v2125
    %4318 = vmatprep.subr.mxu0 0.0
    %4319 = vmatpush1.msra.mxu0 %v2126
    %4320 = vmatprep.subr.mxu0 0.0
    %4321 = vmatpush1.msra.mxu0 %v2127
    %4322 = vmatprep.subr.mxu0 0.0
    %4323 = vmatpush1.msra.mxu0 %v2128
    %4324 = vmatprep.subr.mxu0 0.0
    %4325 = vmatpush1.msra.mxu0 %v2129
    %4326 = vmatprep.subr.mxu0 0.0
    %4327 = vmatpush1.msra.mxu0 %v2130
    %4328 = vmatprep.subr.mxu0 0.0
    %4329 = vmatpush1.msra.mxu0 %v2131
    %4330 = vmatprep.subr.mxu0 0.0
    %4331 = vmatpush1.msra.mxu0 %v2132
    %4332 = vmatprep.subr.mxu0 0.0
    %4333 = vmatpush1.msra.mxu0 %v2133
    %4334 = vmatprep.subr.mxu0 0.0
    %4335 = vmatpush1.msra.mxu0 %v2134
    %4336 = vmatprep.subr.mxu0 0.0
    %4337 = vmatpush1.msra.mxu0 %v2135
    %4338 = vmatprep.subr.mxu0 0.0
    %4339 = vmatpush1.msra.mxu0 %v2136
    %4340 = vmatprep.subr.mxu0 0.0
    %4341 = vmatpush1.msra.mxu0 %v2137
    %4342 = vmatprep.subr.mxu0 0.0
    %4343 = vmatpush1.msra.mxu0 %v2138
    %4344 = vmatprep.mubr.f32.mxu0 %v66
    %4345 = vmatmul.mubr.f32.gmra.mrb[0].mxu0 %v65
    %v4346 = vpop.f32.mrb[0].mxu0
    %v4347 = vadd.f32 %v4277, %v4346
    %v4348 = vpop.f32.mrb[0].mxu0
    %4349 = vdwg.mxu0
    %4350 = vmatprep.subr.mxu0 0.0
    %4351 = vmatpush1.msra.mxu0 %v2139
    %4352 = vmatprep.subr.mxu0 0.0
    %4353 = vmatpush1.msra.mxu0 %v2140
    %4354 = vmatprep.subr.mxu0 0.0
    %4355 = vmatpush1.msra.mxu0 %v2141
    %4356 = vmatprep.subr.mxu0 0.0
    %4357 = vmatpush1.msra.mxu0 %v2142
    %4358 = vmatprep.subr.mxu0 0.0
    %4359 = vmatpush1.msra.mxu0 %v2143
    %4360 = vmatprep.subr.mxu0 0.0
    %4361 = vmatpush1.msra.mxu0 %v2144
    %4362 = vmatprep.subr.mxu0 0.0
    %4363 = vmatpush1.msra.mxu0 %v2145
    %4364 = vmatprep.subr.mxu0 0.0
    %4365 = vmatpush1.msra.mxu0 %v2146
    %4366 = vmatprep.subr.mxu0 0.0
    %4367 = vmatpush1.msra.mxu0 %v2147
    %4368 = vmatprep.subr.mxu0 0.0
    %4369 = vmatpush1.msra.mxu0 %v2148
    %4370 = vmatprep.subr.mxu0 0.0
    %4371 = vmatpush1.msra.mxu0 %v2149
    %4372 = vmatprep.subr.mxu0 0.0
    %4373 = vmatpush1.msra.mxu0 %v2150
    %4374 = vmatprep.subr.mxu0 0.0
    %4375 = vmatpush1.msra.mxu0 %v2151
    %4376 = vmatprep.subr.mxu0 0.0
    %4377 = vmatpush1.msra.mxu0 %v2152
    %4378 = vmatprep.subr.mxu0 0.0
    %4379 = vmatpush1.msra.mxu0 %v2153
    %4380 = vmatprep.subr.mxu0 0.0
    %4381 = vmatpush1.msra.mxu0 %v2154
    %4382 = vmatprep.subr.mxu0 0.0
    %4383 = vmatpush1.msra.mxu0 %v2155
    %4384 = vmatprep.subr.mxu0 0.0
    %4385 = vmatpush1.msra.mxu0 %v2156
    %4386 = vmatprep.subr.mxu0 0.0
    %4387 = vmatpush1.msra.mxu0 %v2157
    %4388 = vmatprep.subr.mxu0 0.0
    %4389 = vmatpush1.msra.mxu0 %v2158
    %4390 = vmatprep.subr.mxu0 0.0
    %4391 = vmatpush1.msra.mxu0 %v2159
    %4392 = vmatprep.subr.mxu0 0.0
    %4393 = vmatpush1.msra.mxu0 %v2160
    %4394 = vmatprep.subr.mxu0 0.0
    %4395 = vmatpush1.msra.mxu0 %v2161
    %4396 = vmatprep.subr.mxu0 0.0
    %4397 = vmatpush1.msra.mxu0 %v2162
    %4398 = vmatprep.subr.mxu0 0.0
    %4399 = vmatpush1.msra.mxu0 %v2163
    %4400 = vmatprep.subr.mxu0 0.0
    %4401 = vmatpush1.msra.mxu0 %v2164
    %4402 = vmatprep.subr.mxu0 0.0
    %4403 = vmatpush1.msra.mxu0 %v2165
    %4404 = vmatprep.subr.mxu0 0.0
    %4405 = vmatpush1.msra.mxu0 %v2166
    %4406 = vmatprep.subr.mxu0 0.0
    %4407 = vmatpush1.msra.mxu0 %v2167
    %4408 = vmatprep.subr.mxu0 0.0
    %4409 = vmatpush1.msra.mxu0 %v2168
    %4410 = vmatprep.subr.mxu0 0.0
    %4411 = vmatpush1.msra.mxu0 %v2169
    %4412 = vmatprep.subr.mxu0 0.0
    %4413 = vmatpush1.msra.mxu0 %v2170
    %4414 = vmatprep.mubr.f32.mxu0 %v68
    %4415 = vmatmul.mubr.f32.gmra.mrb[0].mxu0 %v67
    %v4416 = vpop.f32.mrb[0].mxu0
    %v4417 = vadd.f32 %v4347, %v4416
    %v4418 = vpop.f32.mrb[0].mxu0
    %4419 = vdwg.mxu0
    %4420 = vmatprep.subr.mxu0 0.0
    %4421 = vmatpush1.msra.mxu0 %v2171
    %4422 = vmatprep.subr.mxu0 0.0
    %4423 = vmatpush1.msra.mxu0 %v2172
    %4424 = vmatprep.subr.mxu0 0.0
    %4425 = vmatpush1.msra.mxu0 %v2173
    %4426 = vmatprep.subr.mxu0 0.0
    %4427 = vmatpush1.msra.mxu0 %v2174
    %4428 = vmatprep.subr.mxu0 0.0
    %4429 = vmatpush1.msra.mxu0 %v2175
    %4430 = vmatprep.subr.mxu0 0.0
    %4431 = vmatpush1.msra.mxu0 %v2176
    %4432 = vmatprep.subr.mxu0 0.0
    %4433 = vmatpush1.msra.mxu0 %v2177
    %4434 = vmatprep.subr.mxu0 0.0
    %4435 = vmatpush1.msra.mxu0 %v2178
    %4436 = vmatprep.subr.mxu0 0.0
    %4437 = vmatpush1.msra.mxu0 %v2179
    %4438 = vmatprep.subr.mxu0 0.0
    %4439 = vmatpush1.msra.mxu0 %v2180
    %4440 = vmatprep.subr.mxu0 0.0
    %4441 = vmatpush1.msra.mxu0 %v2181
    %4442 = vmatprep.subr.mxu0 0.0
    %4443 = vmatpush1.msra.mxu0 %v2182
    %4444 = vmatprep.subr.mxu0 0.0
    %4445 = vmatpush1.msra.mxu0 %v2183
    %4446 = vmatprep.subr.mxu0 0.0
    %4447 = vmatpush1.msra.mxu0 %v2184
    %4448 = vmatprep.subr.mxu0 0.0
    %4449 = vmatpush1.msra.mxu0 %v2185
    %4450 = vmatprep.subr.mxu0 0.0
    %4451 = vmatpush1.msra.mxu0 %v2186
    %4452 = vmatprep.subr.mxu0 0.0
    %4453 = vmatpush1.msra.mxu0 %v2187
    %4454 = vmatprep.subr.mxu0 0.0
    %4455 = vmatpush1.msra.mxu0 %v2188
    %4456 = vmatprep.subr.mxu0 0.0
    %4457 = vmatpush1.msra.mxu0 %v2189
    %4458 = vmatprep.subr.mxu0 0.0
    %4459 = vmatpush1.msra.mxu0 %v2190
    %4460 = vmatprep.subr.mxu0 0.0
    %4461 = vmatpush1.msra.mxu0 %v2191
    %4462 = vmatprep.subr.mxu0 0.0
    %4463 = vmatpush1.msra.mxu0 %v2192
    %4464 = vmatprep.subr.mxu0 0.0
    %4465 = vmatpush1.msra.mxu0 %v2193
    %4466 = vmatprep.subr.mxu0 0.0
    %4467 = vmatpush1.msra.mxu0 %v2194
    %4468 = vmatprep.subr.mxu0 0.0
    %4469 = vmatpush1.msra.mxu0 %v2195
    %4470 = vmatprep.subr.mxu0 0.0
    %4471 = vmatpush1.msra.mxu0 %v2196
    %4472 = vmatprep.subr.mxu0 0.0
    %4473 = vmatpush1.msra.mxu0 %v2197
    %4474 = vmatprep.subr.mxu0 0.0
    %4475 = vmatpush1.msra.mxu0 %v2198
    %4476 = vmatprep.subr.mxu0 0.0
    %4477 = vmatpush1.msra.mxu0 %v2199
    %4478 = vmatprep.subr.mxu0 0.0
    %4479 = vmatpush1.msra.mxu0 %v2200
    %4480 = vmatprep.subr.mxu0 0.0
    %4481 = vmatpush1.msra.mxu0 %v2201
    %4482 = vmatprep.subr.mxu0 0.0
    %4483 = vmatpush1.msra.mxu0 %v2202
    %4484 = vmatprep.mubr.f32.mxu0 %v70
    %4485 = vmatmul.mubr.f32.gmra.mrb[0].mxu0 %v69
    %v4486 = vpop.f32.mrb[0].mxu0
    %v4487 = vadd.f32 %v4417, %v4486
    %v4488 = vpop.f32.mrb[0].mxu0
    %4489 = vdwg.mxu0
    %4490 = vmatprep.subr.mxu0 0.0
    %4491 = vmatpush1.msra.mxu0 %v2203
    %4492 = vmatprep.subr.mxu0 0.0
    %4493 = vmatpush1.msra.mxu0 %v2204
    %4494 = vmatprep.subr.mxu0 0.0
    %4495 = vmatpush1.msra.mxu0 %v2205
    %4496 = vmatprep.subr.mxu0 0.0
    %4497 = vmatpush1.msra.mxu0 %v2206
    %4498 = vmatprep.subr.mxu0 0.0
    %4499 = vmatpush1.msra.mxu0 %v2207
    %4500 = vmatprep.subr.mxu0 0.0
    %4501 = vmatpush1.msra.mxu0 %v2208
    %4502 = vmatprep.subr.mxu0 0.0
    %4503 = vmatpush1.msra.mxu0 %v2209
    %4504 = vmatprep.subr.mxu0 0.0
    %4505 = vmatpush1.msra.mxu0 %v2210
    %4506 = vmatprep.subr.mxu0 0.0
    %4507 = vmatpush1.msra.mxu0 %v2211
    %4508 = vmatprep.subr.mxu0 0.0
    %4509 = vmatpush1.msra.mxu0 %v2212
    %4510 = vmatprep.subr.mxu0 0.0
    %4511 = vmatpush1.msra.mxu0 %v2213
    %4512 = vmatprep.subr.mxu0 0.0
    %4513 = vmatpush1.msra.mxu0 %v2214
    %4514 = vmatprep.subr.mxu0 0.0
    %4515 = vmatpush1.msra.mxu0 %v2215
    %4516 = vmatprep.subr.mxu0 0.0
    %4517 = vmatpush1.msra.mxu0 %v2216
    %4518 = vmatprep.subr.mxu0 0.0
    %4519 = vmatpush1.msra.mxu0 %v2217
    %4520 = vmatprep.subr.mxu0 0.0
    %4521 = vmatpush1.msra.mxu0 %v2218
    %4522 = vmatprep.subr.mxu0 0.0
    %4523 = vmatpush1.msra.mxu0 %v2219
    %4524 = vmatprep.subr.mxu0 0.0
    %4525 = vmatpush1.msra.mxu0 %v2220
    %4526 = vmatprep.subr.mxu0 0.0
    %4527 = vmatpush1.msra.mxu0 %v2221
    %4528 = vmatprep.subr.mxu0 0.0
    %4529 = vmatpush1.msra.mxu0 %v2222
    %4530 = vmatprep.subr.mxu0 0.0
    %4531 = vmatpush1.msra.mxu0 %v2223
    %4532 = vmatprep.subr.mxu0 0.0
    %4533 = vmatpush1.msra.mxu0 %v2224
    %4534 = vmatprep.subr.mxu0 0.0
    %4535 = vmatpush1.msra.mxu0 %v2225
    %4536 = vmatprep.subr.mxu0 0.0
    %4537 = vmatpush1.msra.mxu0 %v2226
    %4538 = vmatprep.subr.mxu0 0.0
    %4539 = vmatpush1.msra.mxu0 %v2227
    %4540 = vmatprep.subr.mxu0 0.0
    %4541 = vmatpush1.msra.mxu0 %v2228
    %4542 = vmatprep.subr.mxu0 0.0
    %4543 = vmatpush1.msra.mxu0 %v2229
    %4544 = vmatprep.subr.mxu0 0.0
    %4545 = vmatpush1.msra.mxu0 %v2230
    %4546 = vmatprep.subr.mxu0 0.0
    %4547 = vmatpush1.msra.mxu0 %v2231
    %4548 = vmatprep.subr.mxu0 0.0
    %4549 = vmatpush1.msra.mxu0 %v2232
    %4550 = vmatprep.subr.mxu0 0.0
    %4551 = vmatpush1.msra.mxu0 %v2233
    %4552 = vmatprep.subr.mxu0 0.0
    %4553 = vmatpush1.msra.mxu0 %v2234
    %4554 = vmatprep.mubr.f32.mxu0 %v72
    %4555 = vmatmul.mubr.f32.gmra.mrb[0].mxu0 %v71
    %v4556 = vpop.f32.mrb[0].mxu0
    %v4557 = vadd.f32 %v4487, %v4556
    %v4558 = vpop.f32.mrb[0].mxu0
    %4559 = vdwg.mxu0
    %4560 = vmatprep.subr.mxu0 0.0
    %4561 = vmatpush1.msra.mxu0 %v2235
    %4562 = vmatprep.subr.mxu0 0.0
    %4563 = vmatpush1.msra.mxu0 %v2236
    %4564 = vmatprep.subr.mxu0 0.0
    %4565 = vmatpush1.msra.mxu0 %v2237
    %4566 = vmatprep.subr.mxu0 0.0
    %4567 = vmatpush1.msra.mxu0 %v2238
    %4568 = vmatprep.subr.mxu0 0.0
    %4569 = vmatpush1.msra.mxu0 %v2239
    %4570 = vmatprep.subr.mxu0 0.0
    %4571 = vmatpush1.msra.mxu0 %v2240
    %4572 = vmatprep.subr.mxu0 0.0
    %4573 = vmatpush1.msra.mxu0 %v2241
    %4574 = vmatprep.subr.mxu0 0.0
    %4575 = vmatpush1.msra.mxu0 %v2242
    %4576 = vmatprep.subr.mxu0 0.0
    %4577 = vmatpush1.msra.mxu0 %v2243
    %4578 = vmatprep.subr.mxu0 0.0
    %4579 = vmatpush1.msra.mxu0 %v2244
    %4580 = vmatprep.subr.mxu0 0.0
    %4581 = vmatpush1.msra.mxu0 %v2245
    %4582 = vmatprep.subr.mxu0 0.0
    %4583 = vmatpush1.msra.mxu0 %v2246
    %4584 = vmatprep.subr.mxu0 0.0
    %4585 = vmatpush1.msra.mxu0 %v2247
    %4586 = vmatprep.subr.mxu0 0.0
    %4587 = vmatpush1.msra.mxu0 %v2248
    %4588 = vmatprep.subr.mxu0 0.0
    %4589 = vmatpush1.msra.mxu0 %v2249
    %4590 = vmatprep.subr.mxu0 0.0
    %4591 = vmatpush1.msra.mxu0 %v2250
    %4592 = vmatprep.subr.mxu0 0.0
    %4593 = vmatpush1.msra.mxu0 %v2251
    %4594 = vmatprep.subr.mxu0 0.0
    %4595 = vmatpush1.msra.mxu0 %v2252
    %4596 = vmatprep.subr.mxu0 0.0
    %4597 = vmatpush1.msra.mxu0 %v2253
    %4598 = vmatprep.subr.mxu0 0.0
    %4599 = vmatpush1.msra.mxu0 %v2254
    %4600 = vmatprep.subr.mxu0 0.0
    %4601 = vmatpush1.msra.mxu0 %v2255
    %4602 = vmatprep.subr.mxu0 0.0
    %4603 = vmatpush1.msra.mxu0 %v2256
    %4604 = vmatprep.subr.mxu0 0.0
    %4605 = vmatpush1.msra.mxu0 %v2257
    %4606 = vmatprep.subr.mxu0 0.0
    %4607 = vmatpush1.msra.mxu0 %v2258
    %4608 = vmatprep.subr.mxu0 0.0
    %4609 = vmatpush1.msra.mxu0 %v2259
    %4610 = vmatprep.subr.mxu0 0.0
    %4611 = vmatpush1.msra.mxu0 %v2260
    %4612 = vmatprep.subr.mxu0 0.0
    %4613 = vmatpush1.msra.mxu0 %v2261
    %4614 = vmatprep.subr.mxu0 0.0
    %4615 = vmatpush1.msra.mxu0 %v2262
    %4616 = vmatprep.subr.mxu0 0.0
    %4617 = vmatpush1.msra.mxu0 %v2263
    %4618 = vmatprep.subr.mxu0 0.0
    %4619 = vmatpush1.msra.mxu0 %v2264
    %4620 = vmatprep.subr.mxu0 0.0
    %4621 = vmatpush1.msra.mxu0 %v2265
    %4622 = vmatprep.subr.mxu0 0.0
    %4623 = vmatpush1.msra.mxu0 %v2266
    %4624 = vmatprep.mubr.f32.mxu0 %v74
    %4625 = vmatmul.mubr.f32.gmra.mrb[0].mxu0 %v73
    %v4626 = vpop.f32.mrb[0].mxu0
    %v4627 = vadd.f32 %v4557, %v4626
    %v4628 = vpop.f32.mrb[0].mxu0
    %4629 = vdwg.mxu0
    %4630 = vmatprep.subr.mxu0 0.0
    %4631 = vmatpush1.msra.mxu0 %v2267
    %4632 = vmatprep.subr.mxu0 0.0
    %4633 = vmatpush1.msra.mxu0 %v2268
    %4634 = vmatprep.subr.mxu0 0.0
    %4635 = vmatpush1.msra.mxu0 %v2269
    %4636 = vmatprep.subr.mxu0 0.0
    %4637 = vmatpush1.msra.mxu0 %v2270
    %4638 = vmatprep.subr.mxu0 0.0
    %4639 = vmatpush1.msra.mxu0 %v2271
    %4640 = vmatprep.subr.mxu0 0.0
    %4641 = vmatpush1.msra.mxu0 %v2272
    %4642 = vmatprep.subr.mxu0 0.0
    %4643 = vmatpush1.msra.mxu0 %v2273
    %4644 = vmatprep.subr.mxu0 0.0
    %4645 = vmatpush1.msra.mxu0 %v2274
    %4646 = vmatprep.subr.mxu0 0.0
    %4647 = vmatpush1.msra.mxu0 %v2275
    %4648 = vmatprep.subr.mxu0 0.0
    %4649 = vmatpush1.msra.mxu0 %v2276
    %4650 = vmatprep.subr.mxu0 0.0
    %4651 = vmatpush1.msra.mxu0 %v2277
    %4652 = vmatprep.subr.mxu0 0.0
    %4653 = vmatpush1.msra.mxu0 %v2278
    %4654 = vmatprep.subr.mxu0 0.0
    %4655 = vmatpush1.msra.mxu0 %v2279
    %4656 = vmatprep.subr.mxu0 0.0
    %4657 = vmatpush1.msra.mxu0 %v2280
    %4658 = vmatprep.subr.mxu0 0.0
    %4659 = vmatpush1.msra.mxu0 %v2281
    %4660 = vmatprep.subr.mxu0 0.0
    %4661 = vmatpush1.msra.mxu0 %v2282
    %4662 = vmatprep.subr.mxu0 0.0
    %4663 = vmatpush1.msra.mxu0 %v2283
    %4664 = vmatprep.subr.mxu0 0.0
    %4665 = vmatpush1.msra.mxu0 %v2284
    %4666 = vmatprep.subr.mxu0 0.0
    %4667 = vmatpush1.msra.mxu0 %v2285
    %4668 = vmatprep.subr.mxu0 0.0
    %4669 = vmatpush1.msra.mxu0 %v2286
    %4670 = vmatprep.subr.mxu0 0.0
    %4671 = vmatpush1.msra.mxu0 %v2287
    %4672 = vmatprep.subr.mxu0 0.0
    %4673 = vmatpush1.msra.mxu0 %v2288
    %4674 = vmatprep.subr.mxu0 0.0
    %4675 = vmatpush1.msra.mxu0 %v2289
    %4676 = vmatprep.subr.mxu0 0.0
    %4677 = vmatpush1.msra.mxu0 %v2290
    %4678 = vmatprep.subr.mxu0 0.0
    %4679 = vmatpush1.msra.mxu0 %v2291
    %4680 = vmatprep.subr.mxu0 0.0
    %4681 = vmatpush1.msra.mxu0 %v2292
    %4682 = vmatprep.subr.mxu0 0.0
    %4683 = vmatpush1.msra.mxu0 %v2293
    %4684 = vmatprep.subr.mxu0 0.0
    %4685 = vmatpush1.msra.mxu0 %v2294
    %4686 = vmatprep.subr.mxu0 0.0
    %4687 = vmatpush1.msra.mxu0 %v2295
    %4688 = vmatprep.subr.mxu0 0.0
    %4689 = vmatpush1.msra.mxu0 %v2296
    %4690 = vmatprep.subr.mxu0 0.0
    %4691 = vmatpush1.msra.mxu0 %v2297
    %4692 = vmatprep.subr.mxu0 0.0
    %4693 = vmatpush1.msra.mxu0 %v2298
    %4694 = vmatprep.mubr.f32.mxu0 %v76
    %4695 = vmatmul.mubr.f32.gmra.mrb[0].mxu0 %v75
    %v4696 = vpop.f32.mrb[0].mxu0
    %v4697 = vadd.f32 %v4627, %v4696
    %v4698 = vpop.f32.mrb[0].mxu0
    %4699 = vdwg.mxu0
    %4700 = vmatprep.subr.mxu0 0.0
    %4701 = vmatpush1.msra.mxu0 %v2299
    %4702 = vmatprep.subr.mxu0 0.0
    %4703 = vmatpush1.msra.mxu0 %v2300
    %4704 = vmatprep.subr.mxu0 0.0
    %4705 = vmatpush1.msra.mxu0 %v2301
    %4706 = vmatprep.subr.mxu0 0.0
    %4707 = vmatpush1.msra.mxu0 %v2302
    %4708 = vmatprep.subr.mxu0 0.0
    %4709 = vmatpush1.msra.mxu0 %v2303
    %4710 = vmatprep.subr.mxu0 0.0
    %4711 = vmatpush1.msra.mxu0 %v2304
    %4712 = vmatprep.subr.mxu0 0.0
    %4713 = vmatpush1.msra.mxu0 %v2305
    %4714 = vmatprep.subr.mxu0 0.0
    %4715 = vmatpush1.msra.mxu0 %v2306
    %4716 = vmatprep.subr.mxu0 0.0
    %4717 = vmatpush1.msra.mxu0 %v2307
    %4718 = vmatprep.subr.mxu0 0.0
    %4719 = vmatpush1.msra.mxu0 %v2308
    %4720 = vmatprep.subr.mxu0 0.0
    %4721 = vmatpush1.msra.mxu0 %v2309
    %4722 = vmatprep.subr.mxu0 0.0
    %4723 = vmatpush1.msra.mxu0 %v2310
    %4724 = vmatprep.subr.mxu0 0.0
    %4725 = vmatpush1.msra.mxu0 %v2311
    %4726 = vmatprep.subr.mxu0 0.0
    %4727 = vmatpush1.msra.mxu0 %v2312
    %4728 = vmatprep.subr.mxu0 0.0
    %4729 = vmatpush1.msra.mxu0 %v2313
    %4730 = vmatprep.subr.mxu0 0.0
    %4731 = vmatpush1.msra.mxu0 %v2314
    %4732 = vmatprep.subr.mxu0 0.0
    %4733 = vmatpush1.msra.mxu0 %v2315
    %4734 = vmatprep.subr.mxu0 0.0
    %4735 = vmatpush1.msra.mxu0 %v2316
    %4736 = vmatprep.subr.mxu0 0.0
    %4737 = vmatpush1.msra.mxu0 %v2317
    %4738 = vmatprep.subr.mxu0 0.0
    %4739 = vmatpush1.msra.mxu0 %v2318
    %4740 = vmatprep.subr.mxu0 0.0
    %4741 = vmatpush1.msra.mxu0 %v2319
    %4742 = vmatprep.subr.mxu0 0.0
    %4743 = vmatpush1.msra.mxu0 %v2320
    %4744 = vmatprep.subr.mxu0 0.0
    %4745 = vmatpush1.msra.mxu0 %v2321
    %4746 = vmatprep.subr.mxu0 0.0
    %4747 = vmatpush1.msra.mxu0 %v2322
    %4748 = vmatprep.subr.mxu0 0.0
    %4749 = vmatpush1.msra.mxu0 %v2323
    %4750 = vmatprep.subr.mxu0 0.0
    %4751 = vmatpush1.msra.mxu0 %v2324
    %4752 = vmatprep.subr.mxu0 0.0
    %4753 = vmatpush1.msra.mxu0 %v2325
    %4754 = vmatprep.subr.mxu0 0.0
    %4755 = vmatpush1.msra.mxu0 %v2326
    %4756 = vmatprep.subr.mxu0 0.0
    %4757 = vmatpush1.msra.mxu0 %v2327
    %4758 = vmatprep.subr.mxu0 0.0
    %4759 = vmatpush1.msra.mxu0 %v2328
    %4760 = vmatprep.subr.mxu0 0.0
    %4761 = vmatpush1.msra.mxu0 %v2329
    %4762 = vmatprep.subr.mxu0 0.0
    %4763 = vmatpush1.msra.mxu0 %v2330
    %4764 = vmatprep.mubr.f32.mxu0 %v78
    %4765 = vmatmul.mubr.f32.gmra.mrb[0].mxu0 %v77
    %v4766 = vpop.f32.mrb[0].mxu0
    %v4767 = vadd.f32 %v4697, %v4766
    %v4768 = vpop.f32.mrb[0].mxu0
    %4769 = vdwg.mxu0
    %4770 = vmatprep.subr.mxu0 0.0
    %4771 = vmatpush1.msra.mxu0 %v2331
    %4772 = vmatprep.subr.mxu0 0.0
    %4773 = vmatpush1.msra.mxu0 %v2332
    %4774 = vmatprep.subr.mxu0 0.0
    %4775 = vmatpush1.msra.mxu0 %v2333
    %4776 = vmatprep.subr.mxu0 0.0
    %4777 = vmatpush1.msra.mxu0 %v2334
    %4778 = vmatprep.subr.mxu0 0.0
    %4779 = vmatpush1.msra.mxu0 %v2335
    %4780 = vmatprep.subr.mxu0 0.0
    %4781 = vmatpush1.msra.mxu0 %v2336
    %4782 = vmatprep.subr.mxu0 0.0
    %4783 = vmatpush1.msra.mxu0 %v2337
    %4784 = vmatprep.subr.mxu0 0.0
    %4785 = vmatpush1.msra.mxu0 %v2338
    %4786 = vmatprep.subr.mxu0 0.0
    %4787 = vmatpush1.msra.mxu0 %v2339
    %4788 = vmatprep.subr.mxu0 0.0
    %4789 = vmatpush1.msra.mxu0 %v2340
    %4790 = vmatprep.subr.mxu0 0.0
    %4791 = vmatpush1.msra.mxu0 %v2341
    %4792 = vmatprep.subr.mxu0 0.0
    %4793 = vmatpush1.msra.mxu0 %v2342
    %4794 = vmatprep.subr.mxu0 0.0
    %4795 = vmatpush1.msra.mxu0 %v2343
    %4796 = vmatprep.subr.mxu0 0.0
    %4797 = vmatpush1.msra.mxu0 %v2344
    %4798 = vmatprep.subr.mxu0 0.0
    %4799 = vmatpush1.msra.mxu0 %v2345
    %4800 = vmatprep.subr.mxu0 0.0
    %4801 = vmatpush1.msra.mxu0 %v2346
    %4802 = vmatprep.subr.mxu0 0.0
    %4803 = vmatpush1.msra.mxu0 %v2347
    %4804 = vmatprep.subr.mxu0 0.0
    %4805 = vmatpush1.msra.mxu0 %v2348
    %4806 = vmatprep.subr.mxu0 0.0
    %4807 = vmatpush1.msra.mxu0 %v2349
    %4808 = vmatprep.subr.mxu0 0.0
    %4809 = vmatpush1.msra.mxu0 %v2350
    %4810 = vmatprep.subr.mxu0 0.0
    %4811 = vmatpush1.msra.mxu0 %v2351
    %4812 = vmatprep.subr.mxu0 0.0
    %4813 = vmatpush1.msra.mxu0 %v2352
    %4814 = vmatprep.subr.mxu0 0.0
    %4815 = vmatpush1.msra.mxu0 %v2353
    %4816 = vmatprep.subr.mxu0 0.0
    %4817 = vmatpush1.msra.mxu0 %v2354
    %4818 = vmatprep.subr.mxu0 0.0
    %4819 = vmatpush1.msra.mxu0 %v2355
    %4820 = vmatprep.subr.mxu0 0.0
    %4821 = vmatpush1.msra.mxu0 %v2356
    %4822 = vmatprep.subr.mxu0 0.0
    %4823 = vmatpush1.msra.mxu0 %v2357
    %4824 = vmatprep.subr.mxu0 0.0
    %4825 = vmatpush1.msra.mxu0 %v2358
    %4826 = vmatprep.subr.mxu0 0.0
    %4827 = vmatpush1.msra.mxu0 %v2359
    %4828 = vmatprep.subr.mxu0 0.0
    %4829 = vmatpush1.msra.mxu0 %v2360
    %4830 = vmatprep.subr.mxu0 0.0
    %4831 = vmatpush1.msra.mxu0 %v2361
    %4832 = vmatprep.subr.mxu0 0.0
    %4833 = vmatpush1.msra.mxu0 %v2362
    %4834 = vmatprep.mubr.f32.mxu0 %v80
    %4835 = vmatmul.mubr.f32.gmra.mrb[0].mxu0 %v79
    %v4836 = vpop.f32.mrb[0].mxu0
    %v4837 = vadd.f32 %v4767, %v4836
    %v4838 = vpop.f32.mrb[0].mxu0
    %4839 = vdwg.mxu0
    %4840 = vmatprep.subr.mxu0 0.0
    %4841 = vmatpush1.msra.mxu0 %v2363
    %4842 = vmatprep.subr.mxu0 0.0
    %4843 = vmatpush1.msra.mxu0 %v2364
    %4844 = vmatprep.subr.mxu0 0.0
    %4845 = vmatpush1.msra.mxu0 %v2365
    %4846 = vmatprep.subr.mxu0 0.0
    %4847 = vmatpush1.msra.mxu0 %v2366
    %4848 = vmatprep.subr.mxu0 0.0
    %4849 = vmatpush1.msra.mxu0 %v2367
    %4850 = vmatprep.subr.mxu0 0.0
    %4851 = vmatpush1.msra.mxu0 %v2368
    %4852 = vmatprep.subr.mxu0 0.0
    %4853 = vmatpush1.msra.mxu0 %v2369
    %4854 = vmatprep.subr.mxu0 0.0
    %4855 = vmatpush1.msra.mxu0 %v2370
    %4856 = vmatprep.subr.mxu0 0.0
    %4857 = vmatpush1.msra.mxu0 %v2371
    %4858 = vmatprep.subr.mxu0 0.0
    %4859 = vmatpush1.msra.mxu0 %v2372
    %4860 = vmatprep.subr.mxu0 0.0
    %4861 = vmatpush1.msra.mxu0 %v2373
    %4862 = vmatprep.subr.mxu0 0.0
    %4863 = vmatpush1.msra.mxu0 %v2374
    %4864 = vmatprep.subr.mxu0 0.0
    %4865 = vmatpush1.msra.mxu0 %v2375
    %4866 = vmatprep.subr.mxu0 0.0
    %4867 = vmatpush1.msra.mxu0 %v2376
    %4868 = vmatprep.subr.mxu0 0.0
    %4869 = vmatpush1.msra.mxu0 %v2377
    %4870 = vmatprep.subr.mxu0 0.0
    %4871 = vmatpush1.msra.mxu0 %v2378
    %4872 = vmatprep.subr.mxu0 0.0
    %4873 = vmatpush1.msra.mxu0 %v2379
    %4874 = vmatprep.subr.mxu0 0.0
    %4875 = vmatpush1.msra.mxu0 %v2380
    %4876 = vmatprep.subr.mxu0 0.0
    %4877 = vmatpush1.msra.mxu0 %v2381
    %4878 = vmatprep.subr.mxu0 0.0
    %4879 = vmatpush1.msra.mxu0 %v2382
    %4880 = vmatprep.subr.mxu0 0.0
    %4881 = vmatpush1.msra.mxu0 %v2383
    %4882 = vmatprep.subr.mxu0 0.0
    %4883 = vmatpush1.msra.mxu0 %v2384
    %4884 = vmatprep.subr.mxu0 0.0
    %4885 = vmatpush1.msra.mxu0 %v2385
    %4886 = vmatprep.subr.mxu0 0.0
    %4887 = vmatpush1.msra.mxu0 %v2386
    %4888 = vmatprep.subr.mxu0 0.0
    %4889 = vmatpush1.msra.mxu0 %v2387
    %4890 = vmatprep.subr.mxu0 0.0
    %4891 = vmatpush1.msra.mxu0 %v2388
    %4892 = vmatprep.subr.mxu0 0.0
    %4893 = vmatpush1.msra.mxu0 %v2389
    %4894 = vmatprep.subr.mxu0 0.0
    %4895 = vmatpush1.msra.mxu0 %v2390
    %4896 = vmatprep.subr.mxu0 0.0
    %4897 = vmatpush1.msra.mxu0 %v2391
    %4898 = vmatprep.subr.mxu0 0.0
    %4899 = vmatpush1.msra.mxu0 %v2392
    %4900 = vmatprep.subr.mxu0 0.0
    %4901 = vmatpush1.msra.mxu0 %v2393
    %4902 = vmatprep.subr.mxu0 0.0
    %4903 = vmatpush1.msra.mxu0 %v2394
    %4904 = vmatprep.mubr.f32.mxu0 %v82
    %4905 = vmatmul.mubr.f32.gmra.mrb[0].mxu0 %v81
    %v4906 = vpop.f32.mrb[0].mxu0
    %v4907 = vadd.f32 %v4837, %v4906
    %v4908 = vpop.f32.mrb[0].mxu0
    %4909 = vdwg.mxu0
    %4910 = vmatprep.subr.mxu0 0.0
    %4911 = vmatpush1.msra.mxu0 %v2395
    %4912 = vmatprep.subr.mxu0 0.0
    %4913 = vmatpush1.msra.mxu0 %v2396
    %4914 = vmatprep.subr.mxu0 0.0
    %4915 = vmatpush1.msra.mxu0 %v2397
    %4916 = vmatprep.subr.mxu0 0.0
    %4917 = vmatpush1.msra.mxu0 %v2398
    %4918 = vmatprep.subr.mxu0 0.0
    %4919 = vmatpush1.msra.mxu0 %v2399
    %4920 = vmatprep.subr.mxu0 0.0
    %4921 = vmatpush1.msra.mxu0 %v2400
    %4922 = vmatprep.subr.mxu0 0.0
    %4923 = vmatpush1.msra.mxu0 %v2401
    %4924 = vmatprep.subr.mxu0 0.0
    %4925 = vmatpush1.msra.mxu0 %v2402
    %4926 = vmatprep.subr.mxu0 0.0
    %4927 = vmatpush1.msra.mxu0 %v2403
    %4928 = vmatprep.subr.mxu0 0.0
    %4929 = vmatpush1.msra.mxu0 %v2404
    %4930 = vmatprep.subr.mxu0 0.0
    %4931 = vmatpush1.msra.mxu0 %v2405
    %4932 = vmatprep.subr.mxu0 0.0
    %4933 = vmatpush1.msra.mxu0 %v2406
    %4934 = vmatprep.subr.mxu0 0.0
    %4935 = vmatpush1.msra.mxu0 %v2407
    %4936 = vmatprep.subr.mxu0 0.0
    %4937 = vmatpush1.msra.mxu0 %v2408
    %4938 = vmatprep.subr.mxu0 0.0
    %4939 = vmatpush1.msra.mxu0 %v2409
    %4940 = vmatprep.subr.mxu0 0.0
    %4941 = vmatpush1.msra.mxu0 %v2410
    %4942 = vmatprep.subr.mxu0 0.0
    %4943 = vmatpush1.msra.mxu0 %v2411
    %4944 = vmatprep.subr.mxu0 0.0
    %4945 = vmatpush1.msra.mxu0 %v2412
    %4946 = vmatprep.subr.mxu0 0.0
    %4947 = vmatpush1.msra.mxu0 %v2413
    %4948 = vmatprep.subr.mxu0 0.0
    %4949 = vmatpush1.msra.mxu0 %v2414
    %4950 = vmatprep.subr.mxu0 0.0
    %4951 = vmatpush1.msra.mxu0 %v2415
    %4952 = vmatprep.subr.mxu0 0.0
    %4953 = vmatpush1.msra.mxu0 %v2416
    %4954 = vmatprep.subr.mxu0 0.0
    %4955 = vmatpush1.msra.mxu0 %v2417
    %4956 = vmatprep.subr.mxu0 0.0
    %4957 = vmatpush1.msra.mxu0 %v2418
    %4958 = vmatprep.subr.mxu0 0.0
    %4959 = vmatpush1.msra.mxu0 %v2419
    %4960 = vmatprep.subr.mxu0 0.0
    %4961 = vmatpush1.msra.mxu0 %v2420
    %4962 = vmatprep.subr.mxu0 0.0
    %4963 = vmatpush1.msra.mxu0 %v2421
    %4964 = vmatprep.subr.mxu0 0.0
    %4965 = vmatpush1.msra.mxu0 %v2422
    %4966 = vmatprep.subr.mxu0 0.0
    %4967 = vmatpush1.msra.mxu0 %v2423
    %4968 = vmatprep.subr.mxu0 0.0
    %4969 = vmatpush1.msra.mxu0 %v2424
    %4970 = vmatprep.subr.mxu0 0.0
    %4971 = vmatpush1.msra.mxu0 %v2425
    %4972 = vmatprep.subr.mxu0 0.0
    %4973 = vmatpush1.msra.mxu0 %v2426
    %4974 = vmatprep.mubr.f32.mxu0 %v84
    %4975 = vmatmul.mubr.f32.gmra.mrb[0].mxu0 %v83
    %v4976 = vpop.f32.mrb[0].mxu0
    %v4977 = vadd.f32 %v4907, %v4976
    %v4978 = vpop.f32.mrb[0].mxu0
    %4979 = vdwg.mxu0
    %4980 = vmatprep.subr.mxu0 0.0
    %4981 = vmatpush1.msra.mxu0 %v2427
    %4982 = vmatprep.subr.mxu0 0.0
    %4983 = vmatpush1.msra.mxu0 %v2428
    %4984 = vmatprep.subr.mxu0 0.0
    %4985 = vmatpush1.msra.mxu0 %v2429
    %4986 = vmatprep.subr.mxu0 0.0
    %4987 = vmatpush1.msra.mxu0 %v2430
    %4988 = vmatprep.subr.mxu0 0.0
    %4989 = vmatpush1.msra.mxu0 %v2431
    %4990 = vmatprep.subr.mxu0 0.0
    %4991 = vmatpush1.msra.mxu0 %v2432
    %4992 = vmatprep.subr.mxu0 0.0
    %4993 = vmatpush1.msra.mxu0 %v2433
    %4994 = vmatprep.subr.mxu0 0.0
    %4995 = vmatpush1.msra.mxu0 %v2434
    %4996 = vmatprep.subr.mxu0 0.0
    %4997 = vmatpush1.msra.mxu0 %v2435
    %4998 = vmatprep.subr.mxu0 0.0
    %4999 = vmatpush1.msra.mxu0 %v2436
    %5000 = vmatprep.subr.mxu0 0.0
    %5001 = vmatpush1.msra.mxu0 %v2437
    %5002 = vmatprep.subr.mxu0 0.0
    %5003 = vmatpush1.msra.mxu0 %v2438
    %5004 = vmatprep.subr.mxu0 0.0
    %5005 = vmatpush1.msra.mxu0 %v2439
    %5006 = vmatprep.subr.mxu0 0.0
    %5007 = vmatpush1.msra.mxu0 %v2440
    %5008 = vmatprep.subr.mxu0 0.0
    %5009 = vmatpush1.msra.mxu0 %v2441
    %5010 = vmatprep.subr.mxu0 0.0
    %5011 = vmatpush1.msra.mxu0 %v2442
    %5012 = vmatprep.subr.mxu0 0.0
    %5013 = vmatpush1.msra.mxu0 %v2443
    %5014 = vmatprep.subr.mxu0 0.0
    %5015 = vmatpush1.msra.mxu0 %v2444
    %5016 = vmatprep.subr.mxu0 0.0
    %5017 = vmatpush1.msra.mxu0 %v2445
    %5018 = vmatprep.subr.mxu0 0.0
    %5019 = vmatpush1.msra.mxu0 %v2446
    %5020 = vmatprep.subr.mxu0 0.0
    %5021 = vmatpush1.msra.mxu0 %v2447
    %5022 = vmatprep.subr.mxu0 0.0
    %5023 = vmatpush1.msra.mxu0 %v2448
    %5024 = vmatprep.subr.mxu0 0.0
    %5025 = vmatpush1.msra.mxu0 %v2449
    %5026 = vmatprep.subr.mxu0 0.0
    %5027 = vmatpush1.msra.mxu0 %v2450
    %5028 = vmatprep.subr.mxu0 0.0
    %5029 = vmatpush1.msra.mxu0 %v2451
    %5030 = vmatprep.subr.mxu0 0.0
    %5031 = vmatpush1.msra.mxu0 %v2452
    %5032 = vmatprep.subr.mxu0 0.0
    %5033 = vmatpush1.msra.mxu0 %v2453
    %5034 = vmatprep.subr.mxu0 0.0
    %5035 = vmatpush1.msra.mxu0 %v2454
    %5036 = vmatprep.subr.mxu0 0.0
    %5037 = vmatpush1.msra.mxu0 %v2455
    %5038 = vmatprep.subr.mxu0 0.0
    %5039 = vmatpush1.msra.mxu0 %v2456
    %5040 = vmatprep.subr.mxu0 0.0
    %5041 = vmatpush1.msra.mxu0 %v2457
    %5042 = vmatprep.subr.mxu0 0.0
    %5043 = vmatpush1.msra.mxu0 %v2458
    %5044 = vmatprep.mubr.f32.mxu0 %v86
    %5045 = vmatmul.mubr.f32.gmra.mrb[0].mxu0 %v85
    %v5046 = vpop.f32.mrb[0].mxu0
    %v5047 = vadd.f32 %v4977, %v5046
    %v5048 = vpop.f32.mrb[0].mxu0
    %5049 = vdwg.mxu0
    %5050 = vmatprep.subr.mxu0 0.0
    %5051 = vmatpush1.msra.mxu0 %v2459
    %5052 = vmatprep.subr.mxu0 0.0
    %5053 = vmatpush1.msra.mxu0 %v2460
    %5054 = vmatprep.subr.mxu0 0.0
    %5055 = vmatpush1.msra.mxu0 %v2461
    %5056 = vmatprep.subr.mxu0 0.0
    %5057 = vmatpush1.msra.mxu0 %v2462
    %5058 = vmatprep.subr.mxu0 0.0
    %5059 = vmatpush1.msra.mxu0 %v2463
    %5060 = vmatprep.subr.mxu0 0.0
    %5061 = vmatpush1.msra.mxu0 %v2464
    %5062 = vmatprep.subr.mxu0 0.0
    %5063 = vmatpush1.msra.mxu0 %v2465
    %5064 = vmatprep.subr.mxu0 0.0
    %5065 = vmatpush1.msra.mxu0 %v2466
    %5066 = vmatprep.subr.mxu0 0.0
    %5067 = vmatpush1.msra.mxu0 %v2467
    %5068 = vmatprep.subr.mxu0 0.0
    %5069 = vmatpush1.msra.mxu0 %v2468
    %5070 = vmatprep.subr.mxu0 0.0
    %5071 = vmatpush1.msra.mxu0 %v2469
    %5072 = vmatprep.subr.mxu0 0.0
    %5073 = vmatpush1.msra.mxu0 %v2470
    %5074 = vmatprep.subr.mxu0 0.0
    %5075 = vmatpush1.msra.mxu0 %v2471
    %5076 = vmatprep.subr.mxu0 0.0
    %5077 = vmatpush1.msra.mxu0 %v2472
    %5078 = vmatprep.subr.mxu0 0.0
    %5079 = vmatpush1.msra.mxu0 %v2473
    %5080 = vmatprep.subr.mxu0 0.0
    %5081 = vmatpush1.msra.mxu0 %v2474
    %5082 = vmatprep.subr.mxu0 0.0
    %5083 = vmatpush1.msra.mxu0 %v2475
    %5084 = vmatprep.subr.mxu0 0.0
    %5085 = vmatpush1.msra.mxu0 %v2476
    %5086 = vmatprep.subr.mxu0 0.0
    %5087 = vmatpush1.msra.mxu0 %v2477
    %5088 = vmatprep.subr.mxu0 0.0
    %5089 = vmatpush1.msra.mxu0 %v2478
    %5090 = vmatprep.subr.mxu0 0.0
    %5091 = vmatpush1.msra.mxu0 %v2479
    %5092 = vmatprep.subr.mxu0 0.0
    %5093 = vmatpush1.msra.mxu0 %v2480
    %5094 = vmatprep.subr.mxu0 0.0
    %5095 = vmatpush1.msra.mxu0 %v2481
    %5096 = vmatprep.subr.mxu0 0.0
    %5097 = vmatpush1.msra.mxu0 %v2482
    %5098 = vmatprep.subr.mxu0 0.0
    %5099 = vmatpush1.msra.mxu0 %v2483
    %5100 = vmatprep.subr.mxu0 0.0
    %5101 = vmatpush1.msra.mxu0 %v2484
    %5102 = vmatprep.subr.mxu0 0.0
    %5103 = vmatpush1.msra.mxu0 %v2485
    %5104 = vmatprep.subr.mxu0 0.0
    %5105 = vmatpush1.msra.mxu0 %v2486
    %5106 = vmatprep.subr.mxu0 0.0
    %5107 = vmatpush1.msra.mxu0 %v2487
    %5108 = vmatprep.subr.mxu0 0.0
    %5109 = vmatpush1.msra.mxu0 %v2488
    %5110 = vmatprep.subr.mxu0 0.0
    %5111 = vmatpush1.msra.mxu0 %v2489
    %5112 = vmatprep.subr.mxu0 0.0
    %5113 = vmatpush1.msra.mxu0 %v2490
    %5114 = vmatprep.mubr.f32.mxu0 %v88
    %5115 = vmatmul.mubr.f32.gmra.mrb[0].mxu0 %v87
    %v5116 = vpop.f32.mrb[0].mxu0
    %v5117 = vadd.f32 %v5047, %v5116
    %v5118 = vpop.f32.mrb[0].mxu0
    %5119 = vdwg.mxu0
    %5120 = vmatprep.subr.mxu0 0.0
    %5121 = vmatpush1.msra.mxu0 %v2491
    %5122 = vmatprep.subr.mxu0 0.0
    %5123 = vmatpush1.msra.mxu0 %v2492
    %5124 = vmatprep.subr.mxu0 0.0
    %5125 = vmatpush1.msra.mxu0 %v2493
    %5126 = vmatprep.subr.mxu0 0.0
    %5127 = vmatpush1.msra.mxu0 %v2494
    %5128 = vmatprep.subr.mxu0 0.0
    %5129 = vmatpush1.msra.mxu0 %v2495
    %5130 = vmatprep.subr.mxu0 0.0
    %5131 = vmatpush1.msra.mxu0 %v2496
    %5132 = vmatprep.subr.mxu0 0.0
    %5133 = vmatpush1.msra.mxu0 %v2497
    %5134 = vmatprep.subr.mxu0 0.0
    %5135 = vmatpush1.msra.mxu0 %v2498
    %5136 = vmatprep.subr.mxu0 0.0
    %5137 = vmatpush1.msra.mxu0 %v2499
    %5138 = vmatprep.subr.mxu0 0.0
    %5139 = vmatpush1.msra.mxu0 %v2500
    %5140 = vmatprep.subr.mxu0 0.0
    %5141 = vmatpush1.msra.mxu0 %v2501
    %5142 = vmatprep.subr.mxu0 0.0
    %5143 = vmatpush1.msra.mxu0 %v2502
    %5144 = vmatprep.subr.mxu0 0.0
    %5145 = vmatpush1.msra.mxu0 %v2503
    %5146 = vmatprep.subr.mxu0 0.0
    %5147 = vmatpush1.msra.mxu0 %v2504
    %5148 = vmatprep.subr.mxu0 0.0
    %5149 = vmatpush1.msra.mxu0 %v2505
    %5150 = vmatprep.subr.mxu0 0.0
    %5151 = vmatpush1.msra.mxu0 %v2506
    %5152 = vmatprep.subr.mxu0 0.0
    %5153 = vmatpush1.msra.mxu0 %v2507
    %5154 = vmatprep.subr.mxu0 0.0
    %5155 = vmatpush1.msra.mxu0 %v2508
    %5156 = vmatprep.subr.mxu0 0.0
    %5157 = vmatpush1.msra.mxu0 %v2509
    %5158 = vmatprep.subr.mxu0 0.0
    %5159 = vmatpush1.msra.mxu0 %v2510
    %5160 = vmatprep.subr.mxu0 0.0
    %5161 = vmatpush1.msra.mxu0 %v2511
    %5162 = vmatprep.subr.mxu0 0.0
    %5163 = vmatpush1.msra.mxu0 %v2512
    %5164 = vmatprep.subr.mxu0 0.0
    %5165 = vmatpush1.msra.mxu0 %v2513
    %5166 = vmatprep.subr.mxu0 0.0
    %5167 = vmatpush1.msra.mxu0 %v2514
    %5168 = vmatprep.subr.mxu0 0.0
    %5169 = vmatpush1.msra.mxu0 %v2515
    %5170 = vmatprep.subr.mxu0 0.0
    %5171 = vmatpush1.msra.mxu0 %v2516
    %5172 = vmatprep.subr.mxu0 0.0
    %5173 = vmatpush1.msra.mxu0 %v2517
    %5174 = vmatprep.subr.mxu0 0.0
    %5175 = vmatpush1.msra.mxu0 %v2518
    %5176 = vmatprep.subr.mxu0 0.0
    %5177 = vmatpush1.msra.mxu0 %v2519
    %5178 = vmatprep.subr.mxu0 0.0
    %5179 = vmatpush1.msra.mxu0 %v2520
    %5180 = vmatprep.subr.mxu0 0.0
    %5181 = vmatpush1.msra.mxu0 %v2521
    %5182 = vmatprep.subr.mxu0 0.0
    %5183 = vmatpush1.msra.mxu0 %v2522
    %5184 = vmatprep.mubr.f32.mxu0 %v90
    %5185 = vmatmul.mubr.f32.gmra.mrb[0].mxu0 %v89
    %v5186 = vpop.f32.mrb[0].mxu0
    %v5187 = vadd.f32 %v5117, %v5186
    %v5188 = vpop.f32.mrb[0].mxu0
    %5189 = vdwg.mxu0
    %v5190 = vxor.u32 %v5187, 2147483648
    %v5191 = vmul.f32 %v5190, 1.442695
    %v5192 = vpow.pop %v5191
    %v5193 = vadd.f32 %v5192, 1.0
    %v5194 = vrcp.pop %v5193
    %v5195 = vmul.f32 1.0, %v5194
    %vm5196 = vcmask 523264
    %5197 = vst.msk [vmem:[#allocation2] sm:$0xff] %vm5196, %v5195
    // Predicated region
    $region14: #{tpu_custom_call.1} parent=1 // pred_check
      _
    $region15: #{tpu_custom_call.1} parent=1 // pred_check_branch
      %5199 = sbr.rel (0) target = $region17
    $region16: #{tpu_custom_call.1} parent=1 // pred_region
      %s5201 = ssub.s32 128, 128
      %5202 = vsyncadd [#allocation3], %s5201
      %s5204 = sshll.u32 [#allocation2], 4
      %s5205 = int_to_ptr.vmem [resolvable:$true] %s5204
      %5207 = dma.vmem_to_hbm [thread:$0]  %s5205, 128, %s3, [#allocation3]
    $region17: #{tpu_custom_call.1} parent=1 // pred_fallthru
      _
    // Predicated region
    $region18: #{tpu_custom_call.1} parent=1 // pred_check
      _
    $region19: #{tpu_custom_call.1} parent=1 // pred_check_branch
      %5209 = sbr.rel (0) target = $region21
    $region20: #{tpu_custom_call.1} parent=1 // pred_region
      %5210 = dma.done [#allocation3], 128
    $region21: #{tpu_custom_call.1} parent=1 // pred_fallthru
      _
    %5211 = vsyncpa [#allocation3], 1

</llo_original>
